<compile_context>
chip_gen: v6e
topology: v6e:2x2x1
jax: 0.10.0
libtpu: 0.0.40
codegen_flags: <defaults>
</compile_context>

<pallas_src>
import jax
import jax.numpy as jnp
from jax import lax
from jax.experimental import pallas as pl
from jax.experimental.pallas import tpu as pltpu


def _round_up(v, m):
    return (v + m - 1) // m * m


def _pick_tile(N):
    """Generation-aware tile size (all sizes are safe on every TPU)."""
    kind = ""
    try:
        kind = jax.devices()[0].device_kind.lower()
    except Exception:
        pass
    if "v6" in kind:
        return 256 if N > 128 else 128        # fill the 2x256^2 MXU
    if "v7" in kind:
        return 256 if N > 256 else 128        # keep >=2 parallel tiles (2 TCs)
    return 128                                 # v5e / default


# --------------------------------------------------------------------------
# Encoder kernel: tiled GCN aggregation (acc += A @ XW) + GRU cell finalize.
# grid = (row_tiles, k_tiles); k is the reduction over source nodes.
# --------------------------------------------------------------------------
def _encoder_kernel(a_ref, xw_ref, dinv_ref, h_ref,
                    bg_ref, wrz_ref, brz_ref,
                    win_ref, bin_ref, whn_ref, bhn_ref,
                    zf_ref, zb_ref, acc_ref, mh_ref):
    k = pl.program_id(1)

    @pl.when(k == 0)
    def _init():
        acc_ref[...] = jnp.zeros_like(acc_ref)

    # Steady-state loop: one bf16 MXU push per step, f32 accumulation.
    acc_ref[...] += jnp.dot(a_ref[...], xw_ref[...],
                            preferred_element_type=jnp.float32)

    @pl.when(k == pl.num_programs(1) - 1)
    def _finalize():
        # Runs once per row tile; if profiling at tile=256 shows vreg spill,
        # sub-chunk this block in 128-row pieces via lax.fori_loop(unroll=True).
        Hp = h_ref.shape[-1]
        # remaining half of the symmetric normalization: scale rows by dinv_i
        m = jnp.maximum(acc_ref[...] * dinv_ref[...] + bg_ref[...], 0.0)
        h = h_ref[...]

        # ---- GRU cell (PyTorch GRUCell semantics), r/z gates fused ----
        # mh = [m | h] staged as bf16 in a lane-aligned scratch -> one fat
        # bf16 MXU call for both gates; all gate math stays f32.
        mh_ref[:, 0:Hp] = m.astype(jnp.bfloat16)
        mh_ref[:, Hp:2 * Hp] = h.astype(jnp.bfloat16)
        g_rz = jnp.dot(mh_ref[...], wrz_ref[...],
                       preferred_element_type=jnp.float32) + brz_ref[...]
        r = jax.nn.sigmoid(g_rz[:, 0:Hp])
        u = jax.nn.sigmoid(g_rz[:, Hp:2 * Hp])

        m_b = mh_ref[:, 0:Hp]
        h_b = mh_ref[:, Hp:2 * Hp]
        i_n = jnp.dot(m_b, win_ref[...],
                      preferred_element_type=jnp.float32) + bin_ref[...]
        h_n = jnp.dot(h_b, whn_ref[...],
                      preferred_element_type=jnp.float32) + bhn_ref[...]
        n = jnp.tanh(i_n + r * h_n)

        z = (1.0 - u) * n + u * h
        zf_ref[...] = z.astype(zf_ref.dtype)    # f32 embedding (returned)
        zb_ref[...] = z.astype(zb_ref.dtype)    # bf16 copy for the decoder


# --------------------------------------------------------------------------
# Decoder kernels: adj[i, j] = sigmoid(z_i . z_j) * mask[i, j], tiled (i, j).
# Resident variant holds the whole bf16 Z in VMEM and slices the j-tile.
# --------------------------------------------------------------------------
def _decoder_kernel_resident(zi_ref, zall_ref, mask_ref, adj_ref):
    tile = adj_ref.shape[1]
    off = pl.multiple_of(pl.program_id(1) * tile, tile)
    zj = zall_ref[pl.ds(off, tile), :]
    logits = lax.dot_general(zi_ref[...], zj,
                             dimension_numbers=(((1,), (1,)), ((), ())),
                             preferred_element_type=jnp.float32)
    adj_ref[...] = (jax.nn.sigmoid(logits)
                    * mask_ref[...].astype(jnp.float32)).astype(adj_ref.dtype)


def _decoder_kernel_tiled(zi_ref, zj_ref, mask_ref, adj_ref):
    logits = lax.dot_general(zi_ref[...], zj_ref[...],
                             dimension_numbers=(((1,), (1,)), ((), ())),
                             preferred_element_type=jnp.float32)
    adj_ref[...] = (jax.nn.sigmoid(logits)
                    * mask_ref[...].astype(jnp.float32)).astype(adj_ref.dtype)


# --------------------------------------------------------------------------
# Parameter fusion / padding (lane-aligned, zero-padded gate slabs).
# GRU weights are bf16 (MXU operands); biases stay f32.
# --------------------------------------------------------------------------
def _prepare_params(params, C, H, Hp):
    f32, bf16 = jnp.float32, jnp.bfloat16

    def pad2(a, r, c, dt):
        a = a.astype(f32)
        return jnp.zeros((r, c), f32).at[:a.shape[0], :a.shape[1]].set(a).astype(dt)

    w_ih = params["w_ih"].astype(f32)   # (H, 3H): columns [r | z | n]
    w_hh = params["w_hh"].astype(f32)
    b_ih = params["b_ih"].astype(f32)   # (1, 3H)
    b_hh = params["b_hh"].astype(f32)

    # Fused r/z weight: rows 0..Hp act on m, rows Hp..2Hp act on h;
    # cols 0..Hp -> r gate, cols Hp..2Hp -> z gate. Zero padding keeps the
    # padded columns exactly zero.
    w_rz = jnp.zeros((2 * Hp, 2 * Hp), f32)
    w_rz = w_rz.at[0:H, 0:H].set(w_ih[:, 0:H])
    w_rz = w_rz.at[0:H, Hp:Hp + H].set(w_ih[:, H:2 * H])
    w_rz = w_rz.at[Hp:Hp + H, 0:H].set(w_hh[:, 0:H])
    w_rz = w_rz.at[Hp:Hp + H, Hp:Hp + H].set(w_hh[:, H:2 * H])

    b_rz = jnp.zeros((1, 2 * Hp), f32)
    b_rz = b_rz.at[:, 0:H].set(b_ih[:, 0:H] + b_hh[:, 0:H])
    b_rz = b_rz.at[:, Hp:Hp + H].set(b_ih[:, H:2 * H] + b_hh[:, H:2 * H])

    return {
        "w_gcn": pad2(params["w_gcn"], C, Hp, f32),   # used in wrapper XW precompute
        "b_gcn": pad2(params["b_gcn"], 1, Hp, f32),
        "w_rz": w_rz.astype(bf16),
        "b_rz": b_rz,
        "w_in": pad2(w_ih[:, 2 * H:3 * H], Hp, Hp, bf16),
        "b_in": pad2(b_ih[:, 2 * H:3 * H], 1, Hp, f32),
        "w_hn": pad2(w_hh[:, 2 * H:3 * H], Hp, Hp, bf16),
        "b_hn": pad2(b_hh[:, 2 * H:3 * H], 1, Hp, f32),
    }


# --------------------------------------------------------------------------
# Forward pass: mirrors GAEGRU.forward -> (z, reconstructed adjacency).
# --------------------------------------------------------------------------
def gaegru_forward(x, edge_index, edge_attr, mask, h, params, *,
                   tile=None, adj_dtype=jnp.bfloat16):
    N, C = x.shape
    H = h.shape[-1]
    Hp = _round_up(H, 128)
    if tile is None:
        tile = _pick_tile(N)
    Np = _round_up(N, tile)
    GI = Np // tile
    f32, bf16 = jnp.float32, jnp.bfloat16

    # --- glue: padded bf16 adjacency (edges + self loops in ONE scatter) and
    # degree vector computed straight from the edge list (no N^2 row-sum).
    # TODO(synk): edge-list scatter-add has no clean Pallas path; built in XLA.
    src, dst = edge_index[0], edge_index[1]
    node = jnp.arange(N)
    dst2 = jnp.concatenate([dst, node])
    src2 = jnp.concatenate([src, node])
    w2 = jnp.concatenate([edge_attr.astype(f32), jnp.ones((N,), f32)])
    A_p = jnp.zeros((Np, Np), bf16).at[dst2, src2].add(w2.astype(bf16))
    deg = jnp.zeros((N,), f32).at[dst2].add(w2)
    dinv = jnp.where(deg > 0, 1.0 / jnp.sqrt(deg), 0.0)

    p = _prepare_params(params, C, H, Hp)

    # --- XW precompute: (dinv * X) @ Wg is O(N*C*H); stream it as bf16 tiles
    # so the encoder hot loop is a single A_tile @ XW_tile per step.
    xw = (x.astype(f32) * dinv[:, None]) @ p["w_gcn"]
    xw_p = jnp.zeros((Np, Hp), bf16).at[:N, :].set(xw.astype(bf16))

    dinv_p = jnp.zeros((Np, 1), f32).at[:N, 0].set(dinv)
    h_p = jnp.zeros((Np, Hp), f32).at[:N, :H].set(h.astype(f32))
    # int8 mask: exact for 0/1 masks; non-binary masks would be truncated.
    mask_p = jnp.zeros((Np, Np), jnp.int8).at[:N, :N].set(mask.astype(jnp.int8))

    const = lambda i, k: (0, 0)   # weights: DMA'd once, held across the grid

    # ------------------------- encoder -------------------------
    z_p, z_bf = pl.pallas_call(
        _encoder_kernel,
        out_shape=(jax.ShapeDtypeStruct((Np, Hp), f32),
                   jax.ShapeDtypeStruct((Np, Hp), bf16)),
        grid=(GI, GI),
        in_specs=[
            pl.BlockSpec((tile, tile), lambda i, k: (i, k)),   # A (bf16)
            pl.BlockSpec((tile, Hp),   lambda i, k: (k, 0)),   # XW (bf16)
            pl.BlockSpec((tile, 1),    lambda i, k: (i, 0)),   # dinv rows
            pl.BlockSpec((tile, Hp),   lambda i, k: (i, 0)),   # h
            pl.BlockSpec((1, Hp),          const),             # b_gcn
            pl.BlockSpec((2 * Hp, 2 * Hp), const),             # w_rz (bf16, fused)
            pl.BlockSpec((1, 2 * Hp),      const),             # b_rz
            pl.BlockSpec((Hp, Hp),         const),             # w_in (bf16)
            pl.BlockSpec((1, Hp),          const),             # b_in
            pl.BlockSpec((Hp, Hp),         const),             # w_hn (bf16)
            pl.BlockSpec((1, Hp),          const),             # b_hn
        ],
        out_specs=[pl.BlockSpec((tile, Hp), lambda i, k: (i, 0)),
                   pl.BlockSpec((tile, Hp), lambda i, k: (i, 0))],
        scratch_shapes=[pltpu.VMEM((tile, Hp), f32),          # GCN accumulator
                        pltpu.VMEM((tile, 2 * Hp), bf16)],    # [m | h] staging
        compiler_params=pltpu.CompilerParams(
            dimension_semantics=("parallel", "arbitrary")),
    )(A_p, xw_p, dinv_p, h_p,
      p["b_gcn"], p["w_rz"], p["b_rz"],
      p["w_in"], p["b_in"], p["w_hn"], p["b_hn"])

    # ------------------------- decoder -------------------------
    hold_z_resident = (Np * Hp * 2) <= (8 << 20)   # bf16 Z fits easily in VMEM
    if hold_z_resident:
        kernel = _decoder_kernel_resident
        zj_spec = pl.BlockSpec((Np, Hp), lambda i, j: (0, 0))   # whole Z, held
    else:
        kernel = _decoder_kernel_tiled
        zj_spec = pl.BlockSpec((tile, Hp), lambda i, j: (j, 0))

    adj_p = pl.pallas_call(
        kernel,
        out_shape=jax.ShapeDtypeStruct((Np, Np), adj_dtype),
        grid=(GI, GI),
        in_specs=[
            pl.BlockSpec((tile, Hp),   lambda i, j: (i, 0)),   # Z row tile (bf16)
            zj_spec,                                           # Z cols (bf16)
            pl.BlockSpec((tile, tile), lambda i, j: (i, j)),   # mask (int8)
        ],
        out_specs=pl.BlockSpec((tile, tile), lambda i, j: (i, j)),
        compiler_params=pltpu.CompilerParams(
            dimension_semantics=("parallel", "parallel")),
    )(z_bf, z_bf, mask_p)

    return z_p[:N, :H], adj_p[:N, :N]


def init_params(key, in_channels, hidden):
    ks = jax.random.split(key, 6)
    s = 0.1
    return {
        "w_gcn": s * jax.random.normal(ks[0], (in_channels, hidden), jnp.float32),
        "b_gcn": jnp.zeros((1, hidden), jnp.float32),
        "w_ih": s * jax.random.normal(ks[1], (hidden, 3 * hidden), jnp.float32),
        "w_hh": s * jax.random.normal(ks[2], (hidden, 3 * hidden), jnp.float32),
        "b_ih": s * jax.random.normal(ks[3], (1, 3 * hidden), jnp.float32),
        "b_hh": s * jax.random.normal(ks[4], (1, 3 * hidden), jnp.float32),
    }


# Pure-JAX reference (original, unfused math) for a tolerance check.
def reference_forward(x, edge_index, edge_attr, mask, h, params):
    N = x.shape[0]
    H = h.shape[-1]
    src, dst = edge_index[0], edge_index[1]
    A = jnp.zeros((N, N), jnp.float32).at[dst, src].add(edge_attr.astype(jnp.float32))
    A = A + jnp.eye(N, dtype=jnp.float32)
    deg = A.sum(axis=1)
    dinv = jnp.where(deg > 0, 1.0 / jnp.sqrt(deg), 0.0)
    An = dinv[:, None] * A * dinv[None, :]
    m = jax.nn.relu(An @ (x @ params["w_gcn"]) + params["b_gcn"])
    gi = m @ params["w_ih"] + params["b_ih"]
    gh = h @ params["w_hh"] + params["b_hh"]
    r = jax.nn.sigmoid(gi[:, :H] + gh[:, :H])
    u = jax.nn.sigmoid(gi[:, H:2 * H] + gh[:, H:2 * H])
    n = jnp.tanh(gi[:, 2 * H:] + r * gh[:, 2 * H:])
    z = (1.0 - u) * n + u * h
    adj = jax.nn.sigmoid(z @ z.T) * mask
    return z, adj


if __name__ == "__main__":
    # nodes, input feats, hidden, edges (N deliberately not a tile multiple
    # to exercise the padding path).
    N, C, H, E = 200, 8, 32, 800

    key = jax.random.PRNGKey(0)
    k_x, k_src, k_dst, k_w, k_m, k_h, k_p = jax.random.split(key, 7)

    x = jax.random.normal(k_x, (N, C), jnp.float32)
    edge_index = jnp.stack([jax.random.randint(k_src, (E,), 0, N),
                            jax.random.randint(k_dst, (E,), 0, N)], axis=0)
    edge_attr = jax.random.uniform(k_w, (E,), jnp.float32)
    mask = (jax.random.uniform(k_m, (N, N)) > 0.5).astype(jnp.float32)
    h = jax.random.normal(k_h, (N, H), jnp.float32)
    params = init_params(k_p, C, H)

    z, adj = jax.jit(gaegru_forward)(x, edge_index, edge_attr, mask, h, params)
    jax.block_until_ready((z, adj))

    z_ref, adj_ref = jax.jit(reference_forward)(x, edge_index, edge_attr, mask, h, params)
    jax.block_until_ready((z_ref, adj_ref))

    assert z.shape == (N, H) and adj.shape == (N, N)
    assert bool(jnp.all(jnp.isfinite(z))) and bool(jnp.all(jnp.isfinite(adj)))
    z_err = float(jnp.max(jnp.abs(z - z_ref)))
    a_err = float(jnp.max(jnp.abs(adj.astype(jnp.float32) - adj_ref)))
    assert z_err < 5e-2 and a_err < 5e-2, (z_err, a_err)
    print("KERNEL_OK")
</pallas_src>

<mosaic_0001>
module attributes {stable_mosaic.version = 11 : i64} {
  func.func private @main(%arg0: i32) attributes {dimension_semantics = [#tpu.dimension_semantics<core_parallel>], iteration_bounds = array<i64: 2>, tpu.core_type = #tpu.core_type<sc_scalar_subcore>, window_params = []} {
    return
  }
}

module attributes {stable_mosaic.version = 11 : i64} {
  func.func private @main(%arg0: i32) attributes {dimension_semantics = [#tpu.dimension_semantics<core_parallel>], iteration_bounds = array<i64: 2>, tpu.core_type = #tpu.core_type<sc_scalar_subcore>, window_params = []} {
    return
  }
}

module attributes {stable_mosaic.version = 11 : i64} {
  func.func @_decoder_kernel_resident(%arg0: i32, %arg1: i32, %arg2: memref<128x128xbf16, #tpu.memory_space<vmem>>, %arg3: memref<256x128xbf16, #tpu.memory_space<vmem>>, %arg4: memref<128x128xi8, #tpu.memory_space<vmem>>, %arg5: memref<128x128xbf16, #tpu.memory_space<vmem>>) attributes {dimension_semantics = [#tpu.dimension_semantics<parallel>, #tpu.dimension_semantics<parallel>], iteration_bounds = array<i64: 2, 2>, scalar_prefetch = 0 : i64, scratch_operands = 0 : i64, tpu.core_type = #tpu.core_type<tc>, window_params = [{transform_indices = @transform_0, window_bounds = array<i64: 128, 128>}, {pipeline_mode = #tpu.pipeline_mode<synchronous>, transform_indices = @transform_1, window_bounds = array<i64: 256, 128>}, {transform_indices = @transform_2, window_bounds = array<i64: 128, 128>}, {transform_indices = @transform_3, window_bounds = array<i64: 128, 128>}]} {
    %c128_i32 = arith.constant 128 : i32
    %0 = arith.muli %arg1, %c128_i32 : i32
    %1 = tpu.assume_multiple %0, 128 : i32
    %2 = arith.index_cast %1 : i32 to index
    %c0 = arith.constant 0 : index
    %3 = vector.load %arg3[%2, %c0] : memref<256x128xbf16, #tpu.memory_space<vmem>>, vector<128x128xbf16>
    %c0_0 = arith.constant 0 : index
    %c0_1 = arith.constant 0 : index
    %4 = vector.load %arg2[%c0_0, %c0_1] : memref<128x128xbf16, #tpu.memory_space<vmem>>, vector<128x128xbf16>
    %cst = arith.constant dense<0.000000e+00> : vector<128x128xf32>
    %5 = tpu.matmul %4, %3, %cst {dimension_numbers = #tpu.dot_dimension_numbers<[1], [1], [0], [0], [0, 0, 1, 0], [], []>} : vector<128x128xbf16>, vector<128x128xbf16>, vector<128x128xf32> -> vector<128x128xf32>
    %6 = arith.negf %5 : vector<128x128xf32>
    %7 = math.exp %6 : vector<128x128xf32>
    %cst_2 = arith.constant 1.000000e+00 : f32
    %8 = vector.broadcast %cst_2 : f32 to vector<128x128xf32>
    %9 = arith.addf %8, %7 : vector<128x128xf32>
    %10 = arith.divf %8, %9 : vector<128x128xf32>
    %c0_3 = arith.constant 0 : index
    %c0_4 = arith.constant 0 : index
    %11 = vector.load %arg4[%c0_3, %c0_4] : memref<128x128xi8, #tpu.memory_space<vmem>>, vector<128x128xi8>
    %12 = arith.sitofp %11 : vector<128x128xi8> to vector<128x128xf32>
    %13 = arith.mulf %10, %12 : vector<128x128xf32>
    %14 = arith.truncf %13 : vector<128x128xf32> to vector<128x128xbf16>
    %c0_5 = arith.constant 0 : index
    %c0_6 = arith.constant 0 : index
    %15 = vector.load %arg5[%c0_5, %c0_6] : memref<128x128xbf16, #tpu.memory_space<vmem>>, vector<128x128xbf16>
    tpu.vector_store %arg5[%c0_5, %c0_6], %14 {strides = array<i32>} : memref<128x128xbf16, #tpu.memory_space<vmem>>, vector<128x128xbf16>,
    return
  }
  func.func @transform_0(%arg0: i32, %arg1: i32) -> (i32, i32) {
    %c0_i32 = arith.constant 0 : i32
    %c0_i32_0 = arith.constant 0 : i32
    return %arg0, %c0_i32 : i32, i32
  }
  func.func @transform_1(%arg0: i32, %arg1: i32) -> (i32, i32) {
    %c0_i32 = arith.constant 0 : i32
    %c0_i32_0 = arith.constant 0 : i32
    %c0_i32_1 = arith.constant 0 : i32
    return %c0_i32, %c0_i32_0 : i32, i32
  }
  func.func @transform_2(%arg0: i32, %arg1: i32) -> (i32, i32) {
    %c0_i32 = arith.constant 0 : i32
    return %arg0, %arg1 : i32, i32
  }
  func.func @transform_3(%arg0: i32, %arg1: i32) -> (i32, i32) {
    %c0_i32 = arith.constant 0 : i32
    return %arg0, %arg1 : i32, i32
  }
}

module attributes {stable_mosaic.version = 11 : i64} {
  func.func @_encoder_kernel(%arg0: i32, %arg1: i32, %arg2: memref<128x128xbf16, #tpu.memory_space<vmem>>, %arg3: memref<128x128xbf16, #tpu.memory_space<vmem>>, %arg4: memref<128x1xf32, #tpu.memory_space<vmem>>, %arg5: memref<128x128xf32, #tpu.memory_space<vmem>>, %arg6: memref<1x128xf32, #tpu.memory_space<vmem>>, %arg7: memref<256x256xbf16, #tpu.memory_space<vmem>>, %arg8: memref<1x256xf32, #tpu.memory_space<vmem>>, %arg9: memref<128x128xbf16, #tpu.memory_space<vmem>>, %arg10: memref<1x128xf32, #tpu.memory_space<vmem>>, %arg11: memref<128x128xbf16, #tpu.memory_space<vmem>>, %arg12: memref<1x128xf32, #tpu.memory_space<vmem>>, %arg13: memref<128x128xf32, #tpu.memory_space<vmem>>, %arg14: memref<128x128xbf16, #tpu.memory_space<vmem>>, %arg15: memref<128x128xf32, #tpu.memory_space<vmem>>, %arg16: memref<128x256xbf16, #tpu.memory_space<vmem>>) attributes {dimension_semantics = [#tpu.dimension_semantics<parallel>, #tpu.dimension_semantics<arbitrary>], iteration_bounds = array<i64: 2, 2>, scalar_prefetch = 0 : i64, scratch_operands = 2 : i64, tpu.core_type = #tpu.core_type<tc>, window_params = [{transform_indices = @transform_0, window_bounds = array<i64: 128, 128>}, {transform_indices = @transform_1, window_bounds = array<i64: 128, 128>}, {transform_indices = @transform_2, window_bounds = array<i64: 128, 1>}, {transform_indices = @transform_3, window_bounds = array<i64: 128, 128>}, {pipeline_mode = #tpu.pipeline_mode<synchronous>, transform_indices = @transform_4, window_bounds = array<i64: 1, 128>}, {pipeline_mode = #tpu.pipeline_mode<synchronous>, transform_indices = @transform_5, window_bounds = array<i64: 256, 256>}, {pipeline_mode = #tpu.pipeline_mode<synchronous>, transform_indices = @transform_6, window_bounds = array<i64: 1, 256>}, {pipeline_mode = #tpu.pipeline_mode<synchronous>, transform_indices = @transform_7, window_bounds = array<i64: 128, 128>}, {pipeline_mode = #tpu.pipeline_mode<synchronous>, transform_indices = @transform_8, window_bounds = array<i64: 1, 128>}, {pipeline_mode = #tpu.pipeline_mode<synchronous>, transform_indices = @transform_9, window_bounds = array<i64: 128, 128>}, {pipeline_mode = #tpu.pipeline_mode<synchronous>, transform_indices = @transform_10, window_bounds = array<i64: 1, 128>}, {transform_indices = @transform_11, window_bounds = array<i64: 128, 128>}, {transform_indices = @transform_12, window_bounds = array<i64: 128, 128>}]} {
    %c0_i32 = arith.constant 0 : i32
    %0 = arith.cmpi eq, %arg1, %c0_i32 : i32
    %1 = arith.extui %0 : i1 to i32
    %c0_i32_0 = arith.constant 0 : i32
    %2 = arith.cmpi ne, %1, %c0_i32_0 : i32
    scf.if %2 {
      %cst_9 = arith.constant 0.000000e+00 : f32
      %12 = vector.broadcast %cst_9 : f32 to vector<128x128xf32>
      %c0_10 = arith.constant 0 : index
      %c0_11 = arith.constant 0 : index
      %13 = vector.load %arg15[%c0_10, %c0_11] : memref<128x128xf32, #tpu.memory_space<vmem>>, vector<128x128xf32>
      tpu.vector_store %arg15[%c0_10, %c0_11], %12 {strides = array<i32>} : memref<128x128xf32, #tpu.memory_space<vmem>>, vector<128x128xf32>,
    } else {
    }
    %c0 = arith.constant 0 : index
    %c0_1 = arith.constant 0 : index
    %3 = vector.load %arg15[%c0, %c0_1] : memref<128x128xf32, #tpu.memory_space<vmem>>, vector<128x128xf32>
    %c0_2 = arith.constant 0 : index
    %c0_3 = arith.constant 0 : index
    %4 = vector.load %arg2[%c0_2, %c0_3] : memref<128x128xbf16, #tpu.memory_space<vmem>>, vector<128x128xbf16>
    %c0_4 = arith.constant 0 : index
    %c0_5 = arith.constant 0 : index
    %5 = vector.load %arg3[%c0_4, %c0_5] : memref<128x128xbf16, #tpu.memory_space<vmem>>, vector<128x128xbf16>
    %cst = arith.constant dense<0.000000e+00> : vector<128x128xf32>
    %6 = tpu.matmul %4, %5, %cst {dimension_numbers = #tpu.dot_dimension_numbers<[1], [0], [0], [1], [0, 0, 1, 1], [], []>} : vector<128x128xbf16>, vector<128x128xbf16>, vector<128x128xf32> -> vector<128x128xf32>
    %7 = arith.addf %3, %6 : vector<128x128xf32>
    %c0_6 = arith.constant 0 : index
    %c0_7 = arith.constant 0 : index
    %8 = vector.load %arg15[%c0_6, %c0_7] : memref<128x128xf32, #tpu.memory_space<vmem>>, vector<128x128xf32>
    tpu.vector_store %arg15[%c0_6, %c0_7], %7 {strides = array<i32>} : memref<128x128xf32, #tpu.memory_space<vmem>>, vector<128x128xf32>,
    %c1_i32 = arith.constant 1 : i32
    %9 = arith.cmpi eq, %arg1, %c1_i32 : i32
    %10 = arith.extui %9 : i1 to i32
    %c0_i32_8 = arith.constant 0 : i32
    %11 = arith.cmpi ne, %10, %c0_i32_8 : i32
    scf.if %11 {
      %c0_9 = arith.constant 0 : index
      %c0_10 = arith.constant 0 : index
      %12 = vector.load %arg15[%c0_9, %c0_10] : memref<128x128xf32, #tpu.memory_space<vmem>>, vector<128x128xf32>
      %c0_11 = arith.constant 0 : index
      %c0_12 = arith.constant 0 : index
      %13 = vector.load %arg4[%c0_11, %c0_12] : memref<128x1xf32, #tpu.memory_space<vmem>>, vector<128x1xf32>
      %14 = vector.broadcast %13 : vector<128x1xf32> to vector<128x128xf32>
      %15 = arith.mulf %12, %14 : vector<128x128xf32>
      %c0_13 = arith.constant 0 : index
      %c0_14 = arith.constant 0 : index
      %16 = vector.load %arg6[%c0_13, %c0_14] : memref<1x128xf32, #tpu.memory_space<vmem>>, vector<1x128xf32>
      %17 = vector.broadcast %16 : vector<1x128xf32> to vector<128x128xf32>
      %18 = arith.addf %15, %17 : vector<128x128xf32>
      %cst_15 = arith.constant 0.000000e+00 : f32
      %19 = vector.broadcast %cst_15 : f32 to vector<128x128xf32>
      %20 = arith.maximumf %18, %19 : vector<128x128xf32>
      %c0_16 = arith.constant 0 : index
      %c0_17 = arith.constant 0 : index
      %21 = vector.load %arg5[%c0_16, %c0_17] : memref<128x128xf32, #tpu.memory_space<vmem>>, vector<128x128xf32>
      %22 = arith.truncf %20 : vector<128x128xf32> to vector<128x128xbf16>
      %c0_18 = arith.constant 0 : index
      %c0_19 = arith.constant 0 : index
      %23 = vector.load %arg16[%c0_18, %c0_19] : memref<128x256xbf16, #tpu.memory_space<vmem>>, vector<128x128xbf16>
      tpu.vector_store %arg16[%c0_18, %c0_19], %22 {strides = array<i32>} : memref<128x256xbf16, #tpu.memory_space<vmem>>, vector<128x128xbf16>,
      %24 = arith.truncf %21 : vector<128x128xf32> to vector<128x128xbf16>
      %c0_20 = arith.constant 0 : index
      %c128 = arith.constant 128 : index
      %25 = vector.load %arg16[%c0_20, %c128] : memref<128x256xbf16, #tpu.memory_space<vmem>>, vector<128x128xbf16>
      tpu.vector_store %arg16[%c0_20, %c128], %24 {strides = array<i32>} : memref<128x256xbf16, #tpu.memory_space<vmem>>, vector<128x128xbf16>,
      %c0_21 = arith.constant 0 : index
      %c0_22 = arith.constant 0 : index
      %26 = vector.load %arg16[%c0_21, %c0_22] : memref<128x256xbf16, #tpu.memory_space<vmem>>, vector<128x256xbf16>
      %c0_23 = arith.constant 0 : index
      %c0_24 = arith.constant 0 : index
      %27 = vector.load %arg7[%c0_23, %c0_24] : memref<256x256xbf16, #tpu.memory_space<vmem>>, vector<256x256xbf16>
      %cst_25 = arith.constant dense<0.000000e+00> : vector<128x256xf32>
      %28 = tpu.matmul %26, %27, %cst_25 {dimension_numbers = #tpu.dot_dimension_numbers<[1], [0], [0], [1], [0, 0, 1, 1], [], []>} : vector<128x256xbf16>, vector<256x256xbf16>, vector<128x256xf32> -> vector<128x256xf32>
      %c0_26 = arith.constant 0 : index
      %c0_27 = arith.constant 0 : index
      %29 = vector.load %arg8[%c0_26, %c0_27] : memref<1x256xf32, #tpu.memory_space<vmem>>, vector<1x256xf32>
      %30 = vector.broadcast %29 : vector<1x256xf32> to vector<128x256xf32>
      %31 = arith.addf %28, %30 : vector<128x256xf32>
      %32 = vector.extract_strided_slice %31 {offsets = [0, 0], sizes = [128, 128], strides = [1, 1]} : vector<128x256xf32> to vector<128x128xf32>
      %33 = arith.negf %32 : vector<128x128xf32>
      %34 = math.exp %33 : vector<128x128xf32>
      %cst_28 = arith.constant 1.000000e+00 : f32
      %35 = vector.broadcast %cst_28 : f32 to vector<128x128xf32>
      %36 = arith.addf %35, %34 : vector<128x128xf32>
      %37 = arith.divf %35, %36 : vector<128x128xf32>
      %38 = vector.extract_strided_slice %31 {offsets = [0, 128], sizes = [128, 128], strides = [1, 1]} : vector<128x256xf32> to vector<128x128xf32>
      %39 = arith.negf %38 : vector<128x128xf32>
      %40 = math.exp %39 : vector<128x128xf32>
      %cst_29 = arith.constant 1.000000e+00 : f32
      %41 = vector.broadcast %cst_29 : f32 to vector<128x128xf32>
      %42 = arith.addf %41, %40 : vector<128x128xf32>
      %43 = arith.divf %41, %42 : vector<128x128xf32>
      %c0_30 = arith.constant 0 : index
      %c0_31 = arith.constant 0 : index
      %44 = vector.load %arg16[%c0_30, %c0_31] : memref<128x256xbf16, #tpu.memory_space<vmem>>, vector<128x128xbf16>
      %c0_32 = arith.constant 0 : index
      %c128_33 = arith.constant 128 : index
      %45 = vector.load %arg16[%c0_32, %c128_33] : memref<128x256xbf16, #tpu.memory_space<vmem>>, vector<128x128xbf16>
      %c0_34 = arith.constant 0 : index
      %c0_35 = arith.constant 0 : index
      %46 = vector.load %arg9[%c0_34, %c0_35] : memref<128x128xbf16, #tpu.memory_space<vmem>>, vector<128x128xbf16>
      %cst_36 = arith.constant dense<0.000000e+00> : vector<128x128xf32>
      %47 = tpu.matmul %44, %46, %cst_36 {dimension_numbers = #tpu.dot_dimension_numbers<[1], [0], [0], [1], [0, 0, 1, 1], [], []>} : vector<128x128xbf16>, vector<128x128xbf16>, vector<128x128xf32> -> vector<128x128xf32>
      %c0_37 = arith.constant 0 : index
      %c0_38 = arith.constant 0 : index
      %48 = vector.load %arg10[%c0_37, %c0_38] : memref<1x128xf32, #tpu.memory_space<vmem>>, vector<1x128xf32>
      %49 = vector.broadcast %48 : vector<1x128xf32> to vector<128x128xf32>
      %50 = arith.addf %47, %49 : vector<128x128xf32>
      %c0_39 = arith.constant 0 : index
      %c0_40 = arith.constant 0 : index
      %51 = vector.load %arg11[%c0_39, %c0_40] : memref<128x128xbf16, #tpu.memory_space<vmem>>, vector<128x128xbf16>
      %cst_41 = arith.constant dense<0.000000e+00> : vector<128x128xf32>
      %52 = tpu.matmul %45, %51, %cst_41 {dimension_numbers = #tpu.dot_dimension_numbers<[1], [0], [0], [1], [0, 0, 1, 1], [], []>} : vector<128x128xbf16>, vector<128x128xbf16>, vector<128x128xf32> -> vector<128x128xf32>
      %c0_42 = arith.constant 0 : index
      %c0_43 = arith.constant 0 : index
      %53 = vector.load %arg12[%c0_42, %c0_43] : memref<1x128xf32, #tpu.memory_space<vmem>>, vector<1x128xf32>
      %54 = vector.broadcast %53 : vector<1x128xf32> to vector<128x128xf32>
      %55 = arith.addf %52, %54 : vector<128x128xf32>
      %56 = arith.mulf %37, %55 : vector<128x128xf32>
      %57 = arith.addf %50, %56 : vector<128x128xf32>
      %58 = math.tanh %57 : vector<128x128xf32>
      %cst_44 = arith.constant 1.000000e+00 : f32
      %59 = vector.broadcast %cst_44 : f32 to vector<128x128xf32>
      %60 = arith.subf %59, %43 : vector<128x128xf32>
      %61 = arith.mulf %60, %58 : vector<128x128xf32>
      %62 = arith.mulf %43, %21 : vector<128x128xf32>
      %63 = arith.addf %61, %62 : vector<128x128xf32>
      %c0_45 = arith.constant 0 : index
      %c0_46 = arith.constant 0 : index
      %64 = vector.load %arg13[%c0_45, %c0_46] : memref<128x128xf32, #tpu.memory_space<vmem>>, vector<128x128xf32>
      tpu.vector_store %arg13[%c0_45, %c0_46], %63 {strides = array<i32>} : memref<128x128xf32, #tpu.memory_space<vmem>>, vector<128x128xf32>,
      %65 = arith.truncf %63 : vector<128x128xf32> to vector<128x128xbf16>
      %c0_47 = arith.constant 0 : index
      %c0_48 = arith.constant 0 : index
      %66 = vector.load %arg14[%c0_47, %c0_48] : memref<128x128xbf16, #tpu.memory_space<vmem>>, vector<128x128xbf16>
      tpu.vector_store %arg14[%c0_47, %c0_48], %65 {strides = array<i32>} : memref<128x128xbf16, #tpu.memory_space<vmem>>, vector<128x128xbf16>,
    } else {
    }
    return
  }
  func.func @transform_0(%arg0: i32, %arg1: i32) -> (i32, i32) {
    %c0_i32 = arith.constant 0 : i32
    return %arg0, %arg1 : i32, i32
  }
  func.func @transform_1(%arg0: i32, %arg1: i32) -> (i32, i32) {
    %c0_i32 = arith.constant 0 : i32
    %c0_i32_0 = arith.constant 0 : i32
    return %arg1, %c0_i32 : i32, i32
  }
  func.func @transform_2(%arg0: i32, %arg1: i32) -> (i32, i32) {
    %c0_i32 = arith.constant 0 : i32
    %c0_i32_0 = arith.constant 0 : i32
    return %arg0, %c0_i32 : i32, i32
  }
  func.func @transform_3(%arg0: i32, %arg1: i32) -> (i32, i32) {
    %c0_i32 = arith.constant 0 : i32
    %c0_i32_0 = arith.constant 0 : i32
    return %arg0, %c0_i32 : i32, i32
  }
  func.func @transform_4(%arg0: i32, %arg1: i32) -> (i32, i32) {
    %c0_i32 = arith.constant 0 : i32
    %c0_i32_0 = arith.constant 0 : i32
    %c0_i32_1 = arith.constant 0 : i32
    return %c0_i32, %c0_i32_0 : i32, i32
  }
  func.func @transform_5(%arg0: i32, %arg1: i32) -> (i32, i32) {
    %c0_i32 = arith.constant 0 : i32
    %c0_i32_0 = arith.constant 0 : i32
    %c0_i32_1 = arith.constant 0 : i32
    return %c0_i32, %c0_i32_0 : i32, i32
  }
  func.func @transform_6(%arg0: i32, %arg1: i32) -> (i32, i32) {
    %c0_i32 = arith.constant 0 : i32
    %c0_i32_0 = arith.constant 0 : i32
    %c0_i32_1 = arith.constant 0 : i32
    return %c0_i32, %c0_i32_0 : i32, i32
  }
  func.func @transform_7(%arg0: i32, %arg1: i32) -> (i32, i32) {
    %c0_i32 = arith.constant 0 : i32
    %c0_i32_0 = arith.constant 0 : i32
    %c0_i32_1 = arith.constant 0 : i32
    return %c0_i32, %c0_i32_0 : i32, i32
  }
  func.func @transform_8(%arg0: i32, %arg1: i32) -> (i32, i32) {
    %c0_i32 = arith.constant 0 : i32
    %c0_i32_0 = arith.constant 0 : i32
    %c0_i32_1 = arith.constant 0 : i32
    return %c0_i32, %c0_i32_0 : i32, i32
  }
  func.func @transform_9(%arg0: i32, %arg1: i32) -> (i32, i32) {
    %c0_i32 = arith.constant 0 : i32
    %c0_i32_0 = arith.constant 0 : i32
    %c0_i32_1 = arith.constant 0 : i32
    return %c0_i32, %c0_i32_0 : i32, i32
  }
  func.func @transform_10(%arg0: i32, %arg1: i32) -> (i32, i32) {
    %c0_i32 = arith.constant 0 : i32
    %c0_i32_0 = arith.constant 0 : i32
    %c0_i32_1 = arith.constant 0 : i32
    return %c0_i32, %c0_i32_0 : i32, i32
  }
  func.func @transform_11(%arg0: i32, %arg1: i32) -> (i32, i32) {
    %c0_i32 = arith.constant 0 : i32
    %c0_i32_0 = arith.constant 0 : i32
    return %arg0, %c0_i32 : i32, i32
  }
  func.func @transform_12(%arg0: i32, %arg1: i32) -> (i32, i32) {
    %c0_i32 = arith.constant 0 : i32
    %c0_i32_0 = arith.constant 0 : i32
    return %arg0, %c0_i32 : i32, i32
  }
}

</mosaic_0001>

<llo_original>
// kernel: gaegru_forward.3
$region0: #{gaegru_forward.3}
  #allocation0 [shape = 'u32[]', space=smem, size = 0x4, offset = 0x4, fixed_abs, tag = 'smem constant byte address 0x4 - core index']
  #allocation1 [shape = 'u32[144,128]{1,0:T(1,128)}', space=vmem, size = 0x12000, scoped, tag = 'internal scratch']
  %s0 = inlined_call_operand.vmem [shape: bf16[256,128], index: 0, kind: input, shape index: {}, may-alias: {0,1}]
  %s1 = inlined_call_operand.vmem [shape: bf16[256,128], index: 1, kind: input, shape index: {}, may-alias: {0,1}]
  %s2 = inlined_call_operand.vmem [shape: s8[256,256], index: 2, kind: input, shape index: {}]
  %s3 = inlined_call_operand.vmem [shape: bf16[256,256], index: 3, kind: output, shape index: {}]
  %s4 = sld [smem:[#allocation0]]
  $region120: #{gaegru_forward.3} parent=0
    _
  %s6 = ssub.s32 1, %s4
  %s7 = scalar_select 0, %s6, %s4
  $region1: #{gaegru_forward.3} parent=0
    #allocation2 [shape = 'u8[32768]{0}', space=vmem, size = 0x8000, scoped, tag = 'input window, operand 2']
    #allocation3 [shape = 'u8[65536]{0}', space=vmem, size = 0x10000, scoped, tag = 'output window, operand 0']
    loop: start=0, step=1, limit=6
    $region2: #{gaegru_forward.3} parent=1 // loop_pre_header
      _
    $region3: #{gaegru_forward.3} parent=1 // loop_header
      %s9 = sphi 0, %s13
      %p10 = scmp.ge.s32.totalorder %s9, 6
      %s16 = sphi 0, %s28
      %s17 = sphi 0, %s24
      %s18 = sphi 0, %s16
      %s19 = sphi 0, %s17
      %s20 = sphi 0, %s18
      %s21 = sphi 0, %s19
      %s31 = sphi 0, %s33
      %s34 = sphi 0, %s31
      %s35 = sphi 0, %s34
      %s51 = sphi 0, %s35
      %s55 = sphi 0, %s55
      %s57 = sphi 0, %s55
      %s58 = sphi 0, %s57
      %s72 = sphi 0, %s58
      %s80 = sphi 0, %s82
      %s83 = sphi 0, %s80
      %s84 = sphi 0, %s83
      %s100 = sphi 0, %s84
      %s108 = sphi 0, %s110
      %s111 = sphi 0, %s108
      %s112 = sphi 0, %s111
      %s128 = sphi 0, %s112
    $region4: #{gaegru_forward.3} parent=1 // loop_header_branch
      %12 = sbr.rel (%p10) target = $region8
    $region5: #{gaegru_forward.3} parent=1 // loop_body
      %s14 = ssub.s32 %s9, 1
      %s15 = ssub.s32 %s9, 2
      %s22 = sadd.s32 1, %s17
      %p23 = scmp.ge.s32.totalorder %s22, 2
      %s24 = scalar_select %p23, 0, %s22
      %s25 = sadd.s32 1, %s16
      %s26 = scalar_select %p23, %s25, %s16
      %p27 = scmp.ge.s32.totalorder %s26, 2
      %s28 = scalar_select %p27, 0, %s26
      %s29 = ssub.s32 %s16, %s28
      %p30 = scmp.eq.s32.totalorder %s29, 0
      %s32 = sadd.s32 %s31, 1
      %s33 = scalar_select %p30, %s31, %s32
      %p36 = pneg %p30
      %p37 = scmp.eq.s32.totalorder %s9, 3
      %p38 = por %p36, %p37
      %p39 = scmp.ne.s32.totalorder %s31, %s34
      %p40 = scmp.eq.s32.totalorder %s9, 0
      %p41 = por %p39, %p40
      %p42 = scmp.ne.s32.totalorder %s31, %s34
      %p43 = scmp.eq.s32.totalorder %s14, 3
      %p44 = por %p42, %p43
      %p45 = scmp.ne.s32.totalorder %s34, %s35
      %p46 = scmp.eq.s32.totalorder %s14, 0
      %p47 = por %p45, %p46
      %p48 = scmp.ne.s32.totalorder %s34, %s35
      %p49 = scmp.eq.s32.totalorder %s15, 3
      %p50 = por %p48, %p49
      %p52 = scmp.ne.s32.totalorder %s35, %s51
      %p53 = scmp.eq.s32.totalorder %s15, 0
      %p54 = por %p52, %p53
      %s56 = sadd.s32 %s55, 1
      %p59 = scmp.eq.s32.totalorder %s9, 3
      %p60 = scmp.ne.s32.totalorder %s55, %s57
      %p61 = scmp.eq.s32.totalorder %s9, 0
      %p62 = por %p60, %p61
      %p63 = scmp.ne.s32.totalorder %s55, %s57
      %p64 = scmp.eq.s32.totalorder %s14, 3
      %p65 = por %p63, %p64
      %p66 = scmp.ne.s32.totalorder %s57, %s58
      %p67 = scmp.eq.s32.totalorder %s14, 0
      %p68 = por %p66, %p67
      %p69 = scmp.ne.s32.totalorder %s57, %s58
      %p70 = scmp.eq.s32.totalorder %s15, 3
      %p71 = por %p69, %p70
      %p73 = scmp.ne.s32.totalorder %s58, %s72
      %p74 = scmp.eq.s32.totalorder %s15, 0
      %p75 = por %p73, %p74
      %s76 = ssub.s32 %s16, %s28
      %s77 = ssub.s32 %s17, %s24
      %s78 = sor.u32 %s76, %s77
      %p79 = scmp.eq.s32.totalorder %s78, 0
      %s81 = sadd.s32 %s80, 1
      %s82 = scalar_select %p79, %s80, %s81
      %p85 = pneg %p79
      %p86 = scmp.eq.s32.totalorder %s9, 3
      %p87 = por %p85, %p86
      %p88 = scmp.ne.s32.totalorder %s80, %s83
      %p89 = scmp.eq.s32.totalorder %s9, 0
      %p90 = por %p88, %p89
      %p91 = scmp.ne.s32.totalorder %s80, %s83
      %p92 = scmp.eq.s32.totalorder %s14, 3
      %p93 = por %p91, %p92
      %p94 = scmp.ne.s32.totalorder %s83, %s84
      %p95 = scmp.eq.s32.totalorder %s14, 0
      %p96 = por %p94, %p95
      %p97 = scmp.ne.s32.totalorder %s83, %s84
      %p98 = scmp.eq.s32.totalorder %s15, 3
      %p99 = por %p97, %p98
      %p101 = scmp.ne.s32.totalorder %s84, %s100
      %p102 = scmp.eq.s32.totalorder %s15, 0
      %p103 = por %p101, %p102
      %s104 = ssub.s32 %s16, %s28
      %s105 = ssub.s32 %s17, %s24
      %s106 = sor.u32 %s104, %s105
      %p107 = scmp.eq.s32.totalorder %s106, 0
      %s109 = sadd.s32 %s108, 1
      %s110 = scalar_select %p107, %s108, %s109
      %p113 = pneg %p107
      %p114 = scmp.eq.s32.totalorder %s9, 3
      %p115 = por %p113, %p114
      %p116 = scmp.ne.s32.totalorder %s108, %s111
      %p117 = scmp.eq.s32.totalorder %s9, 0
      %p118 = por %p116, %p117
      %p119 = scmp.ne.s32.totalorder %s108, %s111
      %p120 = scmp.eq.s32.totalorder %s14, 3
      %p121 = por %p119, %p120
      %p122 = scmp.ne.s32.totalorder %s111, %s112
      %p123 = scmp.eq.s32.totalorder %s14, 0
      %p124 = por %p122, %p123
      %p125 = scmp.ne.s32.totalorder %s111, %s112
      %p126 = scmp.eq.s32.totalorder %s15, 3
      %p127 = por %p125, %p126
      %p129 = scmp.ne.s32.totalorder %s112, %s128
      %p130 = scmp.eq.s32.totalorder %s15, 0
      %p131 = por %p129, %p130
      %p132 = scmp.le.s32.totalorder 1, %s9
      %p133 = scmp.lt.s32.totalorder %s9, 5
      %p134 = pnand %p132, %p133
      %p135 = pneg %p134
      // Predicated region
      $region9: #{gaegru_forward.3} parent=5 // pred_check
        _
      $region10: #{gaegru_forward.3} parent=5 // pred_check_branch
        %137 = sbr.rel (%p134) target = $region12
      $region11: #{gaegru_forward.3} parent=5 // pred_region
        %s138 = ssub.s32 %s9, 1
        // Predicated region
        $region13: #{gaegru_forward.3} parent=11 // pred_check
          %p139 = pneg %p68
        $region14: #{gaegru_forward.3} parent=11 // pred_check_branch
          %141 = sbr.rel (%p139) target = $region16
        $region15: #{gaegru_forward.3} parent=11 // pred_region
          _
        $region16: #{gaegru_forward.3} parent=11 // pred_fallthru
          _
      $region12: #{gaegru_forward.3} parent=5 // pred_fallthru
        _
      %p142 = scmp.lt.s32.totalorder %s9, 4
      // Predicated region
      $region17: #{gaegru_forward.3} parent=5 // pred_check
        %p143 = pneg %p142
      $region18: #{gaegru_forward.3} parent=5 // pred_check_branch
        %145 = sbr.rel (%p143) target = $region20
      $region19: #{gaegru_forward.3} parent=5 // pred_region
        // Predicated region
        $region21: #{gaegru_forward.3} parent=19 // pred_check
          %p146 = pneg %p41
        $region22: #{gaegru_forward.3} parent=19 // pred_check_branch
          %148 = sbr.rel (%p146) target = $region24
        $region23: #{gaegru_forward.3} parent=19 // pred_region
          %s149 = smul.u32 16, %s16
          %p150 = scmp.lt.s32.totalorder %s149, 31
          %s151 = scalar_select %p150, %s149, 31
          %s152 = smul.addr %s151, 4
          %s153 = scalar_lea.vmem %s0, %s152
          %s154 = smul.u32 16, %s16
        $region24: #{gaegru_forward.3} parent=19 // pred_fallthru
          _
        // Predicated region
        $region25: #{gaegru_forward.3} parent=19 // pred_check
          %p155 = pneg %p90
        $region26: #{gaegru_forward.3} parent=19 // pred_check_branch
          %157 = sbr.rel (%p155) target = $region28
        $region27: #{gaegru_forward.3} parent=19 // pred_region
          %s158 = sand.u32 %s80, 1
          %s159 = sand.u32 %s80, 1
          %s160 = smul.addr %s159, 32
          %s161 = scalar_lea.vmem [#allocation2], %s160
          %s162 = smul.u32 4, %s16
          %s163 = smul.addr %s162, 2
          %s164 = sadd.s32 %s17, %s163
          %s165 = smul.addr %s164, 8
          %s166 = scalar_lea.vmem %s2, %s165
          // Predicated region
          $region29: #{gaegru_forward.3} parent=27 // pred_check
            _
          $region30: #{gaegru_forward.3} parent=27 // pred_check_branch
            %168 = sbr.rel (0) target = $region32
          $region31: #{gaegru_forward.3} parent=27 // pred_region
            // Predicated region
            $region33: #{gaegru_forward.3} parent=31 // pred_check
              _
            $region34: #{gaegru_forward.3} parent=31 // pred_check_branch
              %170 = sbr.rel (0) target = $region36
            $region35: #{gaegru_forward.3} parent=31 // pred_region
              // Predicated region
              $region48: #{gaegru_forward.3} parent=35 // pred_check
                _
              $region49: #{gaegru_forward.3} parent=35 // pred_check_branch
                %192 = sbr.rel (0) target = $region51
              $region50: #{gaegru_forward.3} parent=35 // pred_region
                loop: start=0, step=1, limit=1
                $region52: #{gaegru_forward.3} parent=50 // loop_pre_header
                  _
                $region53: #{gaegru_forward.3} parent=50 // loop_header
                  %s194 = sphi 0, %s198
                  %p195 = scmp.ge.s32.totalorder %s194, 1
                  %s199 = sphi %s166, %s166
                  %s200 = sphi %s161, %s161
                $region54: #{gaegru_forward.3} parent=50 // loop_header_branch
                  %197 = sbr.rel (%p195) target = $region58
                $region55: #{gaegru_forward.3} parent=50 // loop_body
                  %v201 = vld [vmem:[%s199] sm:$0xff]
                  %202 = vst [vmem:[%s200] sm:$0xff] %v201
                  %v203 = vld [vmem:[%s199 + $0x10] sm:$0xff]
                  %204 = vst [vmem:[%s200 + $0x8] sm:$0xff] %v203
                  %v205 = vld [vmem:[%s199 + $0x20] sm:$0xff]
                  %206 = vst [vmem:[%s200 + $0x10] sm:$0xff] %v205
                  %v207 = vld [vmem:[%s199 + $0x30] sm:$0xff]
                  %208 = vst [vmem:[%s200 + $0x18] sm:$0xff] %v207
                $region56: #{gaegru_forward.3} parent=50 // loop_footer
                  %s198 = sadd.s32 1, %s194
                $region57: #{gaegru_forward.3} parent=50 // loop_footer_branch
                  %193 = sbr.rel target = $region53
                $region58: #{gaegru_forward.3} parent=50 // loop_exit
                  _
              $region51: #{gaegru_forward.3} parent=35 // pred_fallthru
                _
              // Predicated region
              $region59: #{gaegru_forward.3} parent=35 // pred_check
                _
              $region60: #{gaegru_forward.3} parent=35 // pred_check_branch
                %210 = sbr.rel target = $region62
              $region61: #{gaegru_forward.3} parent=35 // pred_region
                _
              $region62: #{gaegru_forward.3} parent=35 // pred_fallthru
                _
            $region36: #{gaegru_forward.3} parent=31 // pred_fallthru
              _
            // Predicated region
            $region37: #{gaegru_forward.3} parent=31 // pred_check
              _
            $region38: #{gaegru_forward.3} parent=31 // pred_check_branch
              %172 = sbr.rel target = $region40
            $region39: #{gaegru_forward.3} parent=31 // pred_region
              %s174 = ssub.s32 256, 1
              loop: start=0, step=1, limit=1
              $region41: #{gaegru_forward.3} parent=39 // loop_pre_header
                _
              $region42: #{gaegru_forward.3} parent=39 // loop_header
                %s176 = sphi 0, %s180
                %p177 = scmp.ge.s32.totalorder %s176, 1
                %s181 = sphi %s166, %s166
                %s182 = sphi %s161, %s161
              $region43: #{gaegru_forward.3} parent=39 // loop_header_branch
                %179 = sbr.rel (%p177) target = $region47
              $region44: #{gaegru_forward.3} parent=39 // loop_body
                %v183 = vld [vmem:[%s181] sm:%s174]
                %184 = vst [vmem:[%s182] sm:%s174] %v183
                %v185 = vld [vmem:[%s181 + $0x10] sm:%s174]
                %186 = vst [vmem:[%s182 + $0x8] sm:%s174] %v185
                %v187 = vld [vmem:[%s181 + $0x20] sm:%s174]
                %188 = vst [vmem:[%s182 + $0x10] sm:%s174] %v187
                %v189 = vld [vmem:[%s181 + $0x30] sm:%s174]
                %190 = vst [vmem:[%s182 + $0x18] sm:%s174] %v189
              $region45: #{gaegru_forward.3} parent=39 // loop_footer
                %s180 = sadd.s32 1, %s176
              $region46: #{gaegru_forward.3} parent=39 // loop_footer_branch
                %175 = sbr.rel target = $region42
              $region47: #{gaegru_forward.3} parent=39 // loop_exit
                _
            $region40: #{gaegru_forward.3} parent=31 // pred_fallthru
              _
          $region32: #{gaegru_forward.3} parent=27 // pred_fallthru
            _
          %211 = vnop
        $region28: #{gaegru_forward.3} parent=19 // pred_fallthru
          _
      $region20: #{gaegru_forward.3} parent=5 // pred_fallthru
        _
      %p212 = scmp.le.s32.totalorder 1, %s9
      %p213 = scmp.lt.s32.totalorder %s9, 5
      %p214 = pnand %p212, %p213
      %p215 = pneg %p214
      // Predicated region
      $region63: #{gaegru_forward.3} parent=5 // pred_check
        _
      $region64: #{gaegru_forward.3} parent=5 // pred_check_branch
        %217 = sbr.rel (%p214) target = $region66
      $region65: #{gaegru_forward.3} parent=5 // pred_region
        %s218 = ssub.s32 %s9, 1
        %s219 = sand.u32 %s83, 1
        %s220 = sand.u32 %s83, 1
        %s221 = smul.addr %s220, 32
        %s222 = scalar_lea.vmem [#allocation2], %s221
        // Predicated region
        $region67: #{gaegru_forward.3} parent=65 // pred_check
          %p223 = pneg %p96
        $region68: #{gaegru_forward.3} parent=65 // pred_check_branch
          %225 = sbr.rel (%p223) target = $region70
        $region69: #{gaegru_forward.3} parent=65 // pred_region
          _
        $region70: #{gaegru_forward.3} parent=65 // pred_fallthru
          _
        %s226 = smul.u32 16, %s18
        %p227 = scmp.lt.s32.totalorder %s226, 31
        %s228 = scalar_select %p227, %s226, 31
        %s229 = smul.addr %s228, 4
        %s230 = scalar_lea.vmem %s0, %s229
        %p231 = pneg %p47
        %p232 = pneg %p44
        %p233 = pneg %p68
        %p234 = pneg %p65
        %s235 = sand.u32 %s83, 1
        %s236 = sand.u32 %s83, 1
        %s237 = smul.addr %s236, 32
        %s238 = scalar_lea.vmem [#allocation2], %s237
        %p239 = pneg %p96
        %p240 = pneg %p93
        %p241 = pneg %p124
        %p242 = pneg %p121
        %s243 = sand.u32 %s111, 1
        %s244 = sand.u32 %s111, 1
        %s245 = smul.addr %s244, 64
        %s246 = scalar_lea.vmem [#allocation3], %s245
        %s247 = smul.u32 16, %s18
        %p248 = scmp.lt.s32.totalorder %s247, 31
        %s249 = scalar_select %p248, %s247, 31
        %s250 = smul.addr %s249, 4
        %s251 = scalar_lea.vmem %s0, %s250
        %s252 = smul.u32 16, %s18
        %s253 = smul.u32 4, %s18
        %s254 = smul.u32 16, %s18
        %s256 = smul.u32 %s19, 128
        %s257 = sshra.s32 %s256, 3
        %s258 = sand.u32 %s256, 7
        %s259 = smul.addr %s257, 4
        %s260 = scalar_lea.vmem %s1, %s259
        %v261 = vld [vmem:[%s260] sm:$0xf]
        %v262 = vld [vmem:[%s260 + $0x4] sm:$0xf]
        %v263 = vld [vmem:[%s260 + $0x8] sm:$0xf]
        %v264 = vld [vmem:[%s260 + $0xc] sm:$0xf]
        %v265 = vld [vmem:[%s260 + $0x10] sm:$0xf]
        %v266 = vld [vmem:[%s260 + $0x14] sm:$0xf]
        %v267 = vld [vmem:[%s260 + $0x18] sm:$0xf]
        %v268 = vld [vmem:[%s260 + $0x1c] sm:$0xf]
        %v269 = vld [vmem:[%s260 + $0x20] sm:$0xf]
        %v270 = vld [vmem:[%s260 + $0x24] sm:$0xf]
        %v271 = vld [vmem:[%s260 + $0x28] sm:$0xf]
        %v272 = vld [vmem:[%s260 + $0x2c] sm:$0xf]
        %v273 = vld [vmem:[%s260 + $0x30] sm:$0xf]
        %v274 = vld [vmem:[%s260 + $0x34] sm:$0xf]
        %v275 = vld [vmem:[%s260 + $0x38] sm:$0xf]
        %v276 = vld [vmem:[%s260 + $0x3c] sm:$0xf]
        %v277 = vld [vmem:[%s251] sm:$0xf]
        %v278 = vld [vmem:[%s251 + $0x4] sm:$0xf]
        %v279 = vld [vmem:[%s251 + $0x8] sm:$0xf]
        %v280 = vld [vmem:[%s251 + $0xc] sm:$0xf]
        %v281 = vld [vmem:[%s251 + $0x10] sm:$0xf]
        %v282 = vld [vmem:[%s251 + $0x14] sm:$0xf]
        %v283 = vld [vmem:[%s251 + $0x18] sm:$0xf]
        %v284 = vld [vmem:[%s251 + $0x1c] sm:$0xf]
        %v285 = vld [vmem:[%s251 + $0x20] sm:$0xf]
        %v286 = vld [vmem:[%s251 + $0x24] sm:$0xf]
        %v287 = vld [vmem:[%s251 + $0x28] sm:$0xf]
        %v288 = vld [vmem:[%s251 + $0x2c] sm:$0xf]
        %v289 = vld [vmem:[%s251 + $0x30] sm:$0xf]
        %v290 = vld [vmem:[%s251 + $0x34] sm:$0xf]
        %v291 = vld [vmem:[%s251 + $0x38] sm:$0xf]
        %v292 = vld [vmem:[%s251 + $0x3c] sm:$0xf]
        %v309 = vunpack.c.l.b16 %v277
        %v310 = vunpack.c.l.b16 %v278
        %v311 = vunpack.c.l.b16 %v279
        %v312 = vunpack.c.l.b16 %v280
        %v313 = vunpack.c.l.b16 %v281
        %v314 = vunpack.c.l.b16 %v282
        %v315 = vunpack.c.l.b16 %v283
        %v316 = vunpack.c.l.b16 %v284
        %v317 = vunpack.c.l.b16 %v285
        %v318 = vunpack.c.l.b16 %v286
        %v319 = vunpack.c.l.b16 %v287
        %v320 = vunpack.c.l.b16 %v288
        %v321 = vunpack.c.l.b16 %v289
        %v322 = vunpack.c.l.b16 %v290
        %v323 = vunpack.c.l.b16 %v291
        %v324 = vunpack.c.l.b16 %v292
        %v325 = vpack.c.b16 %v310, %v309
        %v326 = vpack.c.b16 %v312, %v311
        %v327 = vpack.c.b16 %v314, %v313
        %v328 = vpack.c.b16 %v316, %v315
        %v329 = vpack.c.b16 %v318, %v317
        %v330 = vpack.c.b16 %v320, %v319
        %v331 = vpack.c.b16 %v322, %v321
        %v332 = vpack.c.b16 %v324, %v323
        %v357 = vunpack.c.l.b16 %v261
        %v358 = vunpack.c.l.b16 %v262
        %v359 = vunpack.c.l.b16 %v263
        %v360 = vunpack.c.l.b16 %v264
        %v361 = vunpack.c.l.b16 %v265
        %v362 = vunpack.c.l.b16 %v266
        %v363 = vunpack.c.l.b16 %v267
        %v364 = vunpack.c.l.b16 %v268
        %v365 = vunpack.c.l.b16 %v269
        %v366 = vunpack.c.l.b16 %v270
        %v367 = vunpack.c.l.b16 %v271
        %v368 = vunpack.c.l.b16 %v272
        %v369 = vunpack.c.l.b16 %v273
        %v370 = vunpack.c.l.b16 %v274
        %v371 = vunpack.c.l.b16 %v275
        %v372 = vunpack.c.l.b16 %v276
        %v373 = vpack.c.b16 %v358, %v357
        %v374 = vpack.c.b16 %v360, %v359
        %v375 = vpack.c.b16 %v362, %v361
        %v376 = vpack.c.b16 %v364, %v363
        %v377 = vpack.c.b16 %v366, %v365
        %v378 = vpack.c.b16 %v368, %v367
        %v379 = vpack.c.b16 %v370, %v369
        %v380 = vpack.c.b16 %v372, %v371
        %389 = vmatprep.subr.bf16.mxu0 0
        %390 = vmatpush1.bf16.xpose.msra.mxu0 %v380
        %391 = vmatprep.subr.bf16.mxu0 0
        %392 = vmatpush1.bf16.xpose.msra.mxu0 %v379
        %393 = vmatprep.subr.bf16.mxu0 0
        %394 = vmatpush1.bf16.xpose.msra.mxu0 %v378
        %395 = vmatprep.subr.bf16.mxu0 0
        %396 = vmatpush1.bf16.xpose.msra.mxu0 %v377
        %397 = vmatprep.subr.bf16.mxu0 0
        %398 = vmatpush1.bf16.xpose.msra.mxu0 %v376
        %399 = vmatprep.subr.bf16.mxu0 0
        %400 = vmatpush1.bf16.xpose.msra.mxu0 %v375
        %401 = vmatprep.subr.bf16.mxu0 0
        %402 = vmatpush1.bf16.xpose.msra.mxu0 %v374
        %403 = vmatprep.subr.bf16.mxu0 0
        %404 = vmatpush1.bf16.xpose.msra.mxu0 %v373
        %405 = vmatprep.subr.bf16.mxu0 0
        %406 = vmatpush2.bf16.xpose.msra.mxu0 0
        %407 = vmatprep.subr.bf16.mxu0 0
        %408 = vmatpush2.bf16.xpose.msra.mxu0 0
        %409 = vmatprep.subr.bf16.mxu0 0
        %410 = vmatpush2.bf16.xpose.msra.mxu0 0
        %411 = vmatprep.subr.bf16.mxu0 0
        %412 = vmatpush2.bf16.xpose.msra.mxu0 0
        %413 = vmatprep.subr.bf16.mxu0 0
        %414 = vmatpush2.bf16.xpose.msra.mxu0 0
        %415 = vmatprep.subr.bf16.mxu0 0
        %416 = vmatpush2.bf16.xpose.msra.mxu0 0
        %417 = vmatprep.subr.bf16.mxu0 0
        %418 = vmatpush2.bf16.xpose.msra.mxu0 0
        %419 = vmatprep.subr.bf16.mxu0 0
        %420 = vmatpush2.bf16.xpose.msra.mxu0 0
        %421 = vmatprep.mubr.bf16.mxu0 0
        %422 = vmatmul.mubr.bf16.gmra.mxu0 %v325
        %v423 = vpop.f32.mrf.mxu0
        %v424 = vadd.f32 0.0, %v423
        %v425 = vpop.f32.mrf.mxu0
        %v426 = vpop.f32.mrf.mxu0
        %v427 = vadd.f32 0.0, %v426
        %v428 = vpop.f32.mrf.mxu0
        %429 = vmatprep.mubr.bf16.mxu0 0
        %430 = vmatmul.mubr.bf16.gmra.mxu0 %v326
        %v431 = vpop.f32.mrf.mxu0
        %v432 = vadd.f32 0.0, %v431
        %v433 = vpop.f32.mrf.mxu0
        %v434 = vpop.f32.mrf.mxu0
        %v435 = vadd.f32 0.0, %v434
        %v436 = vpop.f32.mrf.mxu0
        %437 = vmatprep.mubr.bf16.mxu0 0
        %438 = vmatmul.mubr.bf16.gmra.mxu0 %v327
        %v439 = vpop.f32.mrf.mxu0
        %v440 = vadd.f32 0.0, %v439
        %v441 = vpop.f32.mrf.mxu0
        %v442 = vpop.f32.mrf.mxu0
        %v443 = vadd.f32 0.0, %v442
        %v444 = vpop.f32.mrf.mxu0
        %445 = vmatprep.mubr.bf16.mxu0 0
        %446 = vmatmul.mubr.bf16.gmra.mxu0 %v328
        %v447 = vpop.f32.mrf.mxu0
        %v448 = vadd.f32 0.0, %v447
        %v449 = vpop.f32.mrf.mxu0
        %v450 = vpop.f32.mrf.mxu0
        %v451 = vadd.f32 0.0, %v450
        %v452 = vpop.f32.mrf.mxu0
        %453 = vmatprep.mubr.bf16.mxu0 0
        %454 = vmatmul.mubr.bf16.gmra.mxu0 %v329
        %v455 = vpop.f32.mrf.mxu0
        %v456 = vadd.f32 0.0, %v455
        %v457 = vpop.f32.mrf.mxu0
        %v458 = vpop.f32.mrf.mxu0
        %v459 = vadd.f32 0.0, %v458
        %v460 = vpop.f32.mrf.mxu0
        %461 = vmatprep.mubr.bf16.mxu0 0
        %462 = vmatmul.mubr.bf16.gmra.mxu0 %v330
        %v463 = vpop.f32.mrf.mxu0
        %v464 = vadd.f32 0.0, %v463
        %v465 = vpop.f32.mrf.mxu0
        %v466 = vpop.f32.mrf.mxu0
        %v467 = vadd.f32 0.0, %v466
        %v468 = vpop.f32.mrf.mxu0
        %469 = vmatprep.mubr.bf16.mxu0 0
        %470 = vmatmul.mubr.bf16.gmra.mxu0 %v331
        %v471 = vpop.f32.mrf.mxu0
        %v472 = vadd.f32 0.0, %v471
        %v473 = vpop.f32.mrf.mxu0
        %v474 = vpop.f32.mrf.mxu0
        %v475 = vadd.f32 0.0, %v474
        %v476 = vpop.f32.mrf.mxu0
        %477 = vmatprep.mubr.bf16.mxu0 0
        %478 = vmatmul.mubr.bf16.gmra.mxu0 %v332
        %v479 = vpop.f32.mrf.mxu0
        %v480 = vadd.f32 0.0, %v479
        %v481 = vpop.f32.mrf.mxu0
        %v482 = vpop.f32.mrf.mxu0
        %v483 = vadd.f32 0.0, %v482
        %v484 = vpop.f32.mrf.mxu0
        %485 = vdwg.mxu0
        %v486 = vxor.u32 %v424, 2147483648
        %v487 = vxor.u32 %v427, 2147483648
        %v488 = vxor.u32 %v432, 2147483648
        %v489 = vxor.u32 %v435, 2147483648
        %v490 = vxor.u32 %v440, 2147483648
        %v491 = vxor.u32 %v443, 2147483648
        %v492 = vxor.u32 %v448, 2147483648
        %v493 = vxor.u32 %v451, 2147483648
        %v494 = vxor.u32 %v456, 2147483648
        %v495 = vxor.u32 %v459, 2147483648
        %v496 = vxor.u32 %v464, 2147483648
        %v497 = vxor.u32 %v467, 2147483648
        %v498 = vxor.u32 %v472, 2147483648
        %v499 = vxor.u32 %v475, 2147483648
        %v500 = vxor.u32 %v480, 2147483648
        %v501 = vxor.u32 %v483, 2147483648
        %v502 = vmul.f32 %v486, 1.442695
        %v503 = vpow.pop %v502
        %v504 = vmul.f32 %v487, 1.442695
        %v505 = vpow.pop %v504
        %v506 = vmul.f32 %v488, 1.442695
        %v507 = vpow.pop %v506
        %v508 = vmul.f32 %v489, 1.442695
        %v509 = vpow.pop %v508
        %v510 = vmul.f32 %v490, 1.442695
        %v511 = vpow.pop %v510
        %v512 = vmul.f32 %v491, 1.442695
        %v513 = vpow.pop %v512
        %v514 = vmul.f32 %v492, 1.442695
        %v515 = vpow.pop %v514
        %v516 = vmul.f32 %v493, 1.442695
        %v517 = vpow.pop %v516
        %v518 = vmul.f32 %v494, 1.442695
        %v519 = vpow.pop %v518
        %v520 = vmul.f32 %v495, 1.442695
        %v521 = vpow.pop %v520
        %v522 = vmul.f32 %v496, 1.442695
        %v523 = vpow.pop %v522
        %v524 = vmul.f32 %v497, 1.442695
        %v525 = vpow.pop %v524
        %v526 = vmul.f32 %v498, 1.442695
        %v527 = vpow.pop %v526
        %v528 = vmul.f32 %v499, 1.442695
        %v529 = vpow.pop %v528
        %v530 = vmul.f32 %v500, 1.442695
        %v531 = vpow.pop %v530
        %v532 = vmul.f32 %v501, 1.442695
        %v533 = vpow.pop %v532
        %v534 = vadd.f32 %v503, 1.0
        %v535 = vadd.f32 %v505, 1.0
        %v536 = vadd.f32 %v507, 1.0
        %v537 = vadd.f32 %v509, 1.0
        %v538 = vadd.f32 %v511, 1.0
        %v539 = vadd.f32 %v513, 1.0
        %v540 = vadd.f32 %v515, 1.0
        %v541 = vadd.f32 %v517, 1.0
        %v542 = vadd.f32 %v519, 1.0
        %v543 = vadd.f32 %v521, 1.0
        %v544 = vadd.f32 %v523, 1.0
        %v545 = vadd.f32 %v525, 1.0
        %v546 = vadd.f32 %v527, 1.0
        %v547 = vadd.f32 %v529, 1.0
        %v548 = vadd.f32 %v531, 1.0
        %v549 = vadd.f32 %v533, 1.0
        %v550 = vrcp.pop %v534
        %v551 = vmul.f32 1.0, %v550
        %v552 = vrcp.pop %v535
        %v553 = vmul.f32 1.0, %v552
        %v554 = vrcp.pop %v536
        %v555 = vmul.f32 1.0, %v554
        %v556 = vrcp.pop %v537
        %v557 = vmul.f32 1.0, %v556
        %v558 = vrcp.pop %v538
        %v559 = vmul.f32 1.0, %v558
        %v560 = vrcp.pop %v539
        %v561 = vmul.f32 1.0, %v560
        %v562 = vrcp.pop %v540
        %v563 = vmul.f32 1.0, %v562
        %v564 = vrcp.pop %v541
        %v565 = vmul.f32 1.0, %v564
        %v566 = vrcp.pop %v542
        %v567 = vmul.f32 1.0, %v566
        %v568 = vrcp.pop %v543
        %v569 = vmul.f32 1.0, %v568
        %v570 = vrcp.pop %v544
        %v571 = vmul.f32 1.0, %v570
        %v572 = vrcp.pop %v545
        %v573 = vmul.f32 1.0, %v572
        %v574 = vrcp.pop %v546
        %v575 = vmul.f32 1.0, %v574
        %v576 = vrcp.pop %v547
        %v577 = vmul.f32 1.0, %v576
        %v578 = vrcp.pop %v548
        %v579 = vmul.f32 1.0, %v578
        %v580 = vrcp.pop %v549
        %v581 = vmul.f32 1.0, %v580
        %v582 = vld [vmem:[%s222] sm:$0xff]
        %v583 = vld [vmem:[%s222 + $0x8] sm:$0xff]
        %v584 = vld [vmem:[%s222 + $0x10] sm:$0xff]
        %v585 = vld [vmem:[%s222 + $0x18] sm:$0xff]
        %v586 = vunpack.c.0.s8 %v582
        %v587 = vunpack.c.1.s8 %v582
        %v588 = vunpack.c.2.s8 %v582
        %v589 = vunpack.c.3.s8 %v582
        %v590 = vunpack.c.0.s8 %v583
        %v591 = vunpack.c.1.s8 %v583
        %v592 = vunpack.c.2.s8 %v583
        %v593 = vunpack.c.3.s8 %v583
        %v594 = vunpack.c.0.s8 %v584
        %v595 = vunpack.c.1.s8 %v584
        %v596 = vunpack.c.2.s8 %v584
        %v597 = vunpack.c.3.s8 %v584
        %v598 = vunpack.c.0.s8 %v585
        %v599 = vunpack.c.1.s8 %v585
        %v600 = vunpack.c.2.s8 %v585
        %v601 = vunpack.c.3.s8 %v585
        %v602 = vcvt.s32.f32 %v586
        %v603 = vcvt.s32.f32 %v587
        %v604 = vcvt.s32.f32 %v588
        %v605 = vcvt.s32.f32 %v589
        %v606 = vcvt.s32.f32 %v590
        %v607 = vcvt.s32.f32 %v591
        %v608 = vcvt.s32.f32 %v592
        %v609 = vcvt.s32.f32 %v593
        %v610 = vcvt.s32.f32 %v594
        %v611 = vcvt.s32.f32 %v595
        %v612 = vcvt.s32.f32 %v596
        %v613 = vcvt.s32.f32 %v597
        %v614 = vcvt.s32.f32 %v598
        %v615 = vcvt.s32.f32 %v599
        %v616 = vcvt.s32.f32 %v600
        %v617 = vcvt.s32.f32 %v601
        %v618 = vmul.f32 %v551, %v602
        %v619 = vmul.f32 %v553, %v603
        %v620 = vmul.f32 %v555, %v604
        %v621 = vmul.f32 %v557, %v605
        %v622 = vmul.f32 %v559, %v606
        %v623 = vmul.f32 %v561, %v607
        %v624 = vmul.f32 %v563, %v608
        %v625 = vmul.f32 %v565, %v609
        %v626 = vmul.f32 %v567, %v610
        %v627 = vmul.f32 %v569, %v611
        %v628 = vmul.f32 %v571, %v612
        %v629 = vmul.f32 %v573, %v613
        %v630 = vmul.f32 %v575, %v614
        %v631 = vmul.f32 %v577, %v615
        %v632 = vmul.f32 %v579, %v616
        %v633 = vmul.f32 %v581, %v617
        %v634 = vpack.c.bf16 %v619, %v618
        %v635 = vpack.c.bf16 %v621, %v620
        %v636 = vpack.c.bf16 %v623, %v622
        %v637 = vpack.c.bf16 %v625, %v624
        %v638 = vpack.c.bf16 %v627, %v626
        %v639 = vpack.c.bf16 %v629, %v628
        %v640 = vpack.c.bf16 %v631, %v630
        %v641 = vpack.c.bf16 %v633, %v632
        %v650 = vunpack.c.l.b16 %v634
        %v651 = vunpack.c.h.b16 %v634
        %v652 = vunpack.c.l.b16 %v635
        %v653 = vunpack.c.h.b16 %v635
        %v654 = vunpack.c.l.b16 %v636
        %v655 = vunpack.c.h.b16 %v636
        %v656 = vunpack.c.l.b16 %v637
        %v657 = vunpack.c.h.b16 %v637
        %v658 = vunpack.c.l.b16 %v638
        %v659 = vunpack.c.h.b16 %v638
        %v660 = vunpack.c.l.b16 %v639
        %v661 = vunpack.c.h.b16 %v639
        %v662 = vunpack.c.l.b16 %v640
        %v663 = vunpack.c.h.b16 %v640
        %v664 = vunpack.c.l.b16 %v641
        %v665 = vunpack.c.h.b16 %v641
        %v666 = vpack.c.b16 %v650, %v650
        %v667 = vpack.c.b16 %v651, %v651
        %v668 = vpack.c.b16 %v652, %v652
        %v669 = vpack.c.b16 %v653, %v653
        %v670 = vpack.c.b16 %v654, %v654
        %v671 = vpack.c.b16 %v655, %v655
        %v672 = vpack.c.b16 %v656, %v656
        %v673 = vpack.c.b16 %v657, %v657
        %v674 = vpack.c.b16 %v658, %v658
        %v675 = vpack.c.b16 %v659, %v659
        %v676 = vpack.c.b16 %v660, %v660
        %v677 = vpack.c.b16 %v661, %v661
        %v678 = vpack.c.b16 %v662, %v662
        %v679 = vpack.c.b16 %v663, %v663
        %v680 = vpack.c.b16 %v664, %v664
        %v681 = vpack.c.b16 %v665, %v665
        %698 = vst [vmem:[%s246] sm:$0xf] %v666
        %699 = vst [vmem:[%s246 + $0x4] sm:$0xf] %v667
        %700 = vst [vmem:[%s246 + $0x8] sm:$0xf] %v668
        %701 = vst [vmem:[%s246 + $0xc] sm:$0xf] %v669
        %702 = vst [vmem:[%s246 + $0x10] sm:$0xf] %v670
        %703 = vst [vmem:[%s246 + $0x14] sm:$0xf] %v671
        %704 = vst [vmem:[%s246 + $0x18] sm:$0xf] %v672
        %705 = vst [vmem:[%s246 + $0x1c] sm:$0xf] %v673
        %706 = vst [vmem:[%s246 + $0x20] sm:$0xf] %v674
        %707 = vst [vmem:[%s246 + $0x24] sm:$0xf] %v675
        %708 = vst [vmem:[%s246 + $0x28] sm:$0xf] %v676
        %709 = vst [vmem:[%s246 + $0x2c] sm:$0xf] %v677
        %710 = vst [vmem:[%s246 + $0x30] sm:$0xf] %v678
        %711 = vst [vmem:[%s246 + $0x34] sm:$0xf] %v679
        %712 = vst [vmem:[%s246 + $0x38] sm:$0xf] %v680
        %713 = vst [vmem:[%s246 + $0x3c] sm:$0xf] %v681
        %s714 = sand.u32 %s111, 1
        %s715 = sand.u32 %s111, 1
        %s716 = smul.addr %s715, 64
        %s717 = scalar_lea.vmem [#allocation3], %s716
        // Predicated region
        $region71: #{gaegru_forward.3} parent=65 // pred_check
          %p718 = pneg %p121
        $region72: #{gaegru_forward.3} parent=65 // pred_check_branch
          %720 = sbr.rel (%p718) target = $region74
        $region73: #{gaegru_forward.3} parent=65 // pred_region
          %s721 = smul.u32 16, %s18
          %s722 = smul.addr %s721, 2
          %s723 = sadd.s32 %s19, %s722
          %s724 = smul.addr %s723, 4
          %s725 = scalar_lea.vmem %s3, %s724
          // Predicated region
          $region75: #{gaegru_forward.3} parent=73 // pred_check
            _
          $region76: #{gaegru_forward.3} parent=73 // pred_check_branch
            %727 = sbr.rel (0) target = $region78
          $region77: #{gaegru_forward.3} parent=73 // pred_region
            // Predicated region
            $region79: #{gaegru_forward.3} parent=77 // pred_check
              _
            $region80: #{gaegru_forward.3} parent=77 // pred_check_branch
              %729 = sbr.rel target = $region82
            $region81: #{gaegru_forward.3} parent=77 // pred_region
              // Predicated region
              $region94: #{gaegru_forward.3} parent=81 // pred_check
                _
              $region95: #{gaegru_forward.3} parent=81 // pred_check_branch
                %775 = sbr.rel (0) target = $region97
              $region96: #{gaegru_forward.3} parent=81 // pred_region
                loop: start=0, step=1, limit=1
                $region98: #{gaegru_forward.3} parent=96 // loop_pre_header
                  _
                $region99: #{gaegru_forward.3} parent=96 // loop_header
                  %s777 = sphi 0, %s781
                  %p778 = scmp.ge.s32.totalorder %s777, 1
                  %s782 = sphi %s717, %s717
                  %s783 = sphi %s725, %s725
                $region100: #{gaegru_forward.3} parent=96 // loop_header_branch
                  %780 = sbr.rel (%p778) target = $region104
                $region101: #{gaegru_forward.3} parent=96 // loop_body
                  _
                $region102: #{gaegru_forward.3} parent=96 // loop_footer
                  %s781 = sadd.s32 1, %s777
                $region103: #{gaegru_forward.3} parent=96 // loop_footer_branch
                  %776 = sbr.rel target = $region99
                $region104: #{gaegru_forward.3} parent=96 // loop_exit
                  _
                %s785 = ssub.s32 16, 1
                loop: start=0, step=1, limit=1
                $region105: #{gaegru_forward.3} parent=96 // loop_pre_header
                  _
                $region106: #{gaegru_forward.3} parent=96 // loop_header
                  %s787 = sphi 0, %s791
                  %p788 = scmp.ge.s32.totalorder %s787, 1
                  %s792 = sphi %s717, %s717
                  %s793 = sphi %s725, %s725
                $region107: #{gaegru_forward.3} parent=96 // loop_header_branch
                  %790 = sbr.rel (%p788) target = $region111
                $region108: #{gaegru_forward.3} parent=96 // loop_body
                  %v794 = vld [vmem:[%s792] sm:%s785]
                  %795 = vst [vmem:[%s793] sm:%s785] %v794
                  %v796 = vld [vmem:[%s792 + $0x4] sm:%s785]
                  %797 = vst [vmem:[%s793 + $0x8] sm:%s785] %v796
                  %v798 = vld [vmem:[%s792 + $0x8] sm:%s785]
                  %799 = vst [vmem:[%s793 + $0x10] sm:%s785] %v798
                  %v800 = vld [vmem:[%s792 + $0xc] sm:%s785]
                  %801 = vst [vmem:[%s793 + $0x18] sm:%s785] %v800
                  %v802 = vld [vmem:[%s792 + $0x10] sm:%s785]
                  %803 = vst [vmem:[%s793 + $0x20] sm:%s785] %v802
                  %v804 = vld [vmem:[%s792 + $0x14] sm:%s785]
                  %805 = vst [vmem:[%s793 + $0x28] sm:%s785] %v804
                  %v806 = vld [vmem:[%s792 + $0x18] sm:%s785]
                  %807 = vst [vmem:[%s793 + $0x30] sm:%s785] %v806
                  %v808 = vld [vmem:[%s792 + $0x1c] sm:%s785]
                  %809 = vst [vmem:[%s793 + $0x38] sm:%s785] %v808
                  %v810 = vld [vmem:[%s792 + $0x20] sm:%s785]
                  %811 = vst [vmem:[%s793 + $0x40] sm:%s785] %v810
                  %v812 = vld [vmem:[%s792 + $0x24] sm:%s785]
                  %813 = vst [vmem:[%s793 + $0x48] sm:%s785] %v812
                  %v814 = vld [vmem:[%s792 + $0x28] sm:%s785]
                  %815 = vst [vmem:[%s793 + $0x50] sm:%s785] %v814
                  %v816 = vld [vmem:[%s792 + $0x2c] sm:%s785]
                  %817 = vst [vmem:[%s793 + $0x58] sm:%s785] %v816
                  %v818 = vld [vmem:[%s792 + $0x30] sm:%s785]
                  %819 = vst [vmem:[%s793 + $0x60] sm:%s785] %v818
                  %v820 = vld [vmem:[%s792 + $0x34] sm:%s785]
                  %821 = vst [vmem:[%s793 + $0x68] sm:%s785] %v820
                  %v822 = vld [vmem:[%s792 + $0x38] sm:%s785]
                  %823 = vst [vmem:[%s793 + $0x70] sm:%s785] %v822
                  %v824 = vld [vmem:[%s792 + $0x3c] sm:%s785]
                  %825 = vst [vmem:[%s793 + $0x78] sm:%s785] %v824
                $region109: #{gaegru_forward.3} parent=96 // loop_footer
                  %s791 = sadd.s32 1, %s787
                $region110: #{gaegru_forward.3} parent=96 // loop_footer_branch
                  %786 = sbr.rel target = $region106
                $region111: #{gaegru_forward.3} parent=96 // loop_exit
                  _
              $region97: #{gaegru_forward.3} parent=81 // pred_fallthru
                _
            $region82: #{gaegru_forward.3} parent=77 // pred_fallthru
              _
            // Predicated region
            $region83: #{gaegru_forward.3} parent=77 // pred_check
              _
            $region84: #{gaegru_forward.3} parent=77 // pred_check_branch
              %731 = sbr.rel (0) target = $region86
            $region85: #{gaegru_forward.3} parent=77 // pred_region
              %s733 = ssub.s32 16, 1
              loop: start=0, step=1, limit=1
              $region87: #{gaegru_forward.3} parent=85 // loop_pre_header
                _
              $region88: #{gaegru_forward.3} parent=85 // loop_header
                %s735 = sphi 0, %s739
                %p736 = scmp.ge.s32.totalorder %s735, 1
                %s740 = sphi %s717, %s717
                %s741 = sphi %s725, %s725
              $region89: #{gaegru_forward.3} parent=85 // loop_header_branch
                %738 = sbr.rel (%p736) target = $region93
              $region90: #{gaegru_forward.3} parent=85 // loop_body
                %v742 = vld [vmem:[%s740] sm:%s733]
                %743 = vst [vmem:[%s741] sm:%s733] %v742
                %v744 = vld [vmem:[%s740 + $0x4] sm:%s733]
                %745 = vst [vmem:[%s741 + $0x8] sm:%s733] %v744
                %v746 = vld [vmem:[%s740 + $0x8] sm:%s733]
                %747 = vst [vmem:[%s741 + $0x10] sm:%s733] %v746
                %v748 = vld [vmem:[%s740 + $0xc] sm:%s733]
                %749 = vst [vmem:[%s741 + $0x18] sm:%s733] %v748
                %v750 = vld [vmem:[%s740 + $0x10] sm:%s733]
                %751 = vst [vmem:[%s741 + $0x20] sm:%s733] %v750
                %v752 = vld [vmem:[%s740 + $0x14] sm:%s733]
                %753 = vst [vmem:[%s741 + $0x28] sm:%s733] %v752
                %v754 = vld [vmem:[%s740 + $0x18] sm:%s733]
                %755 = vst [vmem:[%s741 + $0x30] sm:%s733] %v754
                %v756 = vld [vmem:[%s740 + $0x1c] sm:%s733]
                %757 = vst [vmem:[%s741 + $0x38] sm:%s733] %v756
                %v758 = vld [vmem:[%s740 + $0x20] sm:%s733]
                %759 = vst [vmem:[%s741 + $0x40] sm:%s733] %v758
                %v760 = vld [vmem:[%s740 + $0x24] sm:%s733]
                %761 = vst [vmem:[%s741 + $0x48] sm:%s733] %v760
                %v762 = vld [vmem:[%s740 + $0x28] sm:%s733]
                %763 = vst [vmem:[%s741 + $0x50] sm:%s733] %v762
                %v764 = vld [vmem:[%s740 + $0x2c] sm:%s733]
                %765 = vst [vmem:[%s741 + $0x58] sm:%s733] %v764
                %v766 = vld [vmem:[%s740 + $0x30] sm:%s733]
                %767 = vst [vmem:[%s741 + $0x60] sm:%s733] %v766
                %v768 = vld [vmem:[%s740 + $0x34] sm:%s733]
                %769 = vst [vmem:[%s741 + $0x68] sm:%s733] %v768
                %v770 = vld [vmem:[%s740 + $0x38] sm:%s733]
                %771 = vst [vmem:[%s741 + $0x70] sm:%s733] %v770
                %v772 = vld [vmem:[%s740 + $0x3c] sm:%s733]
                %773 = vst [vmem:[%s741 + $0x78] sm:%s733] %v772
              $region91: #{gaegru_forward.3} parent=85 // loop_footer
                %s739 = sadd.s32 1, %s735
              $region92: #{gaegru_forward.3} parent=85 // loop_footer_branch
                %734 = sbr.rel target = $region88
              $region93: #{gaegru_forward.3} parent=85 // loop_exit
                _
            $region86: #{gaegru_forward.3} parent=77 // pred_fallthru
              _
          $region78: #{gaegru_forward.3} parent=73 // pred_fallthru
            _
          %826 = vnop
        $region74: #{gaegru_forward.3} parent=65 // pred_fallthru
          _
      $region66: #{gaegru_forward.3} parent=5 // pred_fallthru
        _
      %p827 = scmp.le.s32.totalorder 2, %s9
      // Predicated region
      $region112: #{gaegru_forward.3} parent=5 // pred_check
        %p828 = pneg %p827
      $region113: #{gaegru_forward.3} parent=5 // pred_check_branch
        %830 = sbr.rel (%p828) target = $region115
      $region114: #{gaegru_forward.3} parent=5 // pred_region
        %s831 = ssub.s32 %s9, 2
        // Predicated region
        $region116: #{gaegru_forward.3} parent=114 // pred_check
          %p832 = pneg %p127
        $region117: #{gaegru_forward.3} parent=114 // pred_check_branch
          %834 = sbr.rel (%p832) target = $region119
        $region118: #{gaegru_forward.3} parent=114 // pred_region
          %s835 = sand.u32 %s112, 1
          %s836 = sand.u32 %s112, 1
          %s837 = smul.addr %s836, 64
          %s838 = scalar_lea.vmem [#allocation3], %s837
        $region119: #{gaegru_forward.3} parent=114 // pred_fallthru
          _
      $region115: #{gaegru_forward.3} parent=5 // pred_fallthru
        _
    $region6: #{gaegru_forward.3} parent=1 // loop_footer
      %s13 = sadd.s32 1, %s9
    $region7: #{gaegru_forward.3} parent=1 // loop_footer_branch
      %8 = sbr.rel target = $region3
    $region8: #{gaegru_forward.3} parent=1 // loop_exit
      _

// kernel: gaegru_forward.2
$region0: #{gaegru_forward.2}
  #allocation0 [shape = 'u32[]', space=smem, size = 0x4, offset = 0x4, fixed_abs, tag = 'smem constant byte address 0x4 - core index']
  #allocation1 [shape = 'u32[144,128]{1,0:T(1,128)}', space=vmem, size = 0x12000, scoped, tag = 'internal scratch']
  #allocation2 [shape = 'f32[128,128]{1,0:T(8,128)}', space=vmem, size = 0x10000, scoped, tag = 'scratch operand']
  #allocation3 [shape = 'bf16[128,256]{1,0:T(8,128)(2,1)}', space=vmem, size = 0x10000, scoped, tag = 'scratch operand']
  %s0 = inlined_call_operand.vmem [shape: bf16[256,256], index: 0, kind: input, shape index: {}]
  %s1 = inlined_call_operand.vmem [shape: bf16[256,128], index: 1, kind: input, shape index: {}]
  %s2 = inlined_call_operand.vmem [shape: f32[256,1], index: 2, kind: input, shape index: {}]
  %s3 = inlined_call_operand.vmem [shape: f32[256,128], index: 3, kind: input, shape index: {}]
  %s4 = inlined_call_operand.vmem [shape: f32[1,128], index: 4, kind: input, shape index: {}]
  %s5 = inlined_call_operand.vmem [shape: bf16[256,256], index: 5, kind: input, shape index: {}]
  %s6 = inlined_call_operand.vmem [shape: f32[1,256], index: 6, kind: input, shape index: {}]
  %s7 = inlined_call_operand.vmem [shape: bf16[128,128], index: 7, kind: input, shape index: {}]
  %s8 = inlined_call_operand.vmem [shape: f32[1,128], index: 8, kind: input, shape index: {}]
  %s9 = inlined_call_operand.vmem [shape: bf16[128,128], index: 9, kind: input, shape index: {}]
  %s10 = inlined_call_operand.vmem [shape: f32[1,128], index: 10, kind: input, shape index: {}]
  %s11 = inlined_call_operand.vmem [shape: f32[256,128], index: 11, kind: output, shape index: {0}]
  %s12 = inlined_call_operand.vmem [shape: bf16[256,128], index: 12, kind: output, shape index: {1}]
  %13 = xla_tuple %s11, %s12
  %s14 = sld [smem:[#allocation0]]
  $region134: #{gaegru_forward.2} parent=0
    _
  %s16 = ssub.s32 1, %s14
  %s17 = scalar_select 0, %s16, %s14
  $region1: #{gaegru_forward.2} parent=0
    #allocation4 [shape = 'u8[65536]{0}', space=vmem, size = 0x10000, scoped, tag = 'input window, operand 0']
    loop: start=0, step=1, limit=6
    $region2: #{gaegru_forward.2} parent=1 // loop_pre_header
      _
    $region3: #{gaegru_forward.2} parent=1 // loop_header
      %s19 = sphi 0, %s23
      %p20 = scmp.ge.s32.totalorder %s19, 6
      %s26 = sphi 0, %s38
      %s27 = sphi 0, %s34
      %s28 = sphi 0, %s26
      %s29 = sphi 0, %s27
      %s30 = sphi 0, %s28
      %s31 = sphi 0, %s29
      %s43 = sphi 0, %s45
      %s46 = sphi 0, %s43
      %s47 = sphi 0, %s46
      %s63 = sphi 0, %s47
      %s69 = sphi 0, %s71
      %s72 = sphi 0, %s69
      %s73 = sphi 0, %s72
      %s89 = sphi 0, %s73
      %s95 = sphi 0, %s97
      %s98 = sphi 0, %s95
      %s99 = sphi 0, %s98
      %s115 = sphi 0, %s99
      %s121 = sphi 0, %s123
      %s124 = sphi 0, %s121
      %s125 = sphi 0, %s124
      %s141 = sphi 0, %s125
      %s145 = sphi 0, %s145
      %s147 = sphi 0, %s145
      %s148 = sphi 0, %s147
      %s162 = sphi 0, %s148
      %s166 = sphi 0, %s166
      %s168 = sphi 0, %s166
      %s169 = sphi 0, %s168
      %s183 = sphi 0, %s169
      %s187 = sphi 0, %s187
      %s189 = sphi 0, %s187
      %s190 = sphi 0, %s189
      %s204 = sphi 0, %s190
      %s208 = sphi 0, %s208
      %s210 = sphi 0, %s208
      %s211 = sphi 0, %s210
      %s225 = sphi 0, %s211
      %s229 = sphi 0, %s229
      %s231 = sphi 0, %s229
      %s232 = sphi 0, %s231
      %s246 = sphi 0, %s232
      %s250 = sphi 0, %s250
      %s252 = sphi 0, %s250
      %s253 = sphi 0, %s252
      %s267 = sphi 0, %s253
      %s271 = sphi 0, %s271
      %s273 = sphi 0, %s271
      %s274 = sphi 0, %s273
      %s288 = sphi 0, %s274
      %s294 = sphi 0, %s296
      %s297 = sphi 0, %s294
      %s298 = sphi 0, %s297
      %s314 = sphi 0, %s298
      %s320 = sphi 0, %s322
      %s323 = sphi 0, %s320
      %s324 = sphi 0, %s323
      %s340 = sphi 0, %s324
    $region4: #{gaegru_forward.2} parent=1 // loop_header_branch
      %22 = sbr.rel (%p20) target = $region8
    $region5: #{gaegru_forward.2} parent=1 // loop_body
      %s24 = ssub.s32 %s19, 1
      %s25 = ssub.s32 %s19, 2
      %s32 = sadd.s32 1, %s27
      %p33 = scmp.ge.s32.totalorder %s32, 2
      %s34 = scalar_select %p33, 0, %s32
      %s35 = sadd.s32 1, %s26
      %s36 = scalar_select %p33, %s35, %s26
      %p37 = scmp.ge.s32.totalorder %s36, 2
      %s38 = scalar_select %p37, 0, %s36
      %s39 = ssub.s32 %s26, %s38
      %s40 = ssub.s32 %s27, %s34
      %s41 = sor.u32 %s39, %s40
      %p42 = scmp.eq.s32.totalorder %s41, 0
      %s44 = sadd.s32 %s43, 1
      %s45 = scalar_select %p42, %s43, %s44
      %p48 = pneg %p42
      %p49 = scmp.eq.s32.totalorder %s19, 3
      %p50 = por %p48, %p49
      %p51 = scmp.ne.s32.totalorder %s43, %s46
      %p52 = scmp.eq.s32.totalorder %s19, 0
      %p53 = por %p51, %p52
      %p54 = scmp.ne.s32.totalorder %s43, %s46
      %p55 = scmp.eq.s32.totalorder %s24, 3
      %p56 = por %p54, %p55
      %p57 = scmp.ne.s32.totalorder %s46, %s47
      %p58 = scmp.eq.s32.totalorder %s24, 0
      %p59 = por %p57, %p58
      %p60 = scmp.ne.s32.totalorder %s46, %s47
      %p61 = scmp.eq.s32.totalorder %s25, 3
      %p62 = por %p60, %p61
      %p64 = scmp.ne.s32.totalorder %s47, %s63
      %p65 = scmp.eq.s32.totalorder %s25, 0
      %p66 = por %p64, %p65
      %s67 = ssub.s32 %s27, %s34
      %p68 = scmp.eq.s32.totalorder %s67, 0
      %s70 = sadd.s32 %s69, 1
      %s71 = scalar_select %p68, %s69, %s70
      %p74 = pneg %p68
      %p75 = scmp.eq.s32.totalorder %s19, 3
      %p76 = por %p74, %p75
      %p77 = scmp.ne.s32.totalorder %s69, %s72
      %p78 = scmp.eq.s32.totalorder %s19, 0
      %p79 = por %p77, %p78
      %p80 = scmp.ne.s32.totalorder %s69, %s72
      %p81 = scmp.eq.s32.totalorder %s24, 3
      %p82 = por %p80, %p81
      %p83 = scmp.ne.s32.totalorder %s72, %s73
      %p84 = scmp.eq.s32.totalorder %s24, 0
      %p85 = por %p83, %p84
      %p86 = scmp.ne.s32.totalorder %s72, %s73
      %p87 = scmp.eq.s32.totalorder %s25, 3
      %p88 = por %p86, %p87
      %p90 = scmp.ne.s32.totalorder %s73, %s89
      %p91 = scmp.eq.s32.totalorder %s25, 0
      %p92 = por %p90, %p91
      %s93 = ssub.s32 %s26, %s38
      %p94 = scmp.eq.s32.totalorder %s93, 0
      %s96 = sadd.s32 %s95, 1
      %s97 = scalar_select %p94, %s95, %s96
      %p100 = pneg %p94
      %p101 = scmp.eq.s32.totalorder %s19, 3
      %p102 = por %p100, %p101
      %p103 = scmp.ne.s32.totalorder %s95, %s98
      %p104 = scmp.eq.s32.totalorder %s19, 0
      %p105 = por %p103, %p104
      %p106 = scmp.ne.s32.totalorder %s95, %s98
      %p107 = scmp.eq.s32.totalorder %s24, 3
      %p108 = por %p106, %p107
      %p109 = scmp.ne.s32.totalorder %s98, %s99
      %p110 = scmp.eq.s32.totalorder %s24, 0
      %p111 = por %p109, %p110
      %p112 = scmp.ne.s32.totalorder %s98, %s99
      %p113 = scmp.eq.s32.totalorder %s25, 3
      %p114 = por %p112, %p113
      %p116 = scmp.ne.s32.totalorder %s99, %s115
      %p117 = scmp.eq.s32.totalorder %s25, 0
      %p118 = por %p116, %p117
      %s119 = ssub.s32 %s26, %s38
      %p120 = scmp.eq.s32.totalorder %s119, 0
      %s122 = sadd.s32 %s121, 1
      %s123 = scalar_select %p120, %s121, %s122
      %p126 = pneg %p120
      %p127 = scmp.eq.s32.totalorder %s19, 3
      %p128 = por %p126, %p127
      %p129 = scmp.ne.s32.totalorder %s121, %s124
      %p130 = scmp.eq.s32.totalorder %s19, 0
      %p131 = por %p129, %p130
      %p132 = scmp.ne.s32.totalorder %s121, %s124
      %p133 = scmp.eq.s32.totalorder %s24, 3
      %p134 = por %p132, %p133
      %p135 = scmp.ne.s32.totalorder %s124, %s125
      %p136 = scmp.eq.s32.totalorder %s24, 0
      %p137 = por %p135, %p136
      %p138 = scmp.ne.s32.totalorder %s124, %s125
      %p139 = scmp.eq.s32.totalorder %s25, 3
      %p140 = por %p138, %p139
      %p142 = scmp.ne.s32.totalorder %s125, %s141
      %p143 = scmp.eq.s32.totalorder %s25, 0
      %p144 = por %p142, %p143
      %s146 = sadd.s32 %s145, 1
      %p149 = scmp.eq.s32.totalorder %s19, 3
      %p150 = scmp.ne.s32.totalorder %s145, %s147
      %p151 = scmp.eq.s32.totalorder %s19, 0
      %p152 = por %p150, %p151
      %p153 = scmp.ne.s32.totalorder %s145, %s147
      %p154 = scmp.eq.s32.totalorder %s24, 3
      %p155 = por %p153, %p154
      %p156 = scmp.ne.s32.totalorder %s147, %s148
      %p157 = scmp.eq.s32.totalorder %s24, 0
      %p158 = por %p156, %p157
      %p159 = scmp.ne.s32.totalorder %s147, %s148
      %p160 = scmp.eq.s32.totalorder %s25, 3
      %p161 = por %p159, %p160
      %p163 = scmp.ne.s32.totalorder %s148, %s162
      %p164 = scmp.eq.s32.totalorder %s25, 0
      %p165 = por %p163, %p164
      %s167 = sadd.s32 %s166, 1
      %p170 = scmp.eq.s32.totalorder %s19, 3
      %p171 = scmp.ne.s32.totalorder %s166, %s168
      %p172 = scmp.eq.s32.totalorder %s19, 0
      %p173 = por %p171, %p172
      %p174 = scmp.ne.s32.totalorder %s166, %s168
      %p175 = scmp.eq.s32.totalorder %s24, 3
      %p176 = por %p174, %p175
      %p177 = scmp.ne.s32.totalorder %s168, %s169
      %p178 = scmp.eq.s32.totalorder %s24, 0
      %p179 = por %p177, %p178
      %p180 = scmp.ne.s32.totalorder %s168, %s169
      %p181 = scmp.eq.s32.totalorder %s25, 3
      %p182 = por %p180, %p181
      %p184 = scmp.ne.s32.totalorder %s169, %s183
      %p185 = scmp.eq.s32.totalorder %s25, 0
      %p186 = por %p184, %p185
      %s188 = sadd.s32 %s187, 1
      %p191 = scmp.eq.s32.totalorder %s19, 3
      %p192 = scmp.ne.s32.totalorder %s187, %s189
      %p193 = scmp.eq.s32.totalorder %s19, 0
      %p194 = por %p192, %p193
      %p195 = scmp.ne.s32.totalorder %s187, %s189
      %p196 = scmp.eq.s32.totalorder %s24, 3
      %p197 = por %p195, %p196
      %p198 = scmp.ne.s32.totalorder %s189, %s190
      %p199 = scmp.eq.s32.totalorder %s24, 0
      %p200 = por %p198, %p199
      %p201 = scmp.ne.s32.totalorder %s189, %s190
      %p202 = scmp.eq.s32.totalorder %s25, 3
      %p203 = por %p201, %p202
      %p205 = scmp.ne.s32.totalorder %s190, %s204
      %p206 = scmp.eq.s32.totalorder %s25, 0
      %p207 = por %p205, %p206
      %s209 = sadd.s32 %s208, 1
      %p212 = scmp.eq.s32.totalorder %s19, 3
      %p213 = scmp.ne.s32.totalorder %s208, %s210
      %p214 = scmp.eq.s32.totalorder %s19, 0
      %p215 = por %p213, %p214
      %p216 = scmp.ne.s32.totalorder %s208, %s210
      %p217 = scmp.eq.s32.totalorder %s24, 3
      %p218 = por %p216, %p217
      %p219 = scmp.ne.s32.totalorder %s210, %s211
      %p220 = scmp.eq.s32.totalorder %s24, 0
      %p221 = por %p219, %p220
      %p222 = scmp.ne.s32.totalorder %s210, %s211
      %p223 = scmp.eq.s32.totalorder %s25, 3
      %p224 = por %p222, %p223
      %p226 = scmp.ne.s32.totalorder %s211, %s225
      %p227 = scmp.eq.s32.totalorder %s25, 0
      %p228 = por %p226, %p227
      %s230 = sadd.s32 %s229, 1
      %p233 = scmp.eq.s32.totalorder %s19, 3
      %p234 = scmp.ne.s32.totalorder %s229, %s231
      %p235 = scmp.eq.s32.totalorder %s19, 0
      %p236 = por %p234, %p235
      %p237 = scmp.ne.s32.totalorder %s229, %s231
      %p238 = scmp.eq.s32.totalorder %s24, 3
      %p239 = por %p237, %p238
      %p240 = scmp.ne.s32.totalorder %s231, %s232
      %p241 = scmp.eq.s32.totalorder %s24, 0
      %p242 = por %p240, %p241
      %p243 = scmp.ne.s32.totalorder %s231, %s232
      %p244 = scmp.eq.s32.totalorder %s25, 3
      %p245 = por %p243, %p244
      %p247 = scmp.ne.s32.totalorder %s232, %s246
      %p248 = scmp.eq.s32.totalorder %s25, 0
      %p249 = por %p247, %p248
      %s251 = sadd.s32 %s250, 1
      %p254 = scmp.eq.s32.totalorder %s19, 3
      %p255 = scmp.ne.s32.totalorder %s250, %s252
      %p256 = scmp.eq.s32.totalorder %s19, 0
      %p257 = por %p255, %p256
      %p258 = scmp.ne.s32.totalorder %s250, %s252
      %p259 = scmp.eq.s32.totalorder %s24, 3
      %p260 = por %p258, %p259
      %p261 = scmp.ne.s32.totalorder %s252, %s253
      %p262 = scmp.eq.s32.totalorder %s24, 0
      %p263 = por %p261, %p262
      %p264 = scmp.ne.s32.totalorder %s252, %s253
      %p265 = scmp.eq.s32.totalorder %s25, 3
      %p266 = por %p264, %p265
      %p268 = scmp.ne.s32.totalorder %s253, %s267
      %p269 = scmp.eq.s32.totalorder %s25, 0
      %p270 = por %p268, %p269
      %s272 = sadd.s32 %s271, 1
      %p275 = scmp.eq.s32.totalorder %s19, 3
      %p276 = scmp.ne.s32.totalorder %s271, %s273
      %p277 = scmp.eq.s32.totalorder %s19, 0
      %p278 = por %p276, %p277
      %p279 = scmp.ne.s32.totalorder %s271, %s273
      %p280 = scmp.eq.s32.totalorder %s24, 3
      %p281 = por %p279, %p280
      %p282 = scmp.ne.s32.totalorder %s273, %s274
      %p283 = scmp.eq.s32.totalorder %s24, 0
      %p284 = por %p282, %p283
      %p285 = scmp.ne.s32.totalorder %s273, %s274
      %p286 = scmp.eq.s32.totalorder %s25, 3
      %p287 = por %p285, %p286
      %p289 = scmp.ne.s32.totalorder %s274, %s288
      %p290 = scmp.eq.s32.totalorder %s25, 0
      %p291 = por %p289, %p290
      %s292 = ssub.s32 %s26, %s38
      %p293 = scmp.eq.s32.totalorder %s292, 0
      %s295 = sadd.s32 %s294, 1
      %s296 = scalar_select %p293, %s294, %s295
      %p299 = pneg %p293
      %p300 = scmp.eq.s32.totalorder %s19, 3
      %p301 = por %p299, %p300
      %p302 = scmp.ne.s32.totalorder %s294, %s297
      %p303 = scmp.eq.s32.totalorder %s19, 0
      %p304 = por %p302, %p303
      %p305 = scmp.ne.s32.totalorder %s294, %s297
      %p306 = scmp.eq.s32.totalorder %s24, 3
      %p307 = por %p305, %p306
      %p308 = scmp.ne.s32.totalorder %s297, %s298
      %p309 = scmp.eq.s32.totalorder %s24, 0
      %p310 = por %p308, %p309
      %p311 = scmp.ne.s32.totalorder %s297, %s298
      %p312 = scmp.eq.s32.totalorder %s25, 3
      %p313 = por %p311, %p312
      %p315 = scmp.ne.s32.totalorder %s298, %s314
      %p316 = scmp.eq.s32.totalorder %s25, 0
      %p317 = por %p315, %p316
      %s318 = ssub.s32 %s26, %s38
      %p319 = scmp.eq.s32.totalorder %s318, 0
      %s321 = sadd.s32 %s320, 1
      %s322 = scalar_select %p319, %s320, %s321
      %p325 = pneg %p319
      %p326 = scmp.eq.s32.totalorder %s19, 3
      %p327 = por %p325, %p326
      %p328 = scmp.ne.s32.totalorder %s320, %s323
      %p329 = scmp.eq.s32.totalorder %s19, 0
      %p330 = por %p328, %p329
      %p331 = scmp.ne.s32.totalorder %s320, %s323
      %p332 = scmp.eq.s32.totalorder %s24, 3
      %p333 = por %p331, %p332
      %p334 = scmp.ne.s32.totalorder %s323, %s324
      %p335 = scmp.eq.s32.totalorder %s24, 0
      %p336 = por %p334, %p335
      %p337 = scmp.ne.s32.totalorder %s323, %s324
      %p338 = scmp.eq.s32.totalorder %s25, 3
      %p339 = por %p337, %p338
      %p341 = scmp.ne.s32.totalorder %s324, %s340
      %p342 = scmp.eq.s32.totalorder %s25, 0
      %p343 = por %p341, %p342
      %p344 = scmp.le.s32.totalorder 1, %s19
      %p345 = scmp.lt.s32.totalorder %s19, 5
      %p346 = pnand %p344, %p345
      %p347 = pneg %p346
      // Predicated region
      $region9: #{gaegru_forward.2} parent=5 // pred_check
        _
      $region10: #{gaegru_forward.2} parent=5 // pred_check_branch
        %349 = sbr.rel (%p346) target = $region12
      $region11: #{gaegru_forward.2} parent=5 // pred_region
        %s350 = ssub.s32 %s19, 1
        // Predicated region
        $region13: #{gaegru_forward.2} parent=11 // pred_check
          %p351 = pneg %p158
        $region14: #{gaegru_forward.2} parent=11 // pred_check_branch
          %353 = sbr.rel (%p351) target = $region16
        $region15: #{gaegru_forward.2} parent=11 // pred_region
          _
        $region16: #{gaegru_forward.2} parent=11 // pred_fallthru
          _
        // Predicated region
        $region17: #{gaegru_forward.2} parent=11 // pred_check
          %p354 = pneg %p179
        $region18: #{gaegru_forward.2} parent=11 // pred_check_branch
          %356 = sbr.rel (%p354) target = $region20
        $region19: #{gaegru_forward.2} parent=11 // pred_region
          _
        $region20: #{gaegru_forward.2} parent=11 // pred_fallthru
          _
        // Predicated region
        $region21: #{gaegru_forward.2} parent=11 // pred_check
          %p357 = pneg %p200
        $region22: #{gaegru_forward.2} parent=11 // pred_check_branch
          %359 = sbr.rel (%p357) target = $region24
        $region23: #{gaegru_forward.2} parent=11 // pred_region
          _
        $region24: #{gaegru_forward.2} parent=11 // pred_fallthru
          _
        // Predicated region
        $region25: #{gaegru_forward.2} parent=11 // pred_check
          %p360 = pneg %p221
        $region26: #{gaegru_forward.2} parent=11 // pred_check_branch
          %362 = sbr.rel (%p360) target = $region28
        $region27: #{gaegru_forward.2} parent=11 // pred_region
          _
        $region28: #{gaegru_forward.2} parent=11 // pred_fallthru
          _
        // Predicated region
        $region29: #{gaegru_forward.2} parent=11 // pred_check
          %p363 = pneg %p242
        $region30: #{gaegru_forward.2} parent=11 // pred_check_branch
          %365 = sbr.rel (%p363) target = $region32
        $region31: #{gaegru_forward.2} parent=11 // pred_region
          _
        $region32: #{gaegru_forward.2} parent=11 // pred_fallthru
          _
        // Predicated region
        $region33: #{gaegru_forward.2} parent=11 // pred_check
          %p366 = pneg %p263
        $region34: #{gaegru_forward.2} parent=11 // pred_check_branch
          %368 = sbr.rel (%p366) target = $region36
        $region35: #{gaegru_forward.2} parent=11 // pred_region
          _
        $region36: #{gaegru_forward.2} parent=11 // pred_fallthru
          _
        // Predicated region
        $region37: #{gaegru_forward.2} parent=11 // pred_check
          %p369 = pneg %p284
        $region38: #{gaegru_forward.2} parent=11 // pred_check_branch
          %371 = sbr.rel (%p369) target = $region40
        $region39: #{gaegru_forward.2} parent=11 // pred_region
          _
        $region40: #{gaegru_forward.2} parent=11 // pred_fallthru
          _
      $region12: #{gaegru_forward.2} parent=5 // pred_fallthru
        _
      %p372 = scmp.lt.s32.totalorder %s19, 4
      // Predicated region
      $region41: #{gaegru_forward.2} parent=5 // pred_check
        %p373 = pneg %p372
      $region42: #{gaegru_forward.2} parent=5 // pred_check_branch
        %375 = sbr.rel (%p373) target = $region44
      $region43: #{gaegru_forward.2} parent=5 // pred_region
        // Predicated region
        $region45: #{gaegru_forward.2} parent=43 // pred_check
          %p376 = pneg %p53
        $region46: #{gaegru_forward.2} parent=43 // pred_check_branch
          %378 = sbr.rel (%p376) target = $region48
        $region47: #{gaegru_forward.2} parent=43 // pred_region
          %s379 = sand.u32 %s43, 1
          %s380 = sand.u32 %s43, 1
          %s381 = smul.addr %s380, 64
          %s382 = scalar_lea.vmem [#allocation4], %s381
          %s383 = smul.u32 16, %s26
          %s384 = smul.addr %s383, 2
          %s385 = sadd.s32 %s27, %s384
          %s386 = smul.addr %s385, 4
          %s387 = scalar_lea.vmem %s0, %s386
          // Predicated region
          $region49: #{gaegru_forward.2} parent=47 // pred_check
            _
          $region50: #{gaegru_forward.2} parent=47 // pred_check_branch
            %389 = sbr.rel (0) target = $region52
          $region51: #{gaegru_forward.2} parent=47 // pred_region
            // Predicated region
            $region53: #{gaegru_forward.2} parent=51 // pred_check
              _
            $region54: #{gaegru_forward.2} parent=51 // pred_check_branch
              %391 = sbr.rel target = $region56
            $region55: #{gaegru_forward.2} parent=51 // pred_region
              // Predicated region
              $region68: #{gaegru_forward.2} parent=55 // pred_check
                _
              $region69: #{gaegru_forward.2} parent=55 // pred_check_branch
                %437 = sbr.rel (0) target = $region71
              $region70: #{gaegru_forward.2} parent=55 // pred_region
                loop: start=0, step=1, limit=1
                $region72: #{gaegru_forward.2} parent=70 // loop_pre_header
                  _
                $region73: #{gaegru_forward.2} parent=70 // loop_header
                  %s439 = sphi 0, %s443
                  %p440 = scmp.ge.s32.totalorder %s439, 1
                  %s444 = sphi %s387, %s387
                  %s445 = sphi %s382, %s382
                $region74: #{gaegru_forward.2} parent=70 // loop_header_branch
                  %442 = sbr.rel (%p440) target = $region78
                $region75: #{gaegru_forward.2} parent=70 // loop_body
                  _
                $region76: #{gaegru_forward.2} parent=70 // loop_footer
                  %s443 = sadd.s32 1, %s439
                $region77: #{gaegru_forward.2} parent=70 // loop_footer_branch
                  %438 = sbr.rel target = $region73
                $region78: #{gaegru_forward.2} parent=70 // loop_exit
                  _
                %s447 = ssub.s32 16, 1
                loop: start=0, step=1, limit=1
                $region79: #{gaegru_forward.2} parent=70 // loop_pre_header
                  _
                $region80: #{gaegru_forward.2} parent=70 // loop_header
                  %s449 = sphi 0, %s453
                  %p450 = scmp.ge.s32.totalorder %s449, 1
                  %s454 = sphi %s387, %s387
                  %s455 = sphi %s382, %s382
                $region81: #{gaegru_forward.2} parent=70 // loop_header_branch
                  %452 = sbr.rel (%p450) target = $region85
                $region82: #{gaegru_forward.2} parent=70 // loop_body
                  %v456 = vld [vmem:[%s454] sm:%s447]
                  %457 = vst [vmem:[%s455] sm:%s447] %v456
                  %v458 = vld [vmem:[%s454 + $0x8] sm:%s447]
                  %459 = vst [vmem:[%s455 + $0x4] sm:%s447] %v458
                  %v460 = vld [vmem:[%s454 + $0x10] sm:%s447]
                  %461 = vst [vmem:[%s455 + $0x8] sm:%s447] %v460
                  %v462 = vld [vmem:[%s454 + $0x18] sm:%s447]
                  %463 = vst [vmem:[%s455 + $0xc] sm:%s447] %v462
                  %v464 = vld [vmem:[%s454 + $0x20] sm:%s447]
                  %465 = vst [vmem:[%s455 + $0x10] sm:%s447] %v464
                  %v466 = vld [vmem:[%s454 + $0x28] sm:%s447]
                  %467 = vst [vmem:[%s455 + $0x14] sm:%s447] %v466
                  %v468 = vld [vmem:[%s454 + $0x30] sm:%s447]
                  %469 = vst [vmem:[%s455 + $0x18] sm:%s447] %v468
                  %v470 = vld [vmem:[%s454 + $0x38] sm:%s447]
                  %471 = vst [vmem:[%s455 + $0x1c] sm:%s447] %v470
                  %v472 = vld [vmem:[%s454 + $0x40] sm:%s447]
                  %473 = vst [vmem:[%s455 + $0x20] sm:%s447] %v472
                  %v474 = vld [vmem:[%s454 + $0x48] sm:%s447]
                  %475 = vst [vmem:[%s455 + $0x24] sm:%s447] %v474
                  %v476 = vld [vmem:[%s454 + $0x50] sm:%s447]
                  %477 = vst [vmem:[%s455 + $0x28] sm:%s447] %v476
                  %v478 = vld [vmem:[%s454 + $0x58] sm:%s447]
                  %479 = vst [vmem:[%s455 + $0x2c] sm:%s447] %v478
                  %v480 = vld [vmem:[%s454 + $0x60] sm:%s447]
                  %481 = vst [vmem:[%s455 + $0x30] sm:%s447] %v480
                  %v482 = vld [vmem:[%s454 + $0x68] sm:%s447]
                  %483 = vst [vmem:[%s455 + $0x34] sm:%s447] %v482
                  %v484 = vld [vmem:[%s454 + $0x70] sm:%s447]
                  %485 = vst [vmem:[%s455 + $0x38] sm:%s447] %v484
                  %v486 = vld [vmem:[%s454 + $0x78] sm:%s447]
                  %487 = vst [vmem:[%s455 + $0x3c] sm:%s447] %v486
                $region83: #{gaegru_forward.2} parent=70 // loop_footer
                  %s453 = sadd.s32 1, %s449
                $region84: #{gaegru_forward.2} parent=70 // loop_footer_branch
                  %448 = sbr.rel target = $region80
                $region85: #{gaegru_forward.2} parent=70 // loop_exit
                  _
              $region71: #{gaegru_forward.2} parent=55 // pred_fallthru
                _
            $region56: #{gaegru_forward.2} parent=51 // pred_fallthru
              _
            // Predicated region
            $region57: #{gaegru_forward.2} parent=51 // pred_check
              _
            $region58: #{gaegru_forward.2} parent=51 // pred_check_branch
              %393 = sbr.rel (0) target = $region60
            $region59: #{gaegru_forward.2} parent=51 // pred_region
              %s395 = ssub.s32 16, 1
              loop: start=0, step=1, limit=1
              $region61: #{gaegru_forward.2} parent=59 // loop_pre_header
                _
              $region62: #{gaegru_forward.2} parent=59 // loop_header
                %s397 = sphi 0, %s401
                %p398 = scmp.ge.s32.totalorder %s397, 1
                %s402 = sphi %s387, %s387
                %s403 = sphi %s382, %s382
              $region63: #{gaegru_forward.2} parent=59 // loop_header_branch
                %400 = sbr.rel (%p398) target = $region67
              $region64: #{gaegru_forward.2} parent=59 // loop_body
                %v404 = vld [vmem:[%s402] sm:%s395]
                %405 = vst [vmem:[%s403] sm:%s395] %v404
                %v406 = vld [vmem:[%s402 + $0x8] sm:%s395]
                %407 = vst [vmem:[%s403 + $0x4] sm:%s395] %v406
                %v408 = vld [vmem:[%s402 + $0x10] sm:%s395]
                %409 = vst [vmem:[%s403 + $0x8] sm:%s395] %v408
                %v410 = vld [vmem:[%s402 + $0x18] sm:%s395]
                %411 = vst [vmem:[%s403 + $0xc] sm:%s395] %v410
                %v412 = vld [vmem:[%s402 + $0x20] sm:%s395]
                %413 = vst [vmem:[%s403 + $0x10] sm:%s395] %v412
                %v414 = vld [vmem:[%s402 + $0x28] sm:%s395]
                %415 = vst [vmem:[%s403 + $0x14] sm:%s395] %v414
                %v416 = vld [vmem:[%s402 + $0x30] sm:%s395]
                %417 = vst [vmem:[%s403 + $0x18] sm:%s395] %v416
                %v418 = vld [vmem:[%s402 + $0x38] sm:%s395]
                %419 = vst [vmem:[%s403 + $0x1c] sm:%s395] %v418
                %v420 = vld [vmem:[%s402 + $0x40] sm:%s395]
                %421 = vst [vmem:[%s403 + $0x20] sm:%s395] %v420
                %v422 = vld [vmem:[%s402 + $0x48] sm:%s395]
                %423 = vst [vmem:[%s403 + $0x24] sm:%s395] %v422
                %v424 = vld [vmem:[%s402 + $0x50] sm:%s395]
                %425 = vst [vmem:[%s403 + $0x28] sm:%s395] %v424
                %v426 = vld [vmem:[%s402 + $0x58] sm:%s395]
                %427 = vst [vmem:[%s403 + $0x2c] sm:%s395] %v426
                %v428 = vld [vmem:[%s402 + $0x60] sm:%s395]
                %429 = vst [vmem:[%s403 + $0x30] sm:%s395] %v428
                %v430 = vld [vmem:[%s402 + $0x68] sm:%s395]
                %431 = vst [vmem:[%s403 + $0x34] sm:%s395] %v430
                %v432 = vld [vmem:[%s402 + $0x70] sm:%s395]
                %433 = vst [vmem:[%s403 + $0x38] sm:%s395] %v432
                %v434 = vld [vmem:[%s402 + $0x78] sm:%s395]
                %435 = vst [vmem:[%s403 + $0x3c] sm:%s395] %v434
              $region65: #{gaegru_forward.2} parent=59 // loop_footer
                %s401 = sadd.s32 1, %s397
              $region66: #{gaegru_forward.2} parent=59 // loop_footer_branch
                %396 = sbr.rel target = $region62
              $region67: #{gaegru_forward.2} parent=59 // loop_exit
                _
            $region60: #{gaegru_forward.2} parent=51 // pred_fallthru
              _
          $region52: #{gaegru_forward.2} parent=47 // pred_fallthru
            _
          %488 = vnop
        $region48: #{gaegru_forward.2} parent=43 // pred_fallthru
          _
        // Predicated region
        $region86: #{gaegru_forward.2} parent=43 // pred_check
          %p489 = pneg %p79
        $region87: #{gaegru_forward.2} parent=43 // pred_check_branch
          %491 = sbr.rel (%p489) target = $region89
        $region88: #{gaegru_forward.2} parent=43 // pred_region
          %s492 = smul.u32 16, %s27
          %p493 = scmp.lt.s32.totalorder %s492, 31
          %s494 = scalar_select %p493, %s492, 31
          %s495 = smul.addr %s494, 4
          %s496 = scalar_lea.vmem %s1, %s495
          %s497 = smul.u32 16, %s27
        $region89: #{gaegru_forward.2} parent=43 // pred_fallthru
          _
        // Predicated region
        $region90: #{gaegru_forward.2} parent=43 // pred_check
          %p498 = pneg %p105
        $region91: #{gaegru_forward.2} parent=43 // pred_check_branch
          %500 = sbr.rel (%p498) target = $region93
        $region92: #{gaegru_forward.2} parent=43 // pred_region
          %s501 = smul.u32 16, %s26
          %p502 = scmp.lt.s32.totalorder %s501, 31
          %s503 = scalar_select %p502, %s501, 31
          %s504 = smul.addr %s503, 8
          %s505 = scalar_lea.vmem %s2, %s504
          %s506 = smul.u32 16, %s26
        $region93: #{gaegru_forward.2} parent=43 // pred_fallthru
          _
        // Predicated region
        $region94: #{gaegru_forward.2} parent=43 // pred_check
          %p507 = pneg %p131
        $region95: #{gaegru_forward.2} parent=43 // pred_check_branch
          %509 = sbr.rel (%p507) target = $region97
        $region96: #{gaegru_forward.2} parent=43 // pred_region
          %s510 = smul.u32 16, %s26
          %p511 = scmp.lt.s32.totalorder %s510, 31
          %s512 = scalar_select %p511, %s510, 31
          %s513 = smul.addr %s512, 8
          %s514 = scalar_lea.vmem %s3, %s513
          %s515 = smul.u32 16, %s26
        $region97: #{gaegru_forward.2} parent=43 // pred_fallthru
          _
      $region44: #{gaegru_forward.2} parent=5 // pred_fallthru
        _
      %p516 = scmp.le.s32.totalorder 1, %s19
      %p517 = scmp.lt.s32.totalorder %s19, 5
      %p518 = pnand %p516, %p517
      %p519 = pneg %p518
      // Predicated region
      $region98: #{gaegru_forward.2} parent=5 // pred_check
        _
      $region99: #{gaegru_forward.2} parent=5 // pred_check_branch
        %521 = sbr.rel (%p518) target = $region101
      $region100: #{gaegru_forward.2} parent=5 // pred_region
        %s522 = ssub.s32 %s19, 1
        %s523 = sand.u32 %s46, 1
        %s524 = sand.u32 %s46, 1
        %s525 = smul.addr %s524, 64
        %s526 = scalar_lea.vmem [#allocation4], %s525
        // Predicated region
        $region102: #{gaegru_forward.2} parent=100 // pred_check
          %p527 = pneg %p59
        $region103: #{gaegru_forward.2} parent=100 // pred_check_branch
          %529 = sbr.rel (%p527) target = $region105
        $region104: #{gaegru_forward.2} parent=100 // pred_region
          _
        $region105: #{gaegru_forward.2} parent=100 // pred_fallthru
          _
        %s530 = sand.u32 %s46, 1
        %s531 = sand.u32 %s46, 1
        %s532 = smul.addr %s531, 64
        %s533 = scalar_lea.vmem [#allocation4], %s532
        %p534 = pneg %p59
        %p535 = pneg %p56
        %s536 = smul.u32 16, %s29
        %p537 = scmp.lt.s32.totalorder %s536, 31
        %s538 = scalar_select %p537, %s536, 31
        %s539 = smul.addr %s538, 4
        %s540 = scalar_lea.vmem %s1, %s539
        %p541 = pneg %p85
        %p542 = pneg %p82
        %s543 = smul.u32 16, %s28
        %p544 = scmp.lt.s32.totalorder %s543, 31
        %s545 = scalar_select %p544, %s543, 31
        %s546 = smul.addr %s545, 8
        %s547 = scalar_lea.vmem %s2, %s546
        %p548 = pneg %p111
        %p549 = pneg %p108
        %s550 = smul.u32 16, %s28
        %p551 = scmp.lt.s32.totalorder %s550, 31
        %s552 = scalar_select %p551, %s550, 31
        %s553 = smul.addr %s552, 8
        %s554 = scalar_lea.vmem %s3, %s553
        %p555 = pneg %p137
        %p556 = pneg %p134
        %p557 = pneg %p158
        %p558 = pneg %p155
        %p559 = pneg %p179
        %p560 = pneg %p176
        %p561 = pneg %p200
        %p562 = pneg %p197
        %p563 = pneg %p221
        %p564 = pneg %p218
        %p565 = pneg %p242
        %p566 = pneg %p239
        %p567 = pneg %p263
        %p568 = pneg %p260
        %p569 = pneg %p284
        %p570 = pneg %p281
        %p571 = pneg %p310
        %p572 = pneg %p307
        %s573 = smul.u32 16, %s28
        %p574 = scmp.lt.s32.totalorder %s573, 31
        %s575 = scalar_select %p574, %s573, 31
        %s576 = smul.addr %s575, 8
        %s577 = scalar_lea.vmem %s11, %s576
        %p578 = pneg %p336
        %p579 = pneg %p333
        %s580 = smul.u32 16, %s28
        %p581 = scmp.lt.s32.totalorder %s580, 31
        %s582 = scalar_select %p581, %s580, 31
        %s583 = smul.addr %s582, 4
        %s584 = scalar_lea.vmem %s12, %s583
        %s585 = smul.u32 16, %s28
        %s586 = smul.u32 16, %s29
        %p587 = scmp.lt.s32.totalorder %s586, 31
        %s588 = scalar_select %p587, %s586, 31
        %s589 = smul.addr %s588, 4
        %s590 = scalar_lea.vmem %s1, %s589
        %s591 = smul.u32 16, %s29
        %s592 = smul.u32 16, %s28
        %p593 = scmp.lt.s32.totalorder %s592, 31
        %s594 = scalar_select %p593, %s592, 31
        %s595 = smul.addr %s594, 8
        %s596 = scalar_lea.vmem %s2, %s595
        %s597 = smul.u32 16, %s28
        %s598 = smul.u32 16, %s28
        %p599 = scmp.lt.s32.totalorder %s598, 31
        %s600 = scalar_select %p599, %s598, 31
        %s601 = smul.addr %s600, 8
        %s602 = scalar_lea.vmem %s3, %s601
        %s603 = smul.u32 16, %s28
        %s604 = smul.u32 16, %s28
        %p605 = scmp.lt.s32.totalorder %s604, 31
        %s606 = scalar_select %p605, %s604, 31
        %s607 = smul.addr %s606, 8
        %s608 = scalar_lea.vmem %s11, %s607
        %s609 = smul.u32 16, %s28
        %s610 = smul.u32 16, %s28
        %p611 = scmp.lt.s32.totalorder %s610, 31
        %s612 = scalar_select %p611, %s610, 31
        %s613 = smul.addr %s612, 4
        %s614 = scalar_lea.vmem %s12, %s613
        %s615 = smul.u32 16, %s28
        %p617 = scmp.eq.s32.totalorder %s29, 0
        // Predicated region
        $region106: #{gaegru_forward.2} parent=100 // pred_check
          %p618 = pneg %p617
        $region107: #{gaegru_forward.2} parent=100 // pred_check_branch
          %620 = sbr.rel (%p618) target = $region109
        $region108: #{gaegru_forward.2} parent=100 // pred_region
          %621 = vst [vmem:[#allocation2] sm:$0xff] 0.0
          %622 = vst [vmem:[#allocation2 + $0x8] sm:$0xff] 0.0
          %623 = vst [vmem:[#allocation2 + $0x10] sm:$0xff] 0.0
          %624 = vst [vmem:[#allocation2 + $0x18] sm:$0xff] 0.0
          %625 = vst [vmem:[#allocation2 + $0x20] sm:$0xff] 0.0
          %626 = vst [vmem:[#allocation2 + $0x28] sm:$0xff] 0.0
          %627 = vst [vmem:[#allocation2 + $0x30] sm:$0xff] 0.0
          %628 = vst [vmem:[#allocation2 + $0x38] sm:$0xff] 0.0
          %629 = vst [vmem:[#allocation2 + $0x40] sm:$0xff] 0.0
          %630 = vst [vmem:[#allocation2 + $0x48] sm:$0xff] 0.0
          %631 = vst [vmem:[#allocation2 + $0x50] sm:$0xff] 0.0
          %632 = vst [vmem:[#allocation2 + $0x58] sm:$0xff] 0.0
          %633 = vst [vmem:[#allocation2 + $0x60] sm:$0xff] 0.0
          %634 = vst [vmem:[#allocation2 + $0x68] sm:$0xff] 0.0
          %635 = vst [vmem:[#allocation2 + $0x70] sm:$0xff] 0.0
          %636 = vst [vmem:[#allocation2 + $0x78] sm:$0xff] 0.0
        $region109: #{gaegru_forward.2} parent=100 // pred_fallthru
          _
        %v637 = vld [vmem:[#allocation2] sm:$0xff]
        %v638 = vld [vmem:[#allocation2 + $0x8] sm:$0xff]
        %v639 = vld [vmem:[#allocation2 + $0x10] sm:$0xff]
        %v640 = vld [vmem:[#allocation2 + $0x18] sm:$0xff]
        %v641 = vld [vmem:[#allocation2 + $0x20] sm:$0xff]
        %v642 = vld [vmem:[#allocation2 + $0x28] sm:$0xff]
        %v643 = vld [vmem:[#allocation2 + $0x30] sm:$0xff]
        %v644 = vld [vmem:[#allocation2 + $0x38] sm:$0xff]
        %v645 = vld [vmem:[#allocation2 + $0x40] sm:$0xff]
        %v646 = vld [vmem:[#allocation2 + $0x48] sm:$0xff]
        %v647 = vld [vmem:[#allocation2 + $0x50] sm:$0xff]
        %v648 = vld [vmem:[#allocation2 + $0x58] sm:$0xff]
        %v649 = vld [vmem:[#allocation2 + $0x60] sm:$0xff]
        %v650 = vld [vmem:[#allocation2 + $0x68] sm:$0xff]
        %v651 = vld [vmem:[#allocation2 + $0x70] sm:$0xff]
        %v652 = vld [vmem:[#allocation2 + $0x78] sm:$0xff]
        %v653 = vld [vmem:[%s526] sm:$0xf]
        %v654 = vld [vmem:[%s526 + $0x4] sm:$0xf]
        %v655 = vld [vmem:[%s526 + $0x8] sm:$0xf]
        %v656 = vld [vmem:[%s526 + $0xc] sm:$0xf]
        %v657 = vld [vmem:[%s526 + $0x10] sm:$0xf]
        %v658 = vld [vmem:[%s526 + $0x14] sm:$0xf]
        %v659 = vld [vmem:[%s526 + $0x18] sm:$0xf]
        %v660 = vld [vmem:[%s526 + $0x1c] sm:$0xf]
        %v661 = vld [vmem:[%s526 + $0x20] sm:$0xf]
        %v662 = vld [vmem:[%s526 + $0x24] sm:$0xf]
        %v663 = vld [vmem:[%s526 + $0x28] sm:$0xf]
        %v664 = vld [vmem:[%s526 + $0x2c] sm:$0xf]
        %v665 = vld [vmem:[%s526 + $0x30] sm:$0xf]
        %v666 = vld [vmem:[%s526 + $0x34] sm:$0xf]
        %v667 = vld [vmem:[%s526 + $0x38] sm:$0xf]
        %v668 = vld [vmem:[%s526 + $0x3c] sm:$0xf]
        %v669 = vld [vmem:[%s590] sm:$0xf]
        %v670 = vld [vmem:[%s590 + $0x4] sm:$0xf]
        %v671 = vld [vmem:[%s590 + $0x8] sm:$0xf]
        %v672 = vld [vmem:[%s590 + $0xc] sm:$0xf]
        %v673 = vld [vmem:[%s590 + $0x10] sm:$0xf]
        %v674 = vld [vmem:[%s590 + $0x14] sm:$0xf]
        %v675 = vld [vmem:[%s590 + $0x18] sm:$0xf]
        %v676 = vld [vmem:[%s590 + $0x1c] sm:$0xf]
        %v677 = vld [vmem:[%s590 + $0x20] sm:$0xf]
        %v678 = vld [vmem:[%s590 + $0x24] sm:$0xf]
        %v679 = vld [vmem:[%s590 + $0x28] sm:$0xf]
        %v680 = vld [vmem:[%s590 + $0x2c] sm:$0xf]
        %v681 = vld [vmem:[%s590 + $0x30] sm:$0xf]
        %v682 = vld [vmem:[%s590 + $0x34] sm:$0xf]
        %v683 = vld [vmem:[%s590 + $0x38] sm:$0xf]
        %v684 = vld [vmem:[%s590 + $0x3c] sm:$0xf]
        %v701 = vunpack.c.l.b16 %v653
        %v702 = vunpack.c.l.b16 %v654
        %v703 = vunpack.c.l.b16 %v655
        %v704 = vunpack.c.l.b16 %v656
        %v705 = vunpack.c.l.b16 %v657
        %v706 = vunpack.c.l.b16 %v658
        %v707 = vunpack.c.l.b16 %v659
        %v708 = vunpack.c.l.b16 %v660
        %v709 = vunpack.c.l.b16 %v661
        %v710 = vunpack.c.l.b16 %v662
        %v711 = vunpack.c.l.b16 %v663
        %v712 = vunpack.c.l.b16 %v664
        %v713 = vunpack.c.l.b16 %v665
        %v714 = vunpack.c.l.b16 %v666
        %v715 = vunpack.c.l.b16 %v667
        %v716 = vunpack.c.l.b16 %v668
        %v717 = vpack.c.b16 %v702, %v701
        %v718 = vpack.c.b16 %v704, %v703
        %v719 = vpack.c.b16 %v706, %v705
        %v720 = vpack.c.b16 %v708, %v707
        %v721 = vpack.c.b16 %v710, %v709
        %v722 = vpack.c.b16 %v712, %v711
        %v723 = vpack.c.b16 %v714, %v713
        %v724 = vpack.c.b16 %v716, %v715
        %v749 = vunpack.c.l.b16 %v669
        %v750 = vunpack.c.l.b16 %v670
        %v751 = vunpack.c.l.b16 %v671
        %v752 = vunpack.c.l.b16 %v672
        %v753 = vunpack.c.l.b16 %v673
        %v754 = vunpack.c.l.b16 %v674
        %v755 = vunpack.c.l.b16 %v675
        %v756 = vunpack.c.l.b16 %v676
        %v757 = vunpack.c.l.b16 %v677
        %v758 = vunpack.c.l.b16 %v678
        %v759 = vunpack.c.l.b16 %v679
        %v760 = vunpack.c.l.b16 %v680
        %v761 = vunpack.c.l.b16 %v681
        %v762 = vunpack.c.l.b16 %v682
        %v763 = vunpack.c.l.b16 %v683
        %v764 = vunpack.c.l.b16 %v684
        %v765 = vpack.c.b16 %v750, %v749
        %v766 = vpack.c.b16 %v752, %v751
        %v767 = vpack.c.b16 %v754, %v753
        %v768 = vpack.c.b16 %v756, %v755
        %v769 = vpack.c.b16 %v758, %v757
        %v770 = vpack.c.b16 %v760, %v759
        %v771 = vpack.c.b16 %v762, %v761
        %v772 = vpack.c.b16 %v764, %v763
        %781 = vmatprep.subr.bf16.mxu0 0
        %782 = vmatpush1.bf16.msra.mxu0 %v772
        %783 = vmatprep.subr.bf16.mxu0 0
        %784 = vmatpush1.bf16.msra.mxu0 %v771
        %785 = vmatprep.subr.bf16.mxu0 0
        %786 = vmatpush1.bf16.msra.mxu0 %v770
        %787 = vmatprep.subr.bf16.mxu0 0
        %788 = vmatpush1.bf16.msra.mxu0 %v769
        %789 = vmatprep.subr.bf16.mxu0 0
        %790 = vmatpush1.bf16.msra.mxu0 %v768
        %791 = vmatprep.subr.bf16.mxu0 0
        %792 = vmatpush1.bf16.msra.mxu0 %v767
        %793 = vmatprep.subr.bf16.mxu0 0
        %794 = vmatpush1.bf16.msra.mxu0 %v766
        %795 = vmatprep.subr.bf16.mxu0 0
        %796 = vmatpush1.bf16.msra.mxu0 %v765
        %797 = vmatprep.subr.bf16.mxu0 0
        %798 = vmatpush2.bf16.msra.mxu0 0
        %799 = vmatprep.subr.bf16.mxu0 0
        %800 = vmatpush2.bf16.msra.mxu0 0
        %801 = vmatprep.subr.bf16.mxu0 0
        %802 = vmatpush2.bf16.msra.mxu0 0
        %803 = vmatprep.subr.bf16.mxu0 0
        %804 = vmatpush2.bf16.msra.mxu0 0
        %805 = vmatprep.subr.bf16.mxu0 0
        %806 = vmatpush2.bf16.msra.mxu0 0
        %807 = vmatprep.subr.bf16.mxu0 0
        %808 = vmatpush2.bf16.msra.mxu0 0
        %809 = vmatprep.subr.bf16.mxu0 0
        %810 = vmatpush2.bf16.msra.mxu0 0
        %811 = vmatprep.subr.bf16.mxu0 0
        %812 = vmatpush2.bf16.msra.mxu0 0
        %813 = vmatprep.mubr.bf16.mxu0 0
        %814 = vmatmul.mubr.bf16.gmra.mxu0 %v717
        %v815 = vpop.f32.mrf.mxu0
        %v816 = vadd.f32 0.0, %v815
        %v817 = vpop.f32.mrf.mxu0
        %v818 = vpop.f32.mrf.mxu0
        %v819 = vadd.f32 0.0, %v818
        %v820 = vpop.f32.mrf.mxu0
        %821 = vmatprep.mubr.bf16.mxu0 0
        %822 = vmatmul.mubr.bf16.gmra.mxu0 %v718
        %v823 = vpop.f32.mrf.mxu0
        %v824 = vadd.f32 0.0, %v823
        %v825 = vpop.f32.mrf.mxu0
        %v826 = vpop.f32.mrf.mxu0
        %v827 = vadd.f32 0.0, %v826
        %v828 = vpop.f32.mrf.mxu0
        %829 = vmatprep.mubr.bf16.mxu0 0
        %830 = vmatmul.mubr.bf16.gmra.mxu0 %v719
        %v831 = vpop.f32.mrf.mxu0
        %v832 = vadd.f32 0.0, %v831
        %v833 = vpop.f32.mrf.mxu0
        %v834 = vpop.f32.mrf.mxu0
        %v835 = vadd.f32 0.0, %v834
        %v836 = vpop.f32.mrf.mxu0
        %837 = vmatprep.mubr.bf16.mxu0 0
        %838 = vmatmul.mubr.bf16.gmra.mxu0 %v720
        %v839 = vpop.f32.mrf.mxu0
        %v840 = vadd.f32 0.0, %v839
        %v841 = vpop.f32.mrf.mxu0
        %v842 = vpop.f32.mrf.mxu0
        %v843 = vadd.f32 0.0, %v842
        %v844 = vpop.f32.mrf.mxu0
        %845 = vmatprep.mubr.bf16.mxu0 0
        %846 = vmatmul.mubr.bf16.gmra.mxu0 %v721
        %v847 = vpop.f32.mrf.mxu0
        %v848 = vadd.f32 0.0, %v847
        %v849 = vpop.f32.mrf.mxu0
        %v850 = vpop.f32.mrf.mxu0
        %v851 = vadd.f32 0.0, %v850
        %v852 = vpop.f32.mrf.mxu0
        %853 = vmatprep.mubr.bf16.mxu0 0
        %854 = vmatmul.mubr.bf16.gmra.mxu0 %v722
        %v855 = vpop.f32.mrf.mxu0
        %v856 = vadd.f32 0.0, %v855
        %v857 = vpop.f32.mrf.mxu0
        %v858 = vpop.f32.mrf.mxu0
        %v859 = vadd.f32 0.0, %v858
        %v860 = vpop.f32.mrf.mxu0
        %861 = vmatprep.mubr.bf16.mxu0 0
        %862 = vmatmul.mubr.bf16.gmra.mxu0 %v723
        %v863 = vpop.f32.mrf.mxu0
        %v864 = vadd.f32 0.0, %v863
        %v865 = vpop.f32.mrf.mxu0
        %v866 = vpop.f32.mrf.mxu0
        %v867 = vadd.f32 0.0, %v866
        %v868 = vpop.f32.mrf.mxu0
        %869 = vmatprep.mubr.bf16.mxu0 0
        %870 = vmatmul.mubr.bf16.gmra.mxu0 %v724
        %v871 = vpop.f32.mrf.mxu0
        %v872 = vadd.f32 0.0, %v871
        %v873 = vpop.f32.mrf.mxu0
        %v874 = vpop.f32.mrf.mxu0
        %v875 = vadd.f32 0.0, %v874
        %v876 = vpop.f32.mrf.mxu0
        %877 = vdwg.mxu0
        %v878 = vadd.f32 %v637, %v816
        %v879 = vadd.f32 %v638, %v819
        %v880 = vadd.f32 %v639, %v824
        %v881 = vadd.f32 %v640, %v827
        %v882 = vadd.f32 %v641, %v832
        %v883 = vadd.f32 %v642, %v835
        %v884 = vadd.f32 %v643, %v840
        %v885 = vadd.f32 %v644, %v843
        %v886 = vadd.f32 %v645, %v848
        %v887 = vadd.f32 %v646, %v851
        %v888 = vadd.f32 %v647, %v856
        %v889 = vadd.f32 %v648, %v859
        %v890 = vadd.f32 %v649, %v864
        %v891 = vadd.f32 %v650, %v867
        %v892 = vadd.f32 %v651, %v872
        %v893 = vadd.f32 %v652, %v875
        %894 = vst [vmem:[#allocation2] sm:$0xff] %v878
        %895 = vst [vmem:[#allocation2 + $0x8] sm:$0xff] %v879
        %896 = vst [vmem:[#allocation2 + $0x10] sm:$0xff] %v880
        %897 = vst [vmem:[#allocation2 + $0x18] sm:$0xff] %v881
        %898 = vst [vmem:[#allocation2 + $0x20] sm:$0xff] %v882
        %899 = vst [vmem:[#allocation2 + $0x28] sm:$0xff] %v883
        %900 = vst [vmem:[#allocation2 + $0x30] sm:$0xff] %v884
        %901 = vst [vmem:[#allocation2 + $0x38] sm:$0xff] %v885
        %902 = vst [vmem:[#allocation2 + $0x40] sm:$0xff] %v886
        %903 = vst [vmem:[#allocation2 + $0x48] sm:$0xff] %v887
        %904 = vst [vmem:[#allocation2 + $0x50] sm:$0xff] %v888
        %905 = vst [vmem:[#allocation2 + $0x58] sm:$0xff] %v889
        %906 = vst [vmem:[#allocation2 + $0x60] sm:$0xff] %v890
        %907 = vst [vmem:[#allocation2 + $0x68] sm:$0xff] %v891
        %908 = vst [vmem:[#allocation2 + $0x70] sm:$0xff] %v892
        %909 = vst [vmem:[#allocation2 + $0x78] sm:$0xff] %v893
        %p910 = scmp.eq.s32.totalorder %s29, 1
        // Predicated region
        $region110: #{gaegru_forward.2} parent=100 // pred_check
          %p911 = pneg %p910
        $region111: #{gaegru_forward.2} parent=100 // pred_check_branch
          %913 = sbr.rel (%p911) target = $region113
        $region112: #{gaegru_forward.2} parent=100 // pred_region
          %v914 = vld [vmem:[#allocation2] sm:$0xff]
          %v915 = vld [vmem:[#allocation2 + $0x8] sm:$0xff]
          %v916 = vld [vmem:[#allocation2 + $0x10] sm:$0xff]
          %v917 = vld [vmem:[#allocation2 + $0x18] sm:$0xff]
          %v918 = vld [vmem:[#allocation2 + $0x20] sm:$0xff]
          %v919 = vld [vmem:[#allocation2 + $0x28] sm:$0xff]
          %v920 = vld [vmem:[#allocation2 + $0x30] sm:$0xff]
          %v921 = vld [vmem:[#allocation2 + $0x38] sm:$0xff]
          %v922 = vld [vmem:[#allocation2 + $0x40] sm:$0xff]
          %v923 = vld [vmem:[#allocation2 + $0x48] sm:$0xff]
          %v924 = vld [vmem:[#allocation2 + $0x50] sm:$0xff]
          %v925 = vld [vmem:[#allocation2 + $0x58] sm:$0xff]
          %v926 = vld [vmem:[#allocation2 + $0x60] sm:$0xff]
          %v927 = vld [vmem:[#allocation2 + $0x68] sm:$0xff]
          %v928 = vld [vmem:[#allocation2 + $0x70] sm:$0xff]
          %v929 = vld [vmem:[#allocation2 + $0x78] sm:$0xff]
          %v930 = vld [vmem:[%s596] sm:$0xff]
          %v931 = vld [vmem:[%s596 + $0x8] sm:$0xff]
          %v932 = vld [vmem:[%s596 + $0x10] sm:$0xff]
          %v933 = vld [vmem:[%s596 + $0x18] sm:$0xff]
          %v934 = vld [vmem:[%s596 + $0x20] sm:$0xff]
          %v935 = vld [vmem:[%s596 + $0x28] sm:$0xff]
          %v936 = vld [vmem:[%s596 + $0x30] sm:$0xff]
          %v937 = vld [vmem:[%s596 + $0x38] sm:$0xff]
          %v938 = vld [vmem:[%s596 + $0x40] sm:$0xff]
          %v939 = vld [vmem:[%s596 + $0x48] sm:$0xff]
          %v940 = vld [vmem:[%s596 + $0x50] sm:$0xff]
          %v941 = vld [vmem:[%s596 + $0x58] sm:$0xff]
          %v942 = vld [vmem:[%s596 + $0x60] sm:$0xff]
          %v943 = vld [vmem:[%s596 + $0x68] sm:$0xff]
          %v944 = vld [vmem:[%s596 + $0x70] sm:$0xff]
          %v945 = vld [vmem:[%s596 + $0x78] sm:$0xff]
          %947 = vset.pattern.permute.xlu0 0
          %948 = vperm.xlu0 %947, %v930
          %v949 = vpop.permute.xlu0 %948
          %952 = vset.pattern.permute.xlu0 0
          %953 = vperm.xlu0 %952, %v931
          %v954 = vpop.permute.xlu0 %953
          %957 = vset.pattern.permute.xlu0 0
          %958 = vperm.xlu0 %957, %v932
          %v959 = vpop.permute.xlu0 %958
          %962 = vset.pattern.permute.xlu0 0
          %963 = vperm.xlu0 %962, %v933
          %v964 = vpop.permute.xlu0 %963
          %967 = vset.pattern.permute.xlu0 0
          %968 = vperm.xlu0 %967, %v934
          %v969 = vpop.permute.xlu0 %968
          %972 = vset.pattern.permute.xlu0 0
          %973 = vperm.xlu0 %972, %v935
          %v974 = vpop.permute.xlu0 %973
          %977 = vset.pattern.permute.xlu0 0
          %978 = vperm.xlu0 %977, %v936
          %v979 = vpop.permute.xlu0 %978
          %982 = vset.pattern.permute.xlu0 0
          %983 = vperm.xlu0 %982, %v937
          %v984 = vpop.permute.xlu0 %983
          %987 = vset.pattern.permute.xlu0 0
          %988 = vperm.xlu0 %987, %v938
          %v989 = vpop.permute.xlu0 %988
          %992 = vset.pattern.permute.xlu0 0
          %993 = vperm.xlu0 %992, %v939
          %v994 = vpop.permute.xlu0 %993
          %997 = vset.pattern.permute.xlu0 0
          %998 = vperm.xlu0 %997, %v940
          %v999 = vpop.permute.xlu0 %998
          %1002 = vset.pattern.permute.xlu0 0
          %1003 = vperm.xlu0 %1002, %v941
          %v1004 = vpop.permute.xlu0 %1003
          %1007 = vset.pattern.permute.xlu0 0
          %1008 = vperm.xlu0 %1007, %v942
          %v1009 = vpop.permute.xlu0 %1008
          %1012 = vset.pattern.permute.xlu0 0
          %1013 = vperm.xlu0 %1012, %v943
          %v1014 = vpop.permute.xlu0 %1013
          %1017 = vset.pattern.permute.xlu0 0
          %1018 = vperm.xlu0 %1017, %v944
          %v1019 = vpop.permute.xlu0 %1018
          %1022 = vset.pattern.permute.xlu0 0
          %1023 = vperm.xlu0 %1022, %v945
          %v1024 = vpop.permute.xlu0 %1023
          %v1026 = vmul.f32 %v914, %v949
          %v1027 = vmul.f32 %v915, %v954
          %v1028 = vmul.f32 %v916, %v959
          %v1029 = vmul.f32 %v917, %v964
          %v1030 = vmul.f32 %v918, %v969
          %v1031 = vmul.f32 %v919, %v974
          %v1032 = vmul.f32 %v920, %v979
          %v1033 = vmul.f32 %v921, %v984
          %v1034 = vmul.f32 %v922, %v989
          %v1035 = vmul.f32 %v923, %v994
          %v1036 = vmul.f32 %v924, %v999
          %v1037 = vmul.f32 %v925, %v1004
          %v1038 = vmul.f32 %v926, %v1009
          %v1039 = vmul.f32 %v927, %v1014
          %v1040 = vmul.f32 %v928, %v1019
          %v1041 = vmul.f32 %v929, %v1024
          %v1042 = vld [vmem:[%s4] sm:$0x1]
          %v1044 = vlaneseq
          %v1045 = vshrl.u32 %v1044, 7
          %v1046 = vsub.s32 0, %v1045
          %v1047 = vrot.slane %v1042, %v1046
          %v1049 = vadd.f32 %v1026, %v1047
          %v1050 = vadd.f32 %v1027, %v1047
          %v1051 = vadd.f32 %v1028, %v1047
          %v1052 = vadd.f32 %v1029, %v1047
          %v1053 = vadd.f32 %v1030, %v1047
          %v1054 = vadd.f32 %v1031, %v1047
          %v1055 = vadd.f32 %v1032, %v1047
          %v1056 = vadd.f32 %v1033, %v1047
          %v1057 = vadd.f32 %v1034, %v1047
          %v1058 = vadd.f32 %v1035, %v1047
          %v1059 = vadd.f32 %v1036, %v1047
          %v1060 = vadd.f32 %v1037, %v1047
          %v1061 = vadd.f32 %v1038, %v1047
          %v1062 = vadd.f32 %v1039, %v1047
          %v1063 = vadd.f32 %v1040, %v1047
          %v1064 = vadd.f32 %v1041, %v1047
          %v1065 = vmax.f32 %v1049, 0.0
          %v1066 = vmax.f32 %v1050, 0.0
          %v1067 = vmax.f32 %v1051, 0.0
          %v1068 = vmax.f32 %v1052, 0.0
          %v1069 = vmax.f32 %v1053, 0.0
          %v1070 = vmax.f32 %v1054, 0.0
          %v1071 = vmax.f32 %v1055, 0.0
          %v1072 = vmax.f32 %v1056, 0.0
          %v1073 = vmax.f32 %v1057, 0.0
          %v1074 = vmax.f32 %v1058, 0.0
          %v1075 = vmax.f32 %v1059, 0.0
          %v1076 = vmax.f32 %v1060, 0.0
          %v1077 = vmax.f32 %v1061, 0.0
          %v1078 = vmax.f32 %v1062, 0.0
          %v1079 = vmax.f32 %v1063, 0.0
          %v1080 = vmax.f32 %v1064, 0.0
          %v1081 = vld [vmem:[%s602] sm:$0xff]
          %v1082 = vld [vmem:[%s602 + $0x8] sm:$0xff]
          %v1083 = vld [vmem:[%s602 + $0x10] sm:$0xff]
          %v1084 = vld [vmem:[%s602 + $0x18] sm:$0xff]
          %v1085 = vld [vmem:[%s602 + $0x20] sm:$0xff]
          %v1086 = vld [vmem:[%s602 + $0x28] sm:$0xff]
          %v1087 = vld [vmem:[%s602 + $0x30] sm:$0xff]
          %v1088 = vld [vmem:[%s602 + $0x38] sm:$0xff]
          %v1089 = vld [vmem:[%s602 + $0x40] sm:$0xff]
          %v1090 = vld [vmem:[%s602 + $0x48] sm:$0xff]
          %v1091 = vld [vmem:[%s602 + $0x50] sm:$0xff]
          %v1092 = vld [vmem:[%s602 + $0x58] sm:$0xff]
          %v1093 = vld [vmem:[%s602 + $0x60] sm:$0xff]
          %v1094 = vld [vmem:[%s602 + $0x68] sm:$0xff]
          %v1095 = vld [vmem:[%s602 + $0x70] sm:$0xff]
          %v1096 = vld [vmem:[%s602 + $0x78] sm:$0xff]
          %v1097 = vpack.c.bf16 %v1066, %v1065
          %v1098 = vpack.c.bf16 %v1068, %v1067
          %v1099 = vpack.c.bf16 %v1070, %v1069
          %v1100 = vpack.c.bf16 %v1072, %v1071
          %v1101 = vpack.c.bf16 %v1074, %v1073
          %v1102 = vpack.c.bf16 %v1076, %v1075
          %v1103 = vpack.c.bf16 %v1078, %v1077
          %v1104 = vpack.c.bf16 %v1080, %v1079
          %v1113 = vunpack.c.l.b16 %v1097
          %v1114 = vunpack.c.h.b16 %v1097
          %v1115 = vunpack.c.l.b16 %v1098
          %v1116 = vunpack.c.h.b16 %v1098
          %v1117 = vunpack.c.l.b16 %v1099
          %v1118 = vunpack.c.h.b16 %v1099
          %v1119 = vunpack.c.l.b16 %v1100
          %v1120 = vunpack.c.h.b16 %v1100
          %v1121 = vunpack.c.l.b16 %v1101
          %v1122 = vunpack.c.h.b16 %v1101
          %v1123 = vunpack.c.l.b16 %v1102
          %v1124 = vunpack.c.h.b16 %v1102
          %v1125 = vunpack.c.l.b16 %v1103
          %v1126 = vunpack.c.h.b16 %v1103
          %v1127 = vunpack.c.l.b16 %v1104
          %v1128 = vunpack.c.h.b16 %v1104
          %v1129 = vpack.c.b16 %v1113, %v1113
          %v1130 = vpack.c.b16 %v1114, %v1114
          %v1131 = vpack.c.b16 %v1115, %v1115
          %v1132 = vpack.c.b16 %v1116, %v1116
          %v1133 = vpack.c.b16 %v1117, %v1117
          %v1134 = vpack.c.b16 %v1118, %v1118
          %v1135 = vpack.c.b16 %v1119, %v1119
          %v1136 = vpack.c.b16 %v1120, %v1120
          %v1137 = vpack.c.b16 %v1121, %v1121
          %v1138 = vpack.c.b16 %v1122, %v1122
          %v1139 = vpack.c.b16 %v1123, %v1123
          %v1140 = vpack.c.b16 %v1124, %v1124
          %v1141 = vpack.c.b16 %v1125, %v1125
          %v1142 = vpack.c.b16 %v1126, %v1126
          %v1143 = vpack.c.b16 %v1127, %v1127
          %v1144 = vpack.c.b16 %v1128, %v1128
          %1161 = vst [vmem:[#allocation3] sm:$0xf] %v1129
          %1162 = vst [vmem:[#allocation3 + $0x8] sm:$0xf] %v1130
          %1163 = vst [vmem:[#allocation3 + $0x10] sm:$0xf] %v1131
          %1164 = vst [vmem:[#allocation3 + $0x18] sm:$0xf] %v1132
          %1165 = vst [vmem:[#allocation3 + $0x20] sm:$0xf] %v1133
          %1166 = vst [vmem:[#allocation3 + $0x28] sm:$0xf] %v1134
          %1167 = vst [vmem:[#allocation3 + $0x30] sm:$0xf] %v1135
          %1168 = vst [vmem:[#allocation3 + $0x38] sm:$0xf] %v1136
          %1169 = vst [vmem:[#allocation3 + $0x40] sm:$0xf] %v1137
          %1170 = vst [vmem:[#allocation3 + $0x48] sm:$0xf] %v1138
          %1171 = vst [vmem:[#allocation3 + $0x50] sm:$0xf] %v1139
          %1172 = vst [vmem:[#allocation3 + $0x58] sm:$0xf] %v1140
          %1173 = vst [vmem:[#allocation3 + $0x60] sm:$0xf] %v1141
          %1174 = vst [vmem:[#allocation3 + $0x68] sm:$0xf] %v1142
          %1175 = vst [vmem:[#allocation3 + $0x70] sm:$0xf] %v1143
          %1176 = vst [vmem:[#allocation3 + $0x78] sm:$0xf] %v1144
          %v1177 = vpack.c.bf16 %v1082, %v1081
          %v1178 = vpack.c.bf16 %v1084, %v1083
          %v1179 = vpack.c.bf16 %v1086, %v1085
          %v1180 = vpack.c.bf16 %v1088, %v1087
          %v1181 = vpack.c.bf16 %v1090, %v1089
          %v1182 = vpack.c.bf16 %v1092, %v1091
          %v1183 = vpack.c.bf16 %v1094, %v1093
          %v1184 = vpack.c.bf16 %v1096, %v1095
          %v1193 = vunpack.c.l.b16 %v1177
          %v1194 = vunpack.c.h.b16 %v1177
          %v1195 = vunpack.c.l.b16 %v1178
          %v1196 = vunpack.c.h.b16 %v1178
          %v1197 = vunpack.c.l.b16 %v1179
          %v1198 = vunpack.c.h.b16 %v1179
          %v1199 = vunpack.c.l.b16 %v1180
          %v1200 = vunpack.c.h.b16 %v1180
          %v1201 = vunpack.c.l.b16 %v1181
          %v1202 = vunpack.c.h.b16 %v1181
          %v1203 = vunpack.c.l.b16 %v1182
          %v1204 = vunpack.c.h.b16 %v1182
          %v1205 = vunpack.c.l.b16 %v1183
          %v1206 = vunpack.c.h.b16 %v1183
          %v1207 = vunpack.c.l.b16 %v1184
          %v1208 = vunpack.c.h.b16 %v1184
          %v1209 = vpack.c.b16 %v1193, %v1193
          %v1210 = vpack.c.b16 %v1194, %v1194
          %v1211 = vpack.c.b16 %v1195, %v1195
          %v1212 = vpack.c.b16 %v1196, %v1196
          %v1213 = vpack.c.b16 %v1197, %v1197
          %v1214 = vpack.c.b16 %v1198, %v1198
          %v1215 = vpack.c.b16 %v1199, %v1199
          %v1216 = vpack.c.b16 %v1200, %v1200
          %v1217 = vpack.c.b16 %v1201, %v1201
          %v1218 = vpack.c.b16 %v1202, %v1202
          %v1219 = vpack.c.b16 %v1203, %v1203
          %v1220 = vpack.c.b16 %v1204, %v1204
          %v1221 = vpack.c.b16 %v1205, %v1205
          %v1222 = vpack.c.b16 %v1206, %v1206
          %v1223 = vpack.c.b16 %v1207, %v1207
          %v1224 = vpack.c.b16 %v1208, %v1208
          %1241 = vst [vmem:[#allocation3 + $0x4] sm:$0xf] %v1209
          %1242 = vst [vmem:[#allocation3 + $0xc] sm:$0xf] %v1210
          %1243 = vst [vmem:[#allocation3 + $0x14] sm:$0xf] %v1211
          %1244 = vst [vmem:[#allocation3 + $0x1c] sm:$0xf] %v1212
          %1245 = vst [vmem:[#allocation3 + $0x24] sm:$0xf] %v1213
          %1246 = vst [vmem:[#allocation3 + $0x2c] sm:$0xf] %v1214
          %1247 = vst [vmem:[#allocation3 + $0x34] sm:$0xf] %v1215
          %1248 = vst [vmem:[#allocation3 + $0x3c] sm:$0xf] %v1216
          %1249 = vst [vmem:[#allocation3 + $0x44] sm:$0xf] %v1217
          %1250 = vst [vmem:[#allocation3 + $0x4c] sm:$0xf] %v1218
          %1251 = vst [vmem:[#allocation3 + $0x54] sm:$0xf] %v1219
          %1252 = vst [vmem:[#allocation3 + $0x5c] sm:$0xf] %v1220
          %1253 = vst [vmem:[#allocation3 + $0x64] sm:$0xf] %v1221
          %1254 = vst [vmem:[#allocation3 + $0x6c] sm:$0xf] %v1222
          %1255 = vst [vmem:[#allocation3 + $0x74] sm:$0xf] %v1223
          %1256 = vst [vmem:[#allocation3 + $0x7c] sm:$0xf] %v1224
          %v1257 = vld [vmem:[#allocation3] sm:$0xff]
          %v1258 = vld [vmem:[#allocation3 + $0x8] sm:$0xff]
          %v1259 = vld [vmem:[#allocation3 + $0x10] sm:$0xff]
          %v1260 = vld [vmem:[#allocation3 + $0x18] sm:$0xff]
          %v1261 = vld [vmem:[#allocation3 + $0x20] sm:$0xff]
          %v1262 = vld [vmem:[#allocation3 + $0x28] sm:$0xff]
          %v1263 = vld [vmem:[#allocation3 + $0x30] sm:$0xff]
          %v1264 = vld [vmem:[#allocation3 + $0x38] sm:$0xff]
          %v1265 = vld [vmem:[#allocation3 + $0x40] sm:$0xff]
          %v1266 = vld [vmem:[#allocation3 + $0x48] sm:$0xff]
          %v1267 = vld [vmem:[#allocation3 + $0x50] sm:$0xff]
          %v1268 = vld [vmem:[#allocation3 + $0x58] sm:$0xff]
          %v1269 = vld [vmem:[#allocation3 + $0x60] sm:$0xff]
          %v1270 = vld [vmem:[#allocation3 + $0x68] sm:$0xff]
          %v1271 = vld [vmem:[#allocation3 + $0x70] sm:$0xff]
          %v1272 = vld [vmem:[#allocation3 + $0x78] sm:$0xff]
          %v1273 = vld [vmem:[%s5] sm:$0xff]
          %v1274 = vld [vmem:[%s5 + $0x8] sm:$0xff]
          %v1275 = vld [vmem:[%s5 + $0x10] sm:$0xff]
          %v1276 = vld [vmem:[%s5 + $0x18] sm:$0xff]
          %v1277 = vld [vmem:[%s5 + $0x20] sm:$0xff]
          %v1278 = vld [vmem:[%s5 + $0x28] sm:$0xff]
          %v1279 = vld [vmem:[%s5 + $0x30] sm:$0xff]
          %v1280 = vld [vmem:[%s5 + $0x38] sm:$0xff]
          %v1281 = vld [vmem:[%s5 + $0x40] sm:$0xff]
          %v1282 = vld [vmem:[%s5 + $0x48] sm:$0xff]
          %v1283 = vld [vmem:[%s5 + $0x50] sm:$0xff]
          %v1284 = vld [vmem:[%s5 + $0x58] sm:$0xff]
          %v1285 = vld [vmem:[%s5 + $0x60] sm:$0xff]
          %v1286 = vld [vmem:[%s5 + $0x68] sm:$0xff]
          %v1287 = vld [vmem:[%s5 + $0x70] sm:$0xff]
          %v1288 = vld [vmem:[%s5 + $0x78] sm:$0xff]
          %v1289 = vld [vmem:[%s5 + $0x80] sm:$0xff]
          %v1290 = vld [vmem:[%s5 + $0x88] sm:$0xff]
          %v1291 = vld [vmem:[%s5 + $0x90] sm:$0xff]
          %v1292 = vld [vmem:[%s5 + $0x98] sm:$0xff]
          %v1293 = vld [vmem:[%s5 + $0xa0] sm:$0xff]
          %v1294 = vld [vmem:[%s5 + $0xa8] sm:$0xff]
          %v1295 = vld [vmem:[%s5 + $0xb0] sm:$0xff]
          %v1296 = vld [vmem:[%s5 + $0xb8] sm:$0xff]
          %v1297 = vld [vmem:[%s5 + $0xc0] sm:$0xff]
          %v1298 = vld [vmem:[%s5 + $0xc8] sm:$0xff]
          %v1299 = vld [vmem:[%s5 + $0xd0] sm:$0xff]
          %v1300 = vld [vmem:[%s5 + $0xd8] sm:$0xff]
          %v1301 = vld [vmem:[%s5 + $0xe0] sm:$0xff]
          %v1302 = vld [vmem:[%s5 + $0xe8] sm:$0xff]
          %v1303 = vld [vmem:[%s5 + $0xf0] sm:$0xff]
          %v1304 = vld [vmem:[%s5 + $0xf8] sm:$0xff]
          %v1305 = vld [vmem:[%s6] sm:$0x3]
          %v1307 = vlaneseq
          %v1308 = vshrl.u32 %v1307, 7
          %v1309 = vsub.s32 0, %v1308
          %v1310 = vrot.slane %v1305, %v1309
          %v1311 = vlaneseq
          %v1312 = vshrl.u32 %v1311, 7
          %v1313 = vsub.s32 1, %v1312
          %v1314 = vrot.slane %v1305, %v1313
          %v1333 = vunpack.c.l.b16 %v1257
          %v1334 = vunpack.c.h.b16 %v1257
          %v1335 = vunpack.c.l.b16 %v1258
          %v1336 = vunpack.c.h.b16 %v1258
          %v1337 = vunpack.c.l.b16 %v1259
          %v1338 = vunpack.c.h.b16 %v1259
          %v1339 = vunpack.c.l.b16 %v1260
          %v1340 = vunpack.c.h.b16 %v1260
          %v1341 = vunpack.c.l.b16 %v1261
          %v1342 = vunpack.c.h.b16 %v1261
          %v1343 = vunpack.c.l.b16 %v1262
          %v1344 = vunpack.c.h.b16 %v1262
          %v1345 = vunpack.c.l.b16 %v1263
          %v1346 = vunpack.c.h.b16 %v1263
          %v1347 = vunpack.c.l.b16 %v1264
          %v1348 = vunpack.c.h.b16 %v1264
          %v1349 = vunpack.c.l.b16 %v1265
          %v1350 = vunpack.c.h.b16 %v1265
          %v1351 = vunpack.c.l.b16 %v1266
          %v1352 = vunpack.c.h.b16 %v1266
          %v1353 = vunpack.c.l.b16 %v1267
          %v1354 = vunpack.c.h.b16 %v1267
          %v1355 = vunpack.c.l.b16 %v1268
          %v1356 = vunpack.c.h.b16 %v1268
          %v1357 = vunpack.c.l.b16 %v1269
          %v1358 = vunpack.c.h.b16 %v1269
          %v1359 = vunpack.c.l.b16 %v1270
          %v1360 = vunpack.c.h.b16 %v1270
          %v1361 = vunpack.c.l.b16 %v1271
          %v1362 = vunpack.c.h.b16 %v1271
          %v1363 = vunpack.c.l.b16 %v1272
          %v1364 = vunpack.c.h.b16 %v1272
          %v1365 = vpack.c.b16 %v1335, %v1333
          %v1366 = vpack.c.b16 %v1336, %v1334
          %v1367 = vpack.c.b16 %v1339, %v1337
          %v1368 = vpack.c.b16 %v1340, %v1338
          %v1369 = vpack.c.b16 %v1343, %v1341
          %v1370 = vpack.c.b16 %v1344, %v1342
          %v1371 = vpack.c.b16 %v1347, %v1345
          %v1372 = vpack.c.b16 %v1348, %v1346
          %v1373 = vpack.c.b16 %v1351, %v1349
          %v1374 = vpack.c.b16 %v1352, %v1350
          %v1375 = vpack.c.b16 %v1355, %v1353
          %v1376 = vpack.c.b16 %v1356, %v1354
          %v1377 = vpack.c.b16 %v1359, %v1357
          %v1378 = vpack.c.b16 %v1360, %v1358
          %v1379 = vpack.c.b16 %v1363, %v1361
          %v1380 = vpack.c.b16 %v1364, %v1362
          %v1429 = vunpack.c.l.b16 %v1273
          %v1430 = vunpack.c.h.b16 %v1273
          %v1431 = vunpack.c.l.b16 %v1274
          %v1432 = vunpack.c.h.b16 %v1274
          %v1433 = vunpack.c.l.b16 %v1275
          %v1434 = vunpack.c.h.b16 %v1275
          %v1435 = vunpack.c.l.b16 %v1276
          %v1436 = vunpack.c.h.b16 %v1276
          %v1437 = vunpack.c.l.b16 %v1277
          %v1438 = vunpack.c.h.b16 %v1277
          %v1439 = vunpack.c.l.b16 %v1278
          %v1440 = vunpack.c.h.b16 %v1278
          %v1441 = vunpack.c.l.b16 %v1279
          %v1442 = vunpack.c.h.b16 %v1279
          %v1443 = vunpack.c.l.b16 %v1280
          %v1444 = vunpack.c.h.b16 %v1280
          %v1445 = vunpack.c.l.b16 %v1281
          %v1446 = vunpack.c.h.b16 %v1281
          %v1447 = vunpack.c.l.b16 %v1282
          %v1448 = vunpack.c.h.b16 %v1282
          %v1449 = vunpack.c.l.b16 %v1283
          %v1450 = vunpack.c.h.b16 %v1283
          %v1451 = vunpack.c.l.b16 %v1284
          %v1452 = vunpack.c.h.b16 %v1284
          %v1453 = vunpack.c.l.b16 %v1285
          %v1454 = vunpack.c.h.b16 %v1285
          %v1455 = vunpack.c.l.b16 %v1286
          %v1456 = vunpack.c.h.b16 %v1286
          %v1457 = vunpack.c.l.b16 %v1287
          %v1458 = vunpack.c.h.b16 %v1287
          %v1459 = vunpack.c.l.b16 %v1288
          %v1460 = vunpack.c.h.b16 %v1288
          %v1461 = vunpack.c.l.b16 %v1289
          %v1462 = vunpack.c.h.b16 %v1289
          %v1463 = vunpack.c.l.b16 %v1290
          %v1464 = vunpack.c.h.b16 %v1290
          %v1465 = vunpack.c.l.b16 %v1291
          %v1466 = vunpack.c.h.b16 %v1291
          %v1467 = vunpack.c.l.b16 %v1292
          %v1468 = vunpack.c.h.b16 %v1292
          %v1469 = vunpack.c.l.b16 %v1293
          %v1470 = vunpack.c.h.b16 %v1293
          %v1471 = vunpack.c.l.b16 %v1294
          %v1472 = vunpack.c.h.b16 %v1294
          %v1473 = vunpack.c.l.b16 %v1295
          %v1474 = vunpack.c.h.b16 %v1295
          %v1475 = vunpack.c.l.b16 %v1296
          %v1476 = vunpack.c.h.b16 %v1296
          %v1477 = vunpack.c.l.b16 %v1297
          %v1478 = vunpack.c.h.b16 %v1297
          %v1479 = vunpack.c.l.b16 %v1298
          %v1480 = vunpack.c.h.b16 %v1298
          %v1481 = vunpack.c.l.b16 %v1299
          %v1482 = vunpack.c.h.b16 %v1299
          %v1483 = vunpack.c.l.b16 %v1300
          %v1484 = vunpack.c.h.b16 %v1300
          %v1485 = vunpack.c.l.b16 %v1301
          %v1486 = vunpack.c.h.b16 %v1301
          %v1487 = vunpack.c.l.b16 %v1302
          %v1488 = vunpack.c.h.b16 %v1302
          %v1489 = vunpack.c.l.b16 %v1303
          %v1490 = vunpack.c.h.b16 %v1303
          %v1491 = vunpack.c.l.b16 %v1304
          %v1492 = vunpack.c.h.b16 %v1304
          %v1493 = vpack.c.b16 %v1431, %v1429
          %v1494 = vpack.c.b16 %v1432, %v1430
          %v1495 = vpack.c.b16 %v1435, %v1433
          %v1496 = vpack.c.b16 %v1436, %v1434
          %v1497 = vpack.c.b16 %v1439, %v1437
          %v1498 = vpack.c.b16 %v1440, %v1438
          %v1499 = vpack.c.b16 %v1443, %v1441
          %v1500 = vpack.c.b16 %v1444, %v1442
          %v1501 = vpack.c.b16 %v1447, %v1445
          %v1502 = vpack.c.b16 %v1448, %v1446
          %v1503 = vpack.c.b16 %v1451, %v1449
          %v1504 = vpack.c.b16 %v1452, %v1450
          %v1505 = vpack.c.b16 %v1455, %v1453
          %v1506 = vpack.c.b16 %v1456, %v1454
          %v1507 = vpack.c.b16 %v1459, %v1457
          %v1508 = vpack.c.b16 %v1460, %v1458
          %v1509 = vpack.c.b16 %v1463, %v1461
          %v1510 = vpack.c.b16 %v1464, %v1462
          %v1511 = vpack.c.b16 %v1467, %v1465
          %v1512 = vpack.c.b16 %v1468, %v1466
          %v1513 = vpack.c.b16 %v1471, %v1469
          %v1514 = vpack.c.b16 %v1472, %v1470
          %v1515 = vpack.c.b16 %v1475, %v1473
          %v1516 = vpack.c.b16 %v1476, %v1474
          %v1517 = vpack.c.b16 %v1479, %v1477
          %v1518 = vpack.c.b16 %v1480, %v1478
          %v1519 = vpack.c.b16 %v1483, %v1481
          %v1520 = vpack.c.b16 %v1484, %v1482
          %v1521 = vpack.c.b16 %v1487, %v1485
          %v1522 = vpack.c.b16 %v1488, %v1486
          %v1523 = vpack.c.b16 %v1491, %v1489
          %v1524 = vpack.c.b16 %v1492, %v1490
          %1557 = vmatprep.subr.bf16.mxu0 %v1508
          %1558 = vmatpush1.bf16.msra.mxu0 %v1507
          %1559 = vmatprep.subr.bf16.mxu0 %v1506
          %1560 = vmatpush1.bf16.msra.mxu0 %v1505
          %1561 = vmatprep.subr.bf16.mxu0 %v1504
          %1562 = vmatpush1.bf16.msra.mxu0 %v1503
          %1563 = vmatprep.subr.bf16.mxu0 %v1502
          %1564 = vmatpush1.bf16.msra.mxu0 %v1501
          %1565 = vmatprep.subr.bf16.mxu0 %v1500
          %1566 = vmatpush1.bf16.msra.mxu0 %v1499
          %1567 = vmatprep.subr.bf16.mxu0 %v1498
          %1568 = vmatpush1.bf16.msra.mxu0 %v1497
          %1569 = vmatprep.subr.bf16.mxu0 %v1496
          %1570 = vmatpush1.bf16.msra.mxu0 %v1495
          %1571 = vmatprep.subr.bf16.mxu0 %v1494
          %1572 = vmatpush1.bf16.msra.mxu0 %v1493
          %1573 = vmatprep.subr.bf16.mxu0 %v1524
          %1574 = vmatpush2.bf16.msra.mxu0 %v1523
          %1575 = vmatprep.subr.bf16.mxu0 %v1522
          %1576 = vmatpush2.bf16.msra.mxu0 %v1521
          %1577 = vmatprep.subr.bf16.mxu0 %v1520
          %1578 = vmatpush2.bf16.msra.mxu0 %v1519
          %1579 = vmatprep.subr.bf16.mxu0 %v1518
          %1580 = vmatpush2.bf16.msra.mxu0 %v1517
          %1581 = vmatprep.subr.bf16.mxu0 %v1516
          %1582 = vmatpush2.bf16.msra.mxu0 %v1515
          %1583 = vmatprep.subr.bf16.mxu0 %v1514
          %1584 = vmatpush2.bf16.msra.mxu0 %v1513
          %1585 = vmatprep.subr.bf16.mxu0 %v1512
          %1586 = vmatpush2.bf16.msra.mxu0 %v1511
          %1587 = vmatprep.subr.bf16.mxu0 %v1510
          %1588 = vmatpush2.bf16.msra.mxu0 %v1509
          %1589 = vmatprep.mubr.bf16.mxu0 %v1366
          %1590 = vmatmul.mubr.bf16.gmra.mxu0 %v1365
          %v1591 = vpop.f32.mrf.mxu0
          %v1592 = vadd.f32 %v1310, %v1591
          %v1593 = vpop.f32.mrf.mxu0
          %v1594 = vadd.f32 %v1314, %v1593
          %v1595 = vpop.f32.mrf.mxu0
          %v1596 = vadd.f32 %v1310, %v1595
          %v1597 = vpop.f32.mrf.mxu0
          %v1598 = vadd.f32 %v1314, %v1597
          %1599 = vmatprep.mubr.bf16.mxu0 %v1368
          %1600 = vmatmul.mubr.bf16.gmra.mxu0 %v1367
          %v1601 = vpop.f32.mrf.mxu0
          %v1602 = vadd.f32 %v1310, %v1601
          %v1603 = vpop.f32.mrf.mxu0
          %v1604 = vadd.f32 %v1314, %v1603
          %v1605 = vpop.f32.mrf.mxu0
          %v1606 = vadd.f32 %v1310, %v1605
          %v1607 = vpop.f32.mrf.mxu0
          %v1608 = vadd.f32 %v1314, %v1607
          %1609 = vmatprep.mubr.bf16.mxu0 %v1370
          %1610 = vmatmul.mubr.bf16.gmra.mxu0 %v1369
          %v1611 = vpop.f32.mrf.mxu0
          %v1612 = vadd.f32 %v1310, %v1611
          %v1613 = vpop.f32.mrf.mxu0
          %v1614 = vadd.f32 %v1314, %v1613
          %v1615 = vpop.f32.mrf.mxu0
          %v1616 = vadd.f32 %v1310, %v1615
          %v1617 = vpop.f32.mrf.mxu0
          %v1618 = vadd.f32 %v1314, %v1617
          %1619 = vmatprep.mubr.bf16.mxu0 %v1372
          %1620 = vmatmul.mubr.bf16.gmra.mxu0 %v1371
          %v1621 = vpop.f32.mrf.mxu0
          %v1622 = vadd.f32 %v1310, %v1621
          %v1623 = vpop.f32.mrf.mxu0
          %v1624 = vadd.f32 %v1314, %v1623
          %v1625 = vpop.f32.mrf.mxu0
          %v1626 = vadd.f32 %v1310, %v1625
          %v1627 = vpop.f32.mrf.mxu0
          %v1628 = vadd.f32 %v1314, %v1627
          %1629 = vmatprep.mubr.bf16.mxu0 %v1374
          %1630 = vmatmul.mubr.bf16.gmra.mxu0 %v1373
          %v1631 = vpop.f32.mrf.mxu0
          %v1632 = vadd.f32 %v1310, %v1631
          %v1633 = vpop.f32.mrf.mxu0
          %v1634 = vadd.f32 %v1314, %v1633
          %v1635 = vpop.f32.mrf.mxu0
          %v1636 = vadd.f32 %v1310, %v1635
          %v1637 = vpop.f32.mrf.mxu0
          %v1638 = vadd.f32 %v1314, %v1637
          %1639 = vmatprep.mubr.bf16.mxu0 %v1376
          %1640 = vmatmul.mubr.bf16.gmra.mxu0 %v1375
          %v1641 = vpop.f32.mrf.mxu0
          %v1642 = vadd.f32 %v1310, %v1641
          %v1643 = vpop.f32.mrf.mxu0
          %v1644 = vadd.f32 %v1314, %v1643
          %v1645 = vpop.f32.mrf.mxu0
          %v1646 = vadd.f32 %v1310, %v1645
          %v1647 = vpop.f32.mrf.mxu0
          %v1648 = vadd.f32 %v1314, %v1647
          %1649 = vmatprep.mubr.bf16.mxu0 %v1378
          %1650 = vmatmul.mubr.bf16.gmra.mxu0 %v1377
          %v1651 = vpop.f32.mrf.mxu0
          %v1652 = vadd.f32 %v1310, %v1651
          %v1653 = vpop.f32.mrf.mxu0
          %v1654 = vadd.f32 %v1314, %v1653
          %v1655 = vpop.f32.mrf.mxu0
          %v1656 = vadd.f32 %v1310, %v1655
          %v1657 = vpop.f32.mrf.mxu0
          %v1658 = vadd.f32 %v1314, %v1657
          %1659 = vmatprep.mubr.bf16.mxu0 %v1380
          %1660 = vmatmul.mubr.bf16.gmra.mxu0 %v1379
          %v1661 = vpop.f32.mrf.mxu0
          %v1662 = vadd.f32 %v1310, %v1661
          %v1663 = vpop.f32.mrf.mxu0
          %v1664 = vadd.f32 %v1314, %v1663
          %v1665 = vpop.f32.mrf.mxu0
          %v1666 = vadd.f32 %v1310, %v1665
          %v1667 = vpop.f32.mrf.mxu0
          %v1668 = vadd.f32 %v1314, %v1667
          %1669 = vdwg.mxu0
          %v1670 = vxor.u32 %v1592, 2147483648
          %v1671 = vxor.u32 %v1596, 2147483648
          %v1672 = vxor.u32 %v1602, 2147483648
          %v1673 = vxor.u32 %v1606, 2147483648
          %v1674 = vxor.u32 %v1612, 2147483648
          %v1675 = vxor.u32 %v1616, 2147483648
          %v1676 = vxor.u32 %v1622, 2147483648
          %v1677 = vxor.u32 %v1626, 2147483648
          %v1678 = vxor.u32 %v1632, 2147483648
          %v1679 = vxor.u32 %v1636, 2147483648
          %v1680 = vxor.u32 %v1642, 2147483648
          %v1681 = vxor.u32 %v1646, 2147483648
          %v1682 = vxor.u32 %v1652, 2147483648
          %v1683 = vxor.u32 %v1656, 2147483648
          %v1684 = vxor.u32 %v1662, 2147483648
          %v1685 = vxor.u32 %v1666, 2147483648
          %v1686 = vmul.f32 %v1670, 1.442695
          %v1687 = vpow.pop %v1686
          %v1688 = vmul.f32 %v1671, 1.442695
          %v1689 = vpow.pop %v1688
          %v1690 = vmul.f32 %v1672, 1.442695
          %v1691 = vpow.pop %v1690
          %v1692 = vmul.f32 %v1673, 1.442695
          %v1693 = vpow.pop %v1692
          %v1694 = vmul.f32 %v1674, 1.442695
          %v1695 = vpow.pop %v1694
          %v1696 = vmul.f32 %v1675, 1.442695
          %v1697 = vpow.pop %v1696
          %v1698 = vmul.f32 %v1676, 1.442695
          %v1699 = vpow.pop %v1698
          %v1700 = vmul.f32 %v1677, 1.442695
          %v1701 = vpow.pop %v1700
          %v1702 = vmul.f32 %v1678, 1.442695
          %v1703 = vpow.pop %v1702
          %v1704 = vmul.f32 %v1679, 1.442695
          %v1705 = vpow.pop %v1704
          %v1706 = vmul.f32 %v1680, 1.442695
          %v1707 = vpow.pop %v1706
          %v1708 = vmul.f32 %v1681, 1.442695
          %v1709 = vpow.pop %v1708
          %v1710 = vmul.f32 %v1682, 1.442695
          %v1711 = vpow.pop %v1710
          %v1712 = vmul.f32 %v1683, 1.442695
          %v1713 = vpow.pop %v1712
          %v1714 = vmul.f32 %v1684, 1.442695
          %v1715 = vpow.pop %v1714
          %v1716 = vmul.f32 %v1685, 1.442695
          %v1717 = vpow.pop %v1716
          %v1718 = vadd.f32 %v1687, 1.0
          %v1719 = vadd.f32 %v1689, 1.0
          %v1720 = vadd.f32 %v1691, 1.0
          %v1721 = vadd.f32 %v1693, 1.0
          %v1722 = vadd.f32 %v1695, 1.0
          %v1723 = vadd.f32 %v1697, 1.0
          %v1724 = vadd.f32 %v1699, 1.0
          %v1725 = vadd.f32 %v1701, 1.0
          %v1726 = vadd.f32 %v1703, 1.0
          %v1727 = vadd.f32 %v1705, 1.0
          %v1728 = vadd.f32 %v1707, 1.0
          %v1729 = vadd.f32 %v1709, 1.0
          %v1730 = vadd.f32 %v1711, 1.0
          %v1731 = vadd.f32 %v1713, 1.0
          %v1732 = vadd.f32 %v1715, 1.0
          %v1733 = vadd.f32 %v1717, 1.0
          %v1734 = vrcp.pop %v1718
          %v1735 = vmul.f32 1.0, %v1734
          %v1736 = vrcp.pop %v1719
          %v1737 = vmul.f32 1.0, %v1736
          %v1738 = vrcp.pop %v1720
          %v1739 = vmul.f32 1.0, %v1738
          %v1740 = vrcp.pop %v1721
          %v1741 = vmul.f32 1.0, %v1740
          %v1742 = vrcp.pop %v1722
          %v1743 = vmul.f32 1.0, %v1742
          %v1744 = vrcp.pop %v1723
          %v1745 = vmul.f32 1.0, %v1744
          %v1746 = vrcp.pop %v1724
          %v1747 = vmul.f32 1.0, %v1746
          %v1748 = vrcp.pop %v1725
          %v1749 = vmul.f32 1.0, %v1748
          %v1750 = vrcp.pop %v1726
          %v1751 = vmul.f32 1.0, %v1750
          %v1752 = vrcp.pop %v1727
          %v1753 = vmul.f32 1.0, %v1752
          %v1754 = vrcp.pop %v1728
          %v1755 = vmul.f32 1.0, %v1754
          %v1756 = vrcp.pop %v1729
          %v1757 = vmul.f32 1.0, %v1756
          %v1758 = vrcp.pop %v1730
          %v1759 = vmul.f32 1.0, %v1758
          %v1760 = vrcp.pop %v1731
          %v1761 = vmul.f32 1.0, %v1760
          %v1762 = vrcp.pop %v1732
          %v1763 = vmul.f32 1.0, %v1762
          %v1764 = vrcp.pop %v1733
          %v1765 = vmul.f32 1.0, %v1764
          %v1766 = vxor.u32 %v1594, 2147483648
          %v1767 = vxor.u32 %v1598, 2147483648
          %v1768 = vxor.u32 %v1604, 2147483648
          %v1769 = vxor.u32 %v1608, 2147483648
          %v1770 = vxor.u32 %v1614, 2147483648
          %v1771 = vxor.u32 %v1618, 2147483648
          %v1772 = vxor.u32 %v1624, 2147483648
          %v1773 = vxor.u32 %v1628, 2147483648
          %v1774 = vxor.u32 %v1634, 2147483648
          %v1775 = vxor.u32 %v1638, 2147483648
          %v1776 = vxor.u32 %v1644, 2147483648
          %v1777 = vxor.u32 %v1648, 2147483648
          %v1778 = vxor.u32 %v1654, 2147483648
          %v1779 = vxor.u32 %v1658, 2147483648
          %v1780 = vxor.u32 %v1664, 2147483648
          %v1781 = vxor.u32 %v1668, 2147483648
          %v1782 = vmul.f32 %v1766, 1.442695
          %v1783 = vpow.pop %v1782
          %v1784 = vmul.f32 %v1767, 1.442695
          %v1785 = vpow.pop %v1784
          %v1786 = vmul.f32 %v1768, 1.442695
          %v1787 = vpow.pop %v1786
          %v1788 = vmul.f32 %v1769, 1.442695
          %v1789 = vpow.pop %v1788
          %v1790 = vmul.f32 %v1770, 1.442695
          %v1791 = vpow.pop %v1790
          %v1792 = vmul.f32 %v1771, 1.442695
          %v1793 = vpow.pop %v1792
          %v1794 = vmul.f32 %v1772, 1.442695
          %v1795 = vpow.pop %v1794
          %v1796 = vmul.f32 %v1773, 1.442695
          %v1797 = vpow.pop %v1796
          %v1798 = vmul.f32 %v1774, 1.442695
          %v1799 = vpow.pop %v1798
          %v1800 = vmul.f32 %v1775, 1.442695
          %v1801 = vpow.pop %v1800
          %v1802 = vmul.f32 %v1776, 1.442695
          %v1803 = vpow.pop %v1802
          %v1804 = vmul.f32 %v1777, 1.442695
          %v1805 = vpow.pop %v1804
          %v1806 = vmul.f32 %v1778, 1.442695
          %v1807 = vpow.pop %v1806
          %v1808 = vmul.f32 %v1779, 1.442695
          %v1809 = vpow.pop %v1808
          %v1810 = vmul.f32 %v1780, 1.442695
          %v1811 = vpow.pop %v1810
          %v1812 = vmul.f32 %v1781, 1.442695
          %v1813 = vpow.pop %v1812
          %v1814 = vadd.f32 %v1783, 1.0
          %v1815 = vadd.f32 %v1785, 1.0
          %v1816 = vadd.f32 %v1787, 1.0
          %v1817 = vadd.f32 %v1789, 1.0
          %v1818 = vadd.f32 %v1791, 1.0
          %v1819 = vadd.f32 %v1793, 1.0
          %v1820 = vadd.f32 %v1795, 1.0
          %v1821 = vadd.f32 %v1797, 1.0
          %v1822 = vadd.f32 %v1799, 1.0
          %v1823 = vadd.f32 %v1801, 1.0
          %v1824 = vadd.f32 %v1803, 1.0
          %v1825 = vadd.f32 %v1805, 1.0
          %v1826 = vadd.f32 %v1807, 1.0
          %v1827 = vadd.f32 %v1809, 1.0
          %v1828 = vadd.f32 %v1811, 1.0
          %v1829 = vadd.f32 %v1813, 1.0
          %v1830 = vrcp.pop %v1814
          %v1831 = vmul.f32 1.0, %v1830
          %v1832 = vrcp.pop %v1815
          %v1833 = vmul.f32 1.0, %v1832
          %v1834 = vrcp.pop %v1816
          %v1835 = vmul.f32 1.0, %v1834
          %v1836 = vrcp.pop %v1817
          %v1837 = vmul.f32 1.0, %v1836
          %v1838 = vrcp.pop %v1818
          %v1839 = vmul.f32 1.0, %v1838
          %v1840 = vrcp.pop %v1819
          %v1841 = vmul.f32 1.0, %v1840
          %v1842 = vrcp.pop %v1820
          %v1843 = vmul.f32 1.0, %v1842
          %v1844 = vrcp.pop %v1821
          %v1845 = vmul.f32 1.0, %v1844
          %v1846 = vrcp.pop %v1822
          %v1847 = vmul.f32 1.0, %v1846
          %v1848 = vrcp.pop %v1823
          %v1849 = vmul.f32 1.0, %v1848
          %v1850 = vrcp.pop %v1824
          %v1851 = vmul.f32 1.0, %v1850
          %v1852 = vrcp.pop %v1825
          %v1853 = vmul.f32 1.0, %v1852
          %v1854 = vrcp.pop %v1826
          %v1855 = vmul.f32 1.0, %v1854
          %v1856 = vrcp.pop %v1827
          %v1857 = vmul.f32 1.0, %v1856
          %v1858 = vrcp.pop %v1828
          %v1859 = vmul.f32 1.0, %v1858
          %v1860 = vrcp.pop %v1829
          %v1861 = vmul.f32 1.0, %v1860
          %v1862 = vld [vmem:[#allocation3] sm:$0xf]
          %v1863 = vld [vmem:[#allocation3 + $0x8] sm:$0xf]
          %v1864 = vld [vmem:[#allocation3 + $0x10] sm:$0xf]
          %v1865 = vld [vmem:[#allocation3 + $0x18] sm:$0xf]
          %v1866 = vld [vmem:[#allocation3 + $0x20] sm:$0xf]
          %v1867 = vld [vmem:[#allocation3 + $0x28] sm:$0xf]
          %v1868 = vld [vmem:[#allocation3 + $0x30] sm:$0xf]
          %v1869 = vld [vmem:[#allocation3 + $0x38] sm:$0xf]
          %v1870 = vld [vmem:[#allocation3 + $0x40] sm:$0xf]
          %v1871 = vld [vmem:[#allocation3 + $0x48] sm:$0xf]
          %v1872 = vld [vmem:[#allocation3 + $0x50] sm:$0xf]
          %v1873 = vld [vmem:[#allocation3 + $0x58] sm:$0xf]
          %v1874 = vld [vmem:[#allocation3 + $0x60] sm:$0xf]
          %v1875 = vld [vmem:[#allocation3 + $0x68] sm:$0xf]
          %v1876 = vld [vmem:[#allocation3 + $0x70] sm:$0xf]
          %v1877 = vld [vmem:[#allocation3 + $0x78] sm:$0xf]
          %v1878 = vld [vmem:[#allocation3 + $0x4] sm:$0xf]
          %v1879 = vld [vmem:[#allocation3 + $0xc] sm:$0xf]
          %v1880 = vld [vmem:[#allocation3 + $0x14] sm:$0xf]
          %v1881 = vld [vmem:[#allocation3 + $0x1c] sm:$0xf]
          %v1882 = vld [vmem:[#allocation3 + $0x24] sm:$0xf]
          %v1883 = vld [vmem:[#allocation3 + $0x2c] sm:$0xf]
          %v1884 = vld [vmem:[#allocation3 + $0x34] sm:$0xf]
          %v1885 = vld [vmem:[#allocation3 + $0x3c] sm:$0xf]
          %v1886 = vld [vmem:[#allocation3 + $0x44] sm:$0xf]
          %v1887 = vld [vmem:[#allocation3 + $0x4c] sm:$0xf]
          %v1888 = vld [vmem:[#allocation3 + $0x54] sm:$0xf]
          %v1889 = vld [vmem:[#allocation3 + $0x5c] sm:$0xf]
          %v1890 = vld [vmem:[#allocation3 + $0x64] sm:$0xf]
          %v1891 = vld [vmem:[#allocation3 + $0x6c] sm:$0xf]
          %v1892 = vld [vmem:[#allocation3 + $0x74] sm:$0xf]
          %v1893 = vld [vmem:[#allocation3 + $0x7c] sm:$0xf]
          %v1894 = vld [vmem:[%s7] sm:$0xf]
          %v1895 = vld [vmem:[%s7 + $0x4] sm:$0xf]
          %v1896 = vld [vmem:[%s7 + $0x8] sm:$0xf]
          %v1897 = vld [vmem:[%s7 + $0xc] sm:$0xf]
          %v1898 = vld [vmem:[%s7 + $0x10] sm:$0xf]
          %v1899 = vld [vmem:[%s7 + $0x14] sm:$0xf]
          %v1900 = vld [vmem:[%s7 + $0x18] sm:$0xf]
          %v1901 = vld [vmem:[%s7 + $0x1c] sm:$0xf]
          %v1902 = vld [vmem:[%s7 + $0x20] sm:$0xf]
          %v1903 = vld [vmem:[%s7 + $0x24] sm:$0xf]
          %v1904 = vld [vmem:[%s7 + $0x28] sm:$0xf]
          %v1905 = vld [vmem:[%s7 + $0x2c] sm:$0xf]
          %v1906 = vld [vmem:[%s7 + $0x30] sm:$0xf]
          %v1907 = vld [vmem:[%s7 + $0x34] sm:$0xf]
          %v1908 = vld [vmem:[%s7 + $0x38] sm:$0xf]
          %v1909 = vld [vmem:[%s7 + $0x3c] sm:$0xf]
          %v1910 = vld [vmem:[%s8] sm:$0x1]
          %v1912 = vlaneseq
          %v1913 = vshrl.u32 %v1912, 7
          %v1914 = vsub.s32 0, %v1913
          %v1915 = vrot.slane %v1910, %v1914
          %v1933 = vunpack.c.l.b16 %v1862
          %v1934 = vunpack.c.l.b16 %v1863
          %v1935 = vunpack.c.l.b16 %v1864
          %v1936 = vunpack.c.l.b16 %v1865
          %v1937 = vunpack.c.l.b16 %v1866
          %v1938 = vunpack.c.l.b16 %v1867
          %v1939 = vunpack.c.l.b16 %v1868
          %v1940 = vunpack.c.l.b16 %v1869
          %v1941 = vunpack.c.l.b16 %v1870
          %v1942 = vunpack.c.l.b16 %v1871
          %v1943 = vunpack.c.l.b16 %v1872
          %v1944 = vunpack.c.l.b16 %v1873
          %v1945 = vunpack.c.l.b16 %v1874
          %v1946 = vunpack.c.l.b16 %v1875
          %v1947 = vunpack.c.l.b16 %v1876
          %v1948 = vunpack.c.l.b16 %v1877
          %v1949 = vpack.c.b16 %v1934, %v1933
          %v1950 = vpack.c.b16 %v1936, %v1935
          %v1951 = vpack.c.b16 %v1938, %v1937
          %v1952 = vpack.c.b16 %v1940, %v1939
          %v1953 = vpack.c.b16 %v1942, %v1941
          %v1954 = vpack.c.b16 %v1944, %v1943
          %v1955 = vpack.c.b16 %v1946, %v1945
          %v1956 = vpack.c.b16 %v1948, %v1947
          %v1981 = vunpack.c.l.b16 %v1894
          %v1982 = vunpack.c.l.b16 %v1895
          %v1983 = vunpack.c.l.b16 %v1896
          %v1984 = vunpack.c.l.b16 %v1897
          %v1985 = vunpack.c.l.b16 %v1898
          %v1986 = vunpack.c.l.b16 %v1899
          %v1987 = vunpack.c.l.b16 %v1900
          %v1988 = vunpack.c.l.b16 %v1901
          %v1989 = vunpack.c.l.b16 %v1902
          %v1990 = vunpack.c.l.b16 %v1903
          %v1991 = vunpack.c.l.b16 %v1904
          %v1992 = vunpack.c.l.b16 %v1905
          %v1993 = vunpack.c.l.b16 %v1906
          %v1994 = vunpack.c.l.b16 %v1907
          %v1995 = vunpack.c.l.b16 %v1908
          %v1996 = vunpack.c.l.b16 %v1909
          %v1997 = vpack.c.b16 %v1982, %v1981
          %v1998 = vpack.c.b16 %v1984, %v1983
          %v1999 = vpack.c.b16 %v1986, %v1985
          %v2000 = vpack.c.b16 %v1988, %v1987
          %v2001 = vpack.c.b16 %v1990, %v1989
          %v2002 = vpack.c.b16 %v1992, %v1991
          %v2003 = vpack.c.b16 %v1994, %v1993
          %v2004 = vpack.c.b16 %v1996, %v1995
          %2013 = vmatprep.subr.bf16.mxu0 0
          %2014 = vmatpush1.bf16.msra.mxu0 %v2004
          %2015 = vmatprep.subr.bf16.mxu0 0
          %2016 = vmatpush1.bf16.msra.mxu0 %v2003
          %2017 = vmatprep.subr.bf16.mxu0 0
          %2018 = vmatpush1.bf16.msra.mxu0 %v2002
          %2019 = vmatprep.subr.bf16.mxu0 0
          %2020 = vmatpush1.bf16.msra.mxu0 %v2001
          %2021 = vmatprep.subr.bf16.mxu0 0
          %2022 = vmatpush1.bf16.msra.mxu0 %v2000
          %2023 = vmatprep.subr.bf16.mxu0 0
          %2024 = vmatpush1.bf16.msra.mxu0 %v1999
          %2025 = vmatprep.subr.bf16.mxu0 0
          %2026 = vmatpush1.bf16.msra.mxu0 %v1998
          %2027 = vmatprep.subr.bf16.mxu0 0
          %2028 = vmatpush1.bf16.msra.mxu0 %v1997
          %2029 = vmatprep.subr.bf16.mxu0 0
          %2030 = vmatpush2.bf16.msra.mxu0 0
          %2031 = vmatprep.subr.bf16.mxu0 0
          %2032 = vmatpush2.bf16.msra.mxu0 0
          %2033 = vmatprep.subr.bf16.mxu0 0
          %2034 = vmatpush2.bf16.msra.mxu0 0
          %2035 = vmatprep.subr.bf16.mxu0 0
          %2036 = vmatpush2.bf16.msra.mxu0 0
          %2037 = vmatprep.subr.bf16.mxu0 0
          %2038 = vmatpush2.bf16.msra.mxu0 0
          %2039 = vmatprep.subr.bf16.mxu0 0
          %2040 = vmatpush2.bf16.msra.mxu0 0
          %2041 = vmatprep.subr.bf16.mxu0 0
          %2042 = vmatpush2.bf16.msra.mxu0 0
          %2043 = vmatprep.subr.bf16.mxu0 0
          %2044 = vmatpush2.bf16.msra.mxu0 0
          %2045 = vmatprep.mubr.bf16.mxu0 0
          %2046 = vmatmul.mubr.bf16.gmra.mxu0 %v1949
          %v2047 = vpop.f32.mrf.mxu0
          %v2048 = vadd.f32 %v1915, %v2047
          %v2049 = vpop.f32.mrf.mxu0
          %v2050 = vpop.f32.mrf.mxu0
          %v2051 = vadd.f32 %v1915, %v2050
          %v2052 = vpop.f32.mrf.mxu0
          %2053 = vmatprep.mubr.bf16.mxu0 0
          %2054 = vmatmul.mubr.bf16.gmra.mxu0 %v1950
          %v2055 = vpop.f32.mrf.mxu0
          %v2056 = vadd.f32 %v1915, %v2055
          %v2057 = vpop.f32.mrf.mxu0
          %v2058 = vpop.f32.mrf.mxu0
          %v2059 = vadd.f32 %v1915, %v2058
          %v2060 = vpop.f32.mrf.mxu0
          %2061 = vmatprep.mubr.bf16.mxu0 0
          %2062 = vmatmul.mubr.bf16.gmra.mxu0 %v1951
          %v2063 = vpop.f32.mrf.mxu0
          %v2064 = vadd.f32 %v1915, %v2063
          %v2065 = vpop.f32.mrf.mxu0
          %v2066 = vpop.f32.mrf.mxu0
          %v2067 = vadd.f32 %v1915, %v2066
          %v2068 = vpop.f32.mrf.mxu0
          %2069 = vmatprep.mubr.bf16.mxu0 0
          %2070 = vmatmul.mubr.bf16.gmra.mxu0 %v1952
          %v2071 = vpop.f32.mrf.mxu0
          %v2072 = vadd.f32 %v1915, %v2071
          %v2073 = vpop.f32.mrf.mxu0
          %v2074 = vpop.f32.mrf.mxu0
          %v2075 = vadd.f32 %v1915, %v2074
          %v2076 = vpop.f32.mrf.mxu0
          %2077 = vmatprep.mubr.bf16.mxu0 0
          %2078 = vmatmul.mubr.bf16.gmra.mxu0 %v1953
          %v2079 = vpop.f32.mrf.mxu0
          %v2080 = vadd.f32 %v1915, %v2079
          %v2081 = vpop.f32.mrf.mxu0
          %v2082 = vpop.f32.mrf.mxu0
          %v2083 = vadd.f32 %v1915, %v2082
          %v2084 = vpop.f32.mrf.mxu0
          %2085 = vmatprep.mubr.bf16.mxu0 0
          %2086 = vmatmul.mubr.bf16.gmra.mxu0 %v1954
          %v2087 = vpop.f32.mrf.mxu0
          %v2088 = vadd.f32 %v1915, %v2087
          %v2089 = vpop.f32.mrf.mxu0
          %v2090 = vpop.f32.mrf.mxu0
          %v2091 = vadd.f32 %v1915, %v2090
          %v2092 = vpop.f32.mrf.mxu0
          %2093 = vmatprep.mubr.bf16.mxu0 0
          %2094 = vmatmul.mubr.bf16.gmra.mxu0 %v1955
          %v2095 = vpop.f32.mrf.mxu0
          %v2096 = vadd.f32 %v1915, %v2095
          %v2097 = vpop.f32.mrf.mxu0
          %v2098 = vpop.f32.mrf.mxu0
          %v2099 = vadd.f32 %v1915, %v2098
          %v2100 = vpop.f32.mrf.mxu0
          %2101 = vmatprep.mubr.bf16.mxu0 0
          %2102 = vmatmul.mubr.bf16.gmra.mxu0 %v1956
          %v2103 = vpop.f32.mrf.mxu0
          %v2104 = vadd.f32 %v1915, %v2103
          %v2105 = vpop.f32.mrf.mxu0
          %v2106 = vpop.f32.mrf.mxu0
          %v2107 = vadd.f32 %v1915, %v2106
          %v2108 = vpop.f32.mrf.mxu0
          %2109 = vdwg.mxu0
          %v2110 = vld [vmem:[%s9] sm:$0xf]
          %v2111 = vld [vmem:[%s9 + $0x4] sm:$0xf]
          %v2112 = vld [vmem:[%s9 + $0x8] sm:$0xf]
          %v2113 = vld [vmem:[%s9 + $0xc] sm:$0xf]
          %v2114 = vld [vmem:[%s9 + $0x10] sm:$0xf]
          %v2115 = vld [vmem:[%s9 + $0x14] sm:$0xf]
          %v2116 = vld [vmem:[%s9 + $0x18] sm:$0xf]
          %v2117 = vld [vmem:[%s9 + $0x1c] sm:$0xf]
          %v2118 = vld [vmem:[%s9 + $0x20] sm:$0xf]
          %v2119 = vld [vmem:[%s9 + $0x24] sm:$0xf]
          %v2120 = vld [vmem:[%s9 + $0x28] sm:$0xf]
          %v2121 = vld [vmem:[%s9 + $0x2c] sm:$0xf]
          %v2122 = vld [vmem:[%s9 + $0x30] sm:$0xf]
          %v2123 = vld [vmem:[%s9 + $0x34] sm:$0xf]
          %v2124 = vld [vmem:[%s9 + $0x38] sm:$0xf]
          %v2125 = vld [vmem:[%s9 + $0x3c] sm:$0xf]
          %v2126 = vld [vmem:[%s10] sm:$0x1]
          %v2128 = vlaneseq
          %v2129 = vshrl.u32 %v2128, 7
          %v2130 = vsub.s32 0, %v2129
          %v2131 = vrot.slane %v2126, %v2130
          %v2149 = vunpack.c.l.b16 %v1878
          %v2150 = vunpack.c.l.b16 %v1879
          %v2151 = vunpack.c.l.b16 %v1880
          %v2152 = vunpack.c.l.b16 %v1881
          %v2153 = vunpack.c.l.b16 %v1882
          %v2154 = vunpack.c.l.b16 %v1883
          %v2155 = vunpack.c.l.b16 %v1884
          %v2156 = vunpack.c.l.b16 %v1885
          %v2157 = vunpack.c.l.b16 %v1886
          %v2158 = vunpack.c.l.b16 %v1887
          %v2159 = vunpack.c.l.b16 %v1888
          %v2160 = vunpack.c.l.b16 %v1889
          %v2161 = vunpack.c.l.b16 %v1890
          %v2162 = vunpack.c.l.b16 %v1891
          %v2163 = vunpack.c.l.b16 %v1892
          %v2164 = vunpack.c.l.b16 %v1893
          %v2165 = vpack.c.b16 %v2150, %v2149
          %v2166 = vpack.c.b16 %v2152, %v2151
          %v2167 = vpack.c.b16 %v2154, %v2153
          %v2168 = vpack.c.b16 %v2156, %v2155
          %v2169 = vpack.c.b16 %v2158, %v2157
          %v2170 = vpack.c.b16 %v2160, %v2159
          %v2171 = vpack.c.b16 %v2162, %v2161
          %v2172 = vpack.c.b16 %v2164, %v2163
          %v2197 = vunpack.c.l.b16 %v2110
          %v2198 = vunpack.c.l.b16 %v2111
          %v2199 = vunpack.c.l.b16 %v2112
          %v2200 = vunpack.c.l.b16 %v2113
          %v2201 = vunpack.c.l.b16 %v2114
          %v2202 = vunpack.c.l.b16 %v2115
          %v2203 = vunpack.c.l.b16 %v2116
          %v2204 = vunpack.c.l.b16 %v2117
          %v2205 = vunpack.c.l.b16 %v2118
          %v2206 = vunpack.c.l.b16 %v2119
          %v2207 = vunpack.c.l.b16 %v2120
          %v2208 = vunpack.c.l.b16 %v2121
          %v2209 = vunpack.c.l.b16 %v2122
          %v2210 = vunpack.c.l.b16 %v2123
          %v2211 = vunpack.c.l.b16 %v2124
          %v2212 = vunpack.c.l.b16 %v2125
          %v2213 = vpack.c.b16 %v2198, %v2197
          %v2214 = vpack.c.b16 %v2200, %v2199
          %v2215 = vpack.c.b16 %v2202, %v2201
          %v2216 = vpack.c.b16 %v2204, %v2203
          %v2217 = vpack.c.b16 %v2206, %v2205
          %v2218 = vpack.c.b16 %v2208, %v2207
          %v2219 = vpack.c.b16 %v2210, %v2209
          %v2220 = vpack.c.b16 %v2212, %v2211
          %2229 = vmatprep.subr.bf16.mxu0 0
          %2230 = vmatpush1.bf16.msra.mxu0 %v2220
          %2231 = vmatprep.subr.bf16.mxu0 0
          %2232 = vmatpush1.bf16.msra.mxu0 %v2219
          %2233 = vmatprep.subr.bf16.mxu0 0
          %2234 = vmatpush1.bf16.msra.mxu0 %v2218
          %2235 = vmatprep.subr.bf16.mxu0 0
          %2236 = vmatpush1.bf16.msra.mxu0 %v2217
          %2237 = vmatprep.subr.bf16.mxu0 0
          %2238 = vmatpush1.bf16.msra.mxu0 %v2216
          %2239 = vmatprep.subr.bf16.mxu0 0
          %2240 = vmatpush1.bf16.msra.mxu0 %v2215
          %2241 = vmatprep.subr.bf16.mxu0 0
          %2242 = vmatpush1.bf16.msra.mxu0 %v2214
          %2243 = vmatprep.subr.bf16.mxu0 0
          %2244 = vmatpush1.bf16.msra.mxu0 %v2213
          %2245 = vmatprep.subr.bf16.mxu0 0
          %2246 = vmatpush2.bf16.msra.mxu0 0
          %2247 = vmatprep.subr.bf16.mxu0 0
          %2248 = vmatpush2.bf16.msra.mxu0 0
          %2249 = vmatprep.subr.bf16.mxu0 0
          %2250 = vmatpush2.bf16.msra.mxu0 0
          %2251 = vmatprep.subr.bf16.mxu0 0
          %2252 = vmatpush2.bf16.msra.mxu0 0
          %2253 = vmatprep.subr.bf16.mxu0 0
          %2254 = vmatpush2.bf16.msra.mxu0 0
          %2255 = vmatprep.subr.bf16.mxu0 0
          %2256 = vmatpush2.bf16.msra.mxu0 0
          %2257 = vmatprep.subr.bf16.mxu0 0
          %2258 = vmatpush2.bf16.msra.mxu0 0
          %2259 = vmatprep.subr.bf16.mxu0 0
          %2260 = vmatpush2.bf16.msra.mxu0 0
          %2261 = vmatprep.mubr.bf16.mxu0 0
          %2262 = vmatmul.mubr.bf16.gmra.mxu0 %v2165
          %v2263 = vpop.f32.mrf.mxu0
          %v2264 = vadd.f32 %v2131, %v2263
          %v2265 = vpop.f32.mrf.mxu0
          %v2266 = vpop.f32.mrf.mxu0
          %v2267 = vadd.f32 %v2131, %v2266
          %v2268 = vpop.f32.mrf.mxu0
          %2269 = vmatprep.mubr.bf16.mxu0 0
          %2270 = vmatmul.mubr.bf16.gmra.mxu0 %v2166
          %v2271 = vpop.f32.mrf.mxu0
          %v2272 = vadd.f32 %v2131, %v2271
          %v2273 = vpop.f32.mrf.mxu0
          %v2274 = vpop.f32.mrf.mxu0
          %v2275 = vadd.f32 %v2131, %v2274
          %v2276 = vpop.f32.mrf.mxu0
          %2277 = vmatprep.mubr.bf16.mxu0 0
          %2278 = vmatmul.mubr.bf16.gmra.mxu0 %v2167
          %v2279 = vpop.f32.mrf.mxu0
          %v2280 = vadd.f32 %v2131, %v2279
          %v2281 = vpop.f32.mrf.mxu0
          %v2282 = vpop.f32.mrf.mxu0
          %v2283 = vadd.f32 %v2131, %v2282
          %v2284 = vpop.f32.mrf.mxu0
          %2285 = vmatprep.mubr.bf16.mxu0 0
          %2286 = vmatmul.mubr.bf16.gmra.mxu0 %v2168
          %v2287 = vpop.f32.mrf.mxu0
          %v2288 = vadd.f32 %v2131, %v2287
          %v2289 = vpop.f32.mrf.mxu0
          %v2290 = vpop.f32.mrf.mxu0
          %v2291 = vadd.f32 %v2131, %v2290
          %v2292 = vpop.f32.mrf.mxu0
          %2293 = vmatprep.mubr.bf16.mxu0 0
          %2294 = vmatmul.mubr.bf16.gmra.mxu0 %v2169
          %v2295 = vpop.f32.mrf.mxu0
          %v2296 = vadd.f32 %v2131, %v2295
          %v2297 = vpop.f32.mrf.mxu0
          %v2298 = vpop.f32.mrf.mxu0
          %v2299 = vadd.f32 %v2131, %v2298
          %v2300 = vpop.f32.mrf.mxu0
          %2301 = vmatprep.mubr.bf16.mxu0 0
          %2302 = vmatmul.mubr.bf16.gmra.mxu0 %v2170
          %v2303 = vpop.f32.mrf.mxu0
          %v2304 = vadd.f32 %v2131, %v2303
          %v2305 = vpop.f32.mrf.mxu0
          %v2306 = vpop.f32.mrf.mxu0
          %v2307 = vadd.f32 %v2131, %v2306
          %v2308 = vpop.f32.mrf.mxu0
          %2309 = vmatprep.mubr.bf16.mxu0 0
          %2310 = vmatmul.mubr.bf16.gmra.mxu0 %v2171
          %v2311 = vpop.f32.mrf.mxu0
          %v2312 = vadd.f32 %v2131, %v2311
          %v2313 = vpop.f32.mrf.mxu0
          %v2314 = vpop.f32.mrf.mxu0
          %v2315 = vadd.f32 %v2131, %v2314
          %v2316 = vpop.f32.mrf.mxu0
          %2317 = vmatprep.mubr.bf16.mxu0 0
          %2318 = vmatmul.mubr.bf16.gmra.mxu0 %v2172
          %v2319 = vpop.f32.mrf.mxu0
          %v2320 = vadd.f32 %v2131, %v2319
          %v2321 = vpop.f32.mrf.mxu0
          %v2322 = vpop.f32.mrf.mxu0
          %v2323 = vadd.f32 %v2131, %v2322
          %v2324 = vpop.f32.mrf.mxu0
          %2325 = vdwg.mxu0
          %v2326 = vmul.f32 %v1735, %v2264
          %v2327 = vmul.f32 %v1737, %v2267
          %v2328 = vmul.f32 %v1739, %v2272
          %v2329 = vmul.f32 %v1741, %v2275
          %v2330 = vmul.f32 %v1743, %v2280
          %v2331 = vmul.f32 %v1745, %v2283
          %v2332 = vmul.f32 %v1747, %v2288
          %v2333 = vmul.f32 %v1749, %v2291
          %v2334 = vmul.f32 %v1751, %v2296
          %v2335 = vmul.f32 %v1753, %v2299
          %v2336 = vmul.f32 %v1755, %v2304
          %v2337 = vmul.f32 %v1757, %v2307
          %v2338 = vmul.f32 %v1759, %v2312
          %v2339 = vmul.f32 %v1761, %v2315
          %v2340 = vmul.f32 %v1763, %v2320
          %v2341 = vmul.f32 %v1765, %v2323
          %v2342 = vadd.f32 %v2048, %v2326
          %v2343 = vadd.f32 %v2051, %v2327
          %v2344 = vadd.f32 %v2056, %v2328
          %v2345 = vadd.f32 %v2059, %v2329
          %v2346 = vadd.f32 %v2064, %v2330
          %v2347 = vadd.f32 %v2067, %v2331
          %v2348 = vadd.f32 %v2072, %v2332
          %v2349 = vadd.f32 %v2075, %v2333
          %v2350 = vadd.f32 %v2080, %v2334
          %v2351 = vadd.f32 %v2083, %v2335
          %v2352 = vadd.f32 %v2088, %v2336
          %v2353 = vadd.f32 %v2091, %v2337
          %v2354 = vadd.f32 %v2096, %v2338
          %v2355 = vadd.f32 %v2099, %v2339
          %v2356 = vadd.f32 %v2104, %v2340
          %v2357 = vadd.f32 %v2107, %v2341
          %v2358 = vtanh.pop %v2342
          %v2359 = vtanh.pop %v2343
          %v2360 = vtanh.pop %v2344
          %v2361 = vtanh.pop %v2345
          %v2362 = vtanh.pop %v2346
          %v2363 = vtanh.pop %v2347
          %v2364 = vtanh.pop %v2348
          %v2365 = vtanh.pop %v2349
          %v2366 = vtanh.pop %v2350
          %v2367 = vtanh.pop %v2351
          %v2368 = vtanh.pop %v2352
          %v2369 = vtanh.pop %v2353
          %v2370 = vtanh.pop %v2354
          %v2371 = vtanh.pop %v2355
          %v2372 = vtanh.pop %v2356
          %v2373 = vtanh.pop %v2357
          %v2374 = vsub.f32 1.0, %v1831
          %v2375 = vsub.f32 1.0, %v1833
          %v2376 = vsub.f32 1.0, %v1835
          %v2377 = vsub.f32 1.0, %v1837
          %v2378 = vsub.f32 1.0, %v1839
          %v2379 = vsub.f32 1.0, %v1841
          %v2380 = vsub.f32 1.0, %v1843
          %v2381 = vsub.f32 1.0, %v1845
          %v2382 = vsub.f32 1.0, %v1847
          %v2383 = vsub.f32 1.0, %v1849
          %v2384 = vsub.f32 1.0, %v1851
          %v2385 = vsub.f32 1.0, %v1853
          %v2386 = vsub.f32 1.0, %v1855
          %v2387 = vsub.f32 1.0, %v1857
          %v2388 = vsub.f32 1.0, %v1859
          %v2389 = vsub.f32 1.0, %v1861
          %v2390 = vmul.f32 %v2374, %v2358
          %v2391 = vmul.f32 %v2375, %v2359
          %v2392 = vmul.f32 %v2376, %v2360
          %v2393 = vmul.f32 %v2377, %v2361
          %v2394 = vmul.f32 %v2378, %v2362
          %v2395 = vmul.f32 %v2379, %v2363
          %v2396 = vmul.f32 %v2380, %v2364
          %v2397 = vmul.f32 %v2381, %v2365
          %v2398 = vmul.f32 %v2382, %v2366
          %v2399 = vmul.f32 %v2383, %v2367
          %v2400 = vmul.f32 %v2384, %v2368
          %v2401 = vmul.f32 %v2385, %v2369
          %v2402 = vmul.f32 %v2386, %v2370
          %v2403 = vmul.f32 %v2387, %v2371
          %v2404 = vmul.f32 %v2388, %v2372
          %v2405 = vmul.f32 %v2389, %v2373
          %v2406 = vmul.f32 %v1831, %v1081
          %v2407 = vmul.f32 %v1833, %v1082
          %v2408 = vmul.f32 %v1835, %v1083
          %v2409 = vmul.f32 %v1837, %v1084
          %v2410 = vmul.f32 %v1839, %v1085
          %v2411 = vmul.f32 %v1841, %v1086
          %v2412 = vmul.f32 %v1843, %v1087
          %v2413 = vmul.f32 %v1845, %v1088
          %v2414 = vmul.f32 %v1847, %v1089
          %v2415 = vmul.f32 %v1849, %v1090
          %v2416 = vmul.f32 %v1851, %v1091
          %v2417 = vmul.f32 %v1853, %v1092
          %v2418 = vmul.f32 %v1855, %v1093
          %v2419 = vmul.f32 %v1857, %v1094
          %v2420 = vmul.f32 %v1859, %v1095
          %v2421 = vmul.f32 %v1861, %v1096
          %v2422 = vadd.f32 %v2390, %v2406
          %v2423 = vadd.f32 %v2391, %v2407
          %v2424 = vadd.f32 %v2392, %v2408
          %v2425 = vadd.f32 %v2393, %v2409
          %v2426 = vadd.f32 %v2394, %v2410
          %v2427 = vadd.f32 %v2395, %v2411
          %v2428 = vadd.f32 %v2396, %v2412
          %v2429 = vadd.f32 %v2397, %v2413
          %v2430 = vadd.f32 %v2398, %v2414
          %v2431 = vadd.f32 %v2399, %v2415
          %v2432 = vadd.f32 %v2400, %v2416
          %v2433 = vadd.f32 %v2401, %v2417
          %v2434 = vadd.f32 %v2402, %v2418
          %v2435 = vadd.f32 %v2403, %v2419
          %v2436 = vadd.f32 %v2404, %v2420
          %v2437 = vadd.f32 %v2405, %v2421
          %2438 = vst [vmem:[%s608] sm:$0xff] %v2422
          %2439 = vst [vmem:[%s608 + $0x8] sm:$0xff] %v2423
          %2440 = vst [vmem:[%s608 + $0x10] sm:$0xff] %v2424
          %2441 = vst [vmem:[%s608 + $0x18] sm:$0xff] %v2425
          %2442 = vst [vmem:[%s608 + $0x20] sm:$0xff] %v2426
          %2443 = vst [vmem:[%s608 + $0x28] sm:$0xff] %v2427
          %2444 = vst [vmem:[%s608 + $0x30] sm:$0xff] %v2428
          %2445 = vst [vmem:[%s608 + $0x38] sm:$0xff] %v2429
          %2446 = vst [vmem:[%s608 + $0x40] sm:$0xff] %v2430
          %2447 = vst [vmem:[%s608 + $0x48] sm:$0xff] %v2431
          %2448 = vst [vmem:[%s608 + $0x50] sm:$0xff] %v2432
          %2449 = vst [vmem:[%s608 + $0x58] sm:$0xff] %v2433
          %2450 = vst [vmem:[%s608 + $0x60] sm:$0xff] %v2434
          %2451 = vst [vmem:[%s608 + $0x68] sm:$0xff] %v2435
          %2452 = vst [vmem:[%s608 + $0x70] sm:$0xff] %v2436
          %2453 = vst [vmem:[%s608 + $0x78] sm:$0xff] %v2437
          %v2454 = vpack.c.bf16 %v2423, %v2422
          %v2455 = vpack.c.bf16 %v2425, %v2424
          %v2456 = vpack.c.bf16 %v2427, %v2426
          %v2457 = vpack.c.bf16 %v2429, %v2428
          %v2458 = vpack.c.bf16 %v2431, %v2430
          %v2459 = vpack.c.bf16 %v2433, %v2432
          %v2460 = vpack.c.bf16 %v2435, %v2434
          %v2461 = vpack.c.bf16 %v2437, %v2436
          %v2470 = vunpack.c.l.b16 %v2454
          %v2471 = vunpack.c.h.b16 %v2454
          %v2472 = vunpack.c.l.b16 %v2455
          %v2473 = vunpack.c.h.b16 %v2455
          %v2474 = vunpack.c.l.b16 %v2456
          %v2475 = vunpack.c.h.b16 %v2456
          %v2476 = vunpack.c.l.b16 %v2457
          %v2477 = vunpack.c.h.b16 %v2457
          %v2478 = vunpack.c.l.b16 %v2458
          %v2479 = vunpack.c.h.b16 %v2458
          %v2480 = vunpack.c.l.b16 %v2459
          %v2481 = vunpack.c.h.b16 %v2459
          %v2482 = vunpack.c.l.b16 %v2460
          %v2483 = vunpack.c.h.b16 %v2460
          %v2484 = vunpack.c.l.b16 %v2461
          %v2485 = vunpack.c.h.b16 %v2461
          %v2486 = vpack.c.b16 %v2470, %v2470
          %v2487 = vpack.c.b16 %v2471, %v2471
          %v2488 = vpack.c.b16 %v2472, %v2472
          %v2489 = vpack.c.b16 %v2473, %v2473
          %v2490 = vpack.c.b16 %v2474, %v2474
          %v2491 = vpack.c.b16 %v2475, %v2475
          %v2492 = vpack.c.b16 %v2476, %v2476
          %v2493 = vpack.c.b16 %v2477, %v2477
          %v2494 = vpack.c.b16 %v2478, %v2478
          %v2495 = vpack.c.b16 %v2479, %v2479
          %v2496 = vpack.c.b16 %v2480, %v2480
          %v2497 = vpack.c.b16 %v2481, %v2481
          %v2498 = vpack.c.b16 %v2482, %v2482
          %v2499 = vpack.c.b16 %v2483, %v2483
          %v2500 = vpack.c.b16 %v2484, %v2484
          %v2501 = vpack.c.b16 %v2485, %v2485
          %2518 = vst [vmem:[%s614] sm:$0xf] %v2486
          %2519 = vst [vmem:[%s614 + $0x4] sm:$0xf] %v2487
          %2520 = vst [vmem:[%s614 + $0x8] sm:$0xf] %v2488
          %2521 = vst [vmem:[%s614 + $0xc] sm:$0xf] %v2489
          %2522 = vst [vmem:[%s614 + $0x10] sm:$0xf] %v2490
          %2523 = vst [vmem:[%s614 + $0x14] sm:$0xf] %v2491
          %2524 = vst [vmem:[%s614 + $0x18] sm:$0xf] %v2492
          %2525 = vst [vmem:[%s614 + $0x1c] sm:$0xf] %v2493
          %2526 = vst [vmem:[%s614 + $0x20] sm:$0xf] %v2494
          %2527 = vst [vmem:[%s614 + $0x24] sm:$0xf] %v2495
          %2528 = vst [vmem:[%s614 + $0x28] sm:$0xf] %v2496
          %2529 = vst [vmem:[%s614 + $0x2c] sm:$0xf] %v2497
          %2530 = vst [vmem:[%s614 + $0x30] sm:$0xf] %v2498
          %2531 = vst [vmem:[%s614 + $0x34] sm:$0xf] %v2499
          %2532 = vst [vmem:[%s614 + $0x38] sm:$0xf] %v2500
          %2533 = vst [vmem:[%s614 + $0x3c] sm:$0xf] %v2501
        $region113: #{gaegru_forward.2} parent=100 // pred_fallthru
          _
        %s2534 = smul.u32 16, %s28
        %p2535 = scmp.lt.s32.totalorder %s2534, 31
        %s2536 = scalar_select %p2535, %s2534, 31
        %s2537 = smul.addr %s2536, 8
        %s2538 = scalar_lea.vmem %s11, %s2537
        %s2539 = smul.u32 16, %s28
        %p2540 = scmp.lt.s32.totalorder %s2539, 31
        %s2541 = scalar_select %p2540, %s2539, 31
        %s2542 = smul.addr %s2541, 4
        %s2543 = scalar_lea.vmem %s12, %s2542
        // Predicated region
        $region114: #{gaegru_forward.2} parent=100 // pred_check
          %p2544 = pneg %p307
        $region115: #{gaegru_forward.2} parent=100 // pred_check_branch
          %2546 = sbr.rel (%p2544) target = $region117
        $region116: #{gaegru_forward.2} parent=100 // pred_region
          %s2547 = smul.u32 16, %s28
        $region117: #{gaegru_forward.2} parent=100 // pred_fallthru
          _
        // Predicated region
        $region118: #{gaegru_forward.2} parent=100 // pred_check
          %p2548 = pneg %p333
        $region119: #{gaegru_forward.2} parent=100 // pred_check_branch
          %2550 = sbr.rel (%p2548) target = $region121
        $region120: #{gaegru_forward.2} parent=100 // pred_region
          %s2551 = smul.u32 16, %s28
        $region121: #{gaegru_forward.2} parent=100 // pred_fallthru
          _
      $region101: #{gaegru_forward.2} parent=5 // pred_fallthru
        _
      %p2552 = scmp.le.s32.totalorder 2, %s19
      // Predicated region
      $region122: #{gaegru_forward.2} parent=5 // pred_check
        %p2553 = pneg %p2552
      $region123: #{gaegru_forward.2} parent=5 // pred_check_branch
        %2555 = sbr.rel (%p2553) target = $region125
      $region124: #{gaegru_forward.2} parent=5 // pred_region
        %s2556 = ssub.s32 %s19, 2
        // Predicated region
        $region126: #{gaegru_forward.2} parent=124 // pred_check
          %p2557 = pneg %p313
        $region127: #{gaegru_forward.2} parent=124 // pred_check_branch
          %2559 = sbr.rel (%p2557) target = $region129
        $region128: #{gaegru_forward.2} parent=124 // pred_region
          %s2560 = smul.u32 16, %s30
          %p2561 = scmp.lt.s32.totalorder %s2560, 31
          %s2562 = scalar_select %p2561, %s2560, 31
          %s2563 = smul.addr %s2562, 8
          %s2564 = scalar_lea.vmem %s11, %s2563
        $region129: #{gaegru_forward.2} parent=124 // pred_fallthru
          _
        // Predicated region
        $region130: #{gaegru_forward.2} parent=124 // pred_check
          %p2565 = pneg %p339
        $region131: #{gaegru_forward.2} parent=124 // pred_check_branch
          %2567 = sbr.rel (%p2565) target = $region133
        $region132: #{gaegru_forward.2} parent=124 // pred_region
          %s2568 = smul.u32 16, %s30
          %p2569 = scmp.lt.s32.totalorder %s2568, 31
          %s2570 = scalar_select %p2569, %s2568, 31
          %s2571 = smul.addr %s2570, 4
          %s2572 = scalar_lea.vmem %s12, %s2571
        $region133: #{gaegru_forward.2} parent=124 // pred_fallthru
          _
      $region125: #{gaegru_forward.2} parent=5 // pred_fallthru
        _
    $region6: #{gaegru_forward.2} parent=1 // loop_footer
      %s23 = sadd.s32 1, %s19
    $region7: #{gaegru_forward.2} parent=1 // loop_footer_branch
      %18 = sbr.rel target = $region3
    $region8: #{gaegru_forward.2} parent=1 // loop_exit
      _

</llo_original>
